<compile_context>
chip_gen: v7x
topology: tpu7x:2x2x1
jax: 0.10.0
libtpu: 0.0.40
codegen_flags: <defaults>
</compile_context>

<pallas_src>
import functools

import numpy as np
import jax
import jax.numpy as jnp
from jax.experimental import pallas as pl
from jax.experimental.pallas import tpu as pltpu

_VMEM_LIMIT_BYTES = 32 * 1024 * 1024        # safe on 64 MiB v7x, raises v5e default
_FUSED_VMEM_BUDGET = 24 * 1024 * 1024       # gate for the fused (all-weights-in-VMEM) path


# ----------------------------------------------------------------------------
# Helpers
# ----------------------------------------------------------------------------
def _round_up(v, m):
    return (v + m - 1) // m * m


def _pick_tile(dim, base, unit, prefer_even_blocks=False):
    """Largest multiple of `unit` dividing `dim` and <= base; optionally prefer a tile
    giving an even number of blocks (better 2-TensorCore split on v7x)."""
    cands = []
    t = max(unit, (min(base, dim) // unit) * unit)
    while t >= unit:
        if dim % t == 0:
            cands.append(t)
        t -= unit
    if not cands:
        return dim
    if prefer_even_blocks:
        for c in cands:
            if (dim // c) % 2 == 0:
                return c
    return cands[0]


# ----------------------------------------------------------------------------
# Fused 3-layer MLP kernel: o = (relu(relu(x@w1+b1)@w2+b2))@w3 + b3
# Weights/biases live wholly in VMEM (constant index_map -> DMA'd once).
# ----------------------------------------------------------------------------
def _fused_mlp3_kernel(x_ref, w1_ref, b1_ref, w2_ref, b2_ref, w3_ref, b3_ref, o_ref):
    x = x_ref[...]
    h1 = jnp.dot(x, w1_ref[...], preferred_element_type=jnp.float32) + b1_ref[...]
    h1 = jnp.maximum(h1, 0.0).astype(x.dtype)
    h2 = jnp.dot(h1, w2_ref[...], preferred_element_type=jnp.float32) + b2_ref[...]
    h2 = jnp.maximum(h2, 0.0).astype(x.dtype)
    o = jnp.dot(h2, w3_ref[...], preferred_element_type=jnp.float32) + b3_ref[...]
    o_ref[...] = o.astype(o_ref.dtype)


def _fused_mlp3(x_p, prepared):
    Mp, Dp = x_p.shape
    _, H1p, H2p, Ep = prepared["padded"]
    w1, b1 = prepared["w1"], prepared["b1"]
    w2, b2 = prepared["w2"], prepared["b2"]
    w3, b3 = prepared["w3"], prepared["b3"]

    tm = _pick_tile(Mp, 256, 16)             # bf16-packed sublane tiles (16 rows)
    grid = (Mp // tm,)

    w_bytes = (Dp * H1p + H1p * H2p + H2p * Ep) * 2
    b_bytes = (H1p + H2p + Ep) * 4
    cost = pl.CostEstimate(
        flops=2 * Mp * (Dp * H1p + H1p * H2p + H2p * Ep),
        transcendentals=0,
        bytes_accessed=Mp * Dp * 2 + w_bytes + b_bytes + Mp * Ep * 4,
    )

    return pl.pallas_call(
        _fused_mlp3_kernel,
        out_shape=jax.ShapeDtypeStruct((Mp, Ep), jnp.float32),
        grid_spec=pltpu.PrefetchScalarGridSpec(
            num_scalar_prefetch=0,
            grid=grid,
            in_specs=[
                pl.BlockSpec((tm, Dp), lambda i: (i, 0)),       # activations
                pl.BlockSpec((Dp, H1p), lambda i: (0, 0)),      # w1 (resident)
                pl.BlockSpec((1, H1p), lambda i: (0, 0)),       # b1
                pl.BlockSpec((H1p, H2p), lambda i: (0, 0)),     # w2
                pl.BlockSpec((1, H2p), lambda i: (0, 0)),       # b2
                pl.BlockSpec((H2p, Ep), lambda i: (0, 0)),      # w3
                pl.BlockSpec((1, Ep), lambda i: (0, 0)),        # b3
            ],
            out_specs=pl.BlockSpec((tm, Ep), lambda i: (i, 0)),
        ),
        compiler_params=pltpu.CompilerParams(
            dimension_semantics=("parallel",),
            vmem_limit_bytes=_VMEM_LIMIT_BYTES,
        ),
        cost_estimate=cost,
    )(x_p, w1, b1, w2, b2, w3, b3)


# ----------------------------------------------------------------------------
# Fallback: tiled linear (+bias, +optional ReLU) kernel, one call per layer.
# Bias folded into the accumulator init; K-last reduction axis.
# ----------------------------------------------------------------------------
def _linear_kernel(x_ref, w_ref, b_ref, o_ref, acc_ref, *, apply_relu):
    k = pl.program_id(2)

    @pl.when(k == 0)
    def _():
        acc_ref[...] = jnp.broadcast_to(b_ref[...], acc_ref.shape)

    acc_ref[...] += jnp.dot(x_ref[...], w_ref[...], preferred_element_type=jnp.float32)

    @pl.when(k == pl.num_programs(2) - 1)
    def _():
        r = acc_ref[...]
        if apply_relu:
            r = jnp.maximum(r, 0.0)
        o_ref[...] = r.astype(o_ref.dtype)


def _linear_pallas(x_p, w_p, b_p, *, apply_relu, out_dtype,
                   base_tm=256, base_tn=256, base_tk=512):
    """x_p: (M, Kp) padded activations; w_p: (Kp, Np) pre-padded bf16 weights;
    b_p: (1, Np) pre-padded fp32 bias.  Returns (M, Np)."""
    M, Kp = x_p.shape
    _, Np = w_p.shape

    tm = _pick_tile(M, base_tm, 16)
    tn = _pick_tile(Np, base_tn, 128, prefer_even_blocks=True)
    tk = _pick_tile(Kp, base_tk, 128)
    grid = (M // tm, Np // tn, Kp // tk)
    # TODO(synk): for very long K grids on v5e, bump base_tk / use pl.Buffered(3) on the
    # weight spec; not exercised at these toy sizes (K steps <= 2).

    cost = pl.CostEstimate(
        flops=2 * M * Kp * Np,
        transcendentals=0,
        bytes_accessed=M * Kp * 2 + Kp * Np * 2 + Np * 4 + M * Np * out_dtype.dtype.itemsize
        if hasattr(out_dtype, "dtype") else
        M * Kp * 2 + Kp * Np * 2 + Np * 4 + M * Np * jnp.dtype(out_dtype).itemsize,
    )

    kernel = functools.partial(_linear_kernel, apply_relu=apply_relu)
    return pl.pallas_call(
        kernel,
        out_shape=jax.ShapeDtypeStruct((M, Np), out_dtype),
        grid_spec=pltpu.PrefetchScalarGridSpec(
            num_scalar_prefetch=0,
            grid=grid,
            in_specs=[
                pl.BlockSpec((tm, tk), lambda i, j, k: (i, k)),   # activations
                pl.BlockSpec((tk, tn), lambda i, j, k: (k, j)),   # weights (streamed)
                pl.BlockSpec((1, tn), lambda i, j, k: (0, j)),    # bias (fp32)
            ],
            out_specs=pl.BlockSpec((tm, tn), lambda i, j, k: (i, j)),
            scratch_shapes=[pltpu.VMEM((tm, tn), jnp.float32)],
        ),
        compiler_params=pltpu.CompilerParams(
            dimension_semantics=("parallel", "parallel", "arbitrary"),
            vmem_limit_bytes=_VMEM_LIMIT_BYTES,
        ),
        cost_estimate=cost,
    )(x_p, w_p, b_p)


# ----------------------------------------------------------------------------
# Params: init + one-time padding/casting
# ----------------------------------------------------------------------------
def init_uae_params(key, shape, enc_dim):
    """PyTorch-Linear-style init; weights stored (in_features, out_features), fp32."""
    input_dim = int(np.prod(shape))
    step_dim = int((input_dim - enc_dim) / 3)
    dims = [input_dim, enc_dim + 2 * step_dim, enc_dim + step_dim, enc_dim]

    params = []
    for i in range(3):
        fan_in, fan_out = dims[i], dims[i + 1]
        key, kw, kb = jax.random.split(key, 3)
        bound = 1.0 / np.sqrt(fan_in)
        w = jax.random.uniform(kw, (fan_in, fan_out), jnp.float32, -bound, bound)
        b = jax.random.uniform(kb, (1, fan_out), jnp.float32, -bound, bound)
        params.extend([w, b])
    return tuple(params)


def prepare_uae_params(params, compute_dtype=jnp.bfloat16):
    """One-time: zero-pad all feature dims to multiples of 128, cast weights to the
    compute dtype (bf16), keep biases fp32.  Done at init, NOT per forward call."""
    w1, b1, w2, b2, w3, b3 = params
    D, H1 = w1.shape
    H2 = w2.shape[1]
    E = w3.shape[1]
    Dp, H1p, H2p, Ep = (_round_up(d, 128) for d in (D, H1, H2, E))

    def pad_w(w, rp, cp):
        return jnp.zeros((rp, cp), compute_dtype).at[:w.shape[0], :w.shape[1]].set(
            w.astype(compute_dtype))

    def pad_b(b, cp):
        return jnp.zeros((1, cp), jnp.float32).at[:, :b.shape[-1]].set(
            b.reshape(1, -1).astype(jnp.float32))

    return {
        "w1": pad_w(w1, Dp, H1p), "b1": pad_b(b1, H1p),
        "w2": pad_w(w2, H1p, H2p), "b2": pad_b(b2, H2p),
        "w3": pad_w(w3, H2p, Ep), "b3": pad_b(b3, Ep),
        "dims": (D, H1, H2, E),
        "padded": (Dp, H1p, H2p, Ep),
        "dtype": compute_dtype,
    }


# ----------------------------------------------------------------------------
# UAE forward
# ----------------------------------------------------------------------------
def uae_forward(x_nchw, prepared, *, force_tiled=False):
    """UAE.forward: flatten NCHW input, then the 3-layer MLP encoder (Pallas)."""
    D, H1, H2, E = prepared["dims"]
    Dp, H1p, H2p, Ep = prepared["padded"]
    dtype = prepared["dtype"]

    B = x_nchw.shape[0]
    x = x_nchw.reshape(B, -1)                                   # nn.Flatten
    Mp = _round_up(max(B, 1), 16)                               # bf16 sublane packing
    x_p = jnp.zeros((Mp, Dp), dtype).at[:B, :D].set(x.astype(dtype))

    # All padded weights in VMEM? (double-buffered by BlockSpec -> 2x)
    w_bytes = (Dp * H1p + H1p * H2p + H2p * Ep) * 2 + (H1p + H2p + Ep) * 4
    tm_est = _pick_tile(Mp, 256, 16)
    act_bytes = 2 * (tm_est * Dp * 2 + tm_est * Ep * 4)
    fits = (2 * w_bytes + act_bytes) < _FUSED_VMEM_BUDGET

    if fits and not force_tiled:
        o = _fused_mlp3(x_p, prepared)
    else:
        h = _linear_pallas(x_p, prepared["w1"], prepared["b1"],
                           apply_relu=True, out_dtype=dtype)
        h = _linear_pallas(h, prepared["w2"], prepared["b2"],
                           apply_relu=True, out_dtype=dtype)
        o = _linear_pallas(h, prepared["w3"], prepared["b3"],
                           apply_relu=False, out_dtype=jnp.float32)
    return o[:B, :E]                                            # drop padding


# ----------------------------------------------------------------------------
# References
# ----------------------------------------------------------------------------
def uae_reference_f32(x_nchw, params):
    """Pure-JAX fp32 reference (PyTorch semantics)."""
    w1, b1, w2, b2, w3, b3 = params
    x = x_nchw.reshape(x_nchw.shape[0], -1).astype(jnp.float32)
    h1 = jnp.maximum(x @ w1 + b1, 0.0)
    h2 = jnp.maximum(h1 @ w2 + b2, 0.0)
    return h2 @ w3 + b3


def uae_reference_bf16(x_nchw, params):
    """Pure-JAX reference mirroring the kernel's bf16-stream / fp32-accumulate numerics."""
    w1, b1, w2, b2, w3, b3 = params
    bf = jnp.bfloat16

    def lin(a, w, b, relu):
        y = jnp.dot(a, w.astype(bf), preferred_element_type=jnp.float32) + b.astype(jnp.float32)
        return jnp.maximum(y, 0.0) if relu else y

    x = x_nchw.reshape(x_nchw.shape[0], -1).astype(bf)
    h1 = lin(x, w1, b1, True).astype(bf)
    h2 = lin(h1, w2, b2, True).astype(bf)
    return lin(h2, w3, b3, False)


if __name__ == "__main__":
    key = jax.random.PRNGKey(0)
    k_x, k_p = jax.random.split(key)

    # Small shapes consistent with the module: x is NCHW images.
    B, C, H, W = 2, 4, 16, 16
    shape = (C, H, W)          # UAE `shape` arg (per-sample shape)
    enc_dim = 64               # D=1024, step=320 -> hidden dims 704, 384

    x = jax.random.normal(k_x, (B, C, H, W), jnp.float32)
    params = init_uae_params(k_p, shape, enc_dim)
    prepared = prepare_uae_params(params)      # one-time pad + bf16 cast

    # Fused (weights-resident-in-VMEM) path.
    out = uae_forward(x, prepared)
    out = jax.block_until_ready(out)
    assert out.shape == (B, enc_dim), out.shape

    ref_bf16 = uae_reference_bf16(x, params)
    np.testing.assert_allclose(np.asarray(out), np.asarray(ref_bf16, dtype=np.float32),
                               rtol=2e-3, atol=2e-3)
    ref_f32 = uae_reference_f32(x, params)
    np.testing.assert_allclose(np.asarray(out), np.asarray(ref_f32),
                               rtol=5e-2, atol=5e-2)

    # Also exercise the tiled fallback path (used when weights don't fit in VMEM).
    out_tiled = jax.block_until_ready(uae_forward(x, prepared, force_tiled=True))
    np.testing.assert_allclose(np.asarray(out_tiled),
                               np.asarray(ref_bf16, dtype=np.float32),
                               rtol=2e-3, atol=2e-3)

    print("KERNEL_OK")
</pallas_src>

<mosaic_0001>
module attributes {stable_mosaic.version = 11 : i64} {
  func.func @_fused_mlp3_kernel(%arg0: i32, %arg1: memref<16x1024xbf16, #tpu.memory_space<vmem>>, %arg2: memref<1024x768xbf16, #tpu.memory_space<vmem>>, %arg3: memref<1x768xf32, #tpu.memory_space<vmem>>, %arg4: memref<768x384xbf16, #tpu.memory_space<vmem>>, %arg5: memref<1x384xf32, #tpu.memory_space<vmem>>, %arg6: memref<384x128xbf16, #tpu.memory_space<vmem>>, %arg7: memref<1x128xf32, #tpu.memory_space<vmem>>, %arg8: memref<16x128xf32, #tpu.memory_space<vmem>>) attributes {dimension_semantics = [#tpu.dimension_semantics<parallel>], iteration_bounds = array<i64: 1>, scalar_prefetch = 0 : i64, scratch_operands = 0 : i64, tpu.core_type = #tpu.core_type<tc>, window_params = [{transform_indices = @transform_0, window_bounds = array<i64: 16, 1024>}, {pipeline_mode = #tpu.pipeline_mode<synchronous>, transform_indices = @transform_1, window_bounds = array<i64: 1024, 768>}, {pipeline_mode = #tpu.pipeline_mode<synchronous>, transform_indices = @transform_2, window_bounds = array<i64: 1, 768>}, {pipeline_mode = #tpu.pipeline_mode<synchronous>, transform_indices = @transform_3, window_bounds = array<i64: 768, 384>}, {pipeline_mode = #tpu.pipeline_mode<synchronous>, transform_indices = @transform_4, window_bounds = array<i64: 1, 384>}, {pipeline_mode = #tpu.pipeline_mode<synchronous>, transform_indices = @transform_5, window_bounds = array<i64: 384, 128>}, {pipeline_mode = #tpu.pipeline_mode<synchronous>, transform_indices = @transform_6, window_bounds = array<i64: 1, 128>}, {transform_indices = @transform_7, window_bounds = array<i64: 16, 128>}]} {
    %c0 = arith.constant 0 : index
    %c0_0 = arith.constant 0 : index
    %0 = vector.load %arg1[%c0, %c0_0] : memref<16x1024xbf16, #tpu.memory_space<vmem>>, vector<16x1024xbf16>
    %c0_1 = arith.constant 0 : index
    %c0_2 = arith.constant 0 : index
    %1 = vector.load %arg2[%c0_1, %c0_2] : memref<1024x768xbf16, #tpu.memory_space<vmem>>, vector<1024x768xbf16>
    %cst = arith.constant dense<0.000000e+00> : vector<16x768xf32>
    %2 = tpu.matmul %0, %1, %cst {dimension_numbers = #tpu.dot_dimension_numbers<[1], [0], [0], [1], [0, 0, 1, 1], [], []>} : vector<16x1024xbf16>, vector<1024x768xbf16>, vector<16x768xf32> -> vector<16x768xf32>
    %c0_3 = arith.constant 0 : index
    %c0_4 = arith.constant 0 : index
    %3 = vector.load %arg3[%c0_3, %c0_4] : memref<1x768xf32, #tpu.memory_space<vmem>>, vector<1x768xf32>
    %4 = vector.broadcast %3 : vector<1x768xf32> to vector<16x768xf32>
    %5 = arith.addf %2, %4 : vector<16x768xf32>
    %cst_5 = arith.constant 0.000000e+00 : f32
    %6 = vector.broadcast %cst_5 : f32 to vector<16x768xf32>
    %7 = arith.maximumf %5, %6 : vector<16x768xf32>
    %8 = arith.truncf %7 : vector<16x768xf32> to vector<16x768xbf16>
    %c0_6 = arith.constant 0 : index
    %c0_7 = arith.constant 0 : index
    %9 = vector.load %arg4[%c0_6, %c0_7] : memref<768x384xbf16, #tpu.memory_space<vmem>>, vector<768x384xbf16>
    %cst_8 = arith.constant dense<0.000000e+00> : vector<16x384xf32>
    %10 = tpu.matmul %8, %9, %cst_8 {dimension_numbers = #tpu.dot_dimension_numbers<[1], [0], [0], [1], [0, 0, 1, 1], [], []>} : vector<16x768xbf16>, vector<768x384xbf16>, vector<16x384xf32> -> vector<16x384xf32>
    %c0_9 = arith.constant 0 : index
    %c0_10 = arith.constant 0 : index
    %11 = vector.load %arg5[%c0_9, %c0_10] : memref<1x384xf32, #tpu.memory_space<vmem>>, vector<1x384xf32>
    %12 = vector.broadcast %11 : vector<1x384xf32> to vector<16x384xf32>
    %13 = arith.addf %10, %12 : vector<16x384xf32>
    %cst_11 = arith.constant 0.000000e+00 : f32
    %14 = vector.broadcast %cst_11 : f32 to vector<16x384xf32>
    %15 = arith.maximumf %13, %14 : vector<16x384xf32>
    %16 = arith.truncf %15 : vector<16x384xf32> to vector<16x384xbf16>
    %c0_12 = arith.constant 0 : index
    %c0_13 = arith.constant 0 : index
    %17 = vector.load %arg6[%c0_12, %c0_13] : memref<384x128xbf16, #tpu.memory_space<vmem>>, vector<384x128xbf16>
    %cst_14 = arith.constant dense<0.000000e+00> : vector<16x128xf32>
    %18 = tpu.matmul %16, %17, %cst_14 {dimension_numbers = #tpu.dot_dimension_numbers<[1], [0], [0], [1], [0, 0, 1, 1], [], []>} : vector<16x384xbf16>, vector<384x128xbf16>, vector<16x128xf32> -> vector<16x128xf32>
    %c0_15 = arith.constant 0 : index
    %c0_16 = arith.constant 0 : index
    %19 = vector.load %arg7[%c0_15, %c0_16] : memref<1x128xf32, #tpu.memory_space<vmem>>, vector<1x128xf32>
    %20 = vector.broadcast %19 : vector<1x128xf32> to vector<16x128xf32>
    %21 = arith.addf %18, %20 : vector<16x128xf32>
    %c0_17 = arith.constant 0 : index
    %c0_18 = arith.constant 0 : index
    %22 = vector.load %arg8[%c0_17, %c0_18] : memref<16x128xf32, #tpu.memory_space<vmem>>, vector<16x128xf32>
    tpu.vector_store %arg8[%c0_17, %c0_18], %21 {strides = array<i32>} : memref<16x128xf32, #tpu.memory_space<vmem>>, vector<16x128xf32>,
    return
  }
  func.func @transform_0(%arg0: i32) -> (i32, i32) {
    %c0_i32 = arith.constant 0 : i32
    %c0_i32_0 = arith.constant 0 : i32
    return %arg0, %c0_i32 : i32, i32
  }
  func.func @transform_1(%arg0: i32) -> (i32, i32) {
    %c0_i32 = arith.constant 0 : i32
    %c0_i32_0 = arith.constant 0 : i32
    %c0_i32_1 = arith.constant 0 : i32
    return %c0_i32, %c0_i32_0 : i32, i32
  }
  func.func @transform_2(%arg0: i32) -> (i32, i32) {
    %c0_i32 = arith.constant 0 : i32
    %c0_i32_0 = arith.constant 0 : i32
    %c0_i32_1 = arith.constant 0 : i32
    return %c0_i32, %c0_i32_0 : i32, i32
  }
  func.func @transform_3(%arg0: i32) -> (i32, i32) {
    %c0_i32 = arith.constant 0 : i32
    %c0_i32_0 = arith.constant 0 : i32
    %c0_i32_1 = arith.constant 0 : i32
    return %c0_i32, %c0_i32_0 : i32, i32
  }
  func.func @transform_4(%arg0: i32) -> (i32, i32) {
    %c0_i32 = arith.constant 0 : i32
    %c0_i32_0 = arith.constant 0 : i32
    %c0_i32_1 = arith.constant 0 : i32
    return %c0_i32, %c0_i32_0 : i32, i32
  }
  func.func @transform_5(%arg0: i32) -> (i32, i32) {
    %c0_i32 = arith.constant 0 : i32
    %c0_i32_0 = arith.constant 0 : i32
    %c0_i32_1 = arith.constant 0 : i32
    return %c0_i32, %c0_i32_0 : i32, i32
  }
  func.func @transform_6(%arg0: i32) -> (i32, i32) {
    %c0_i32 = arith.constant 0 : i32
    %c0_i32_0 = arith.constant 0 : i32
    %c0_i32_1 = arith.constant 0 : i32
    return %c0_i32, %c0_i32_0 : i32, i32
  }
  func.func @transform_7(%arg0: i32) -> (i32, i32) {
    %c0_i32 = arith.constant 0 : i32
    %c0_i32_0 = arith.constant 0 : i32
    return %arg0, %c0_i32 : i32, i32
  }
}

</mosaic_0001>

<llo_original>
// kernel: tpu_custom_call.1
$region0: #{tpu_custom_call.1}
  #allocation0 [shape = 'u32[]', space=smem, size = 0x4, offset = 0x4, fixed_abs, tag = 'smem constant byte address 0x4 - core index']
  #allocation1 [shape = 'u32[144,128]{1,0:T(1,128)}', space=vmem, size = 0x12000, scoped, tag = 'internal scratch']
  %s0 = inlined_call_operand.hbm [shape: bf16[16,1024], index: 0, kind: input, shape index: {}]
  %s1 = inlined_call_operand.hbm [shape: bf16[1024,768], index: 1, kind: input, shape index: {}]
  %s2 = inlined_call_operand.hbm [shape: f32[1,768], index: 2, kind: input, shape index: {}]
  %s3 = inlined_call_operand.hbm [shape: bf16[768,384], index: 3, kind: input, shape index: {}]
  %s4 = inlined_call_operand.hbm [shape: f32[1,384], index: 4, kind: input, shape index: {}]
  %s5 = inlined_call_operand.hbm [shape: bf16[384,128], index: 5, kind: input, shape index: {}]
  %s6 = inlined_call_operand.hbm [shape: f32[1,128], index: 6, kind: input, shape index: {}]
  %s7 = inlined_call_operand.hbm [shape: f32[16,128], index: 7, kind: output, shape index: {}]
  %s8 = sld [smem:[#allocation0]]
  $region66: #{tpu_custom_call.1} parent=0
    _
  %s10 = ssub.s32 1, %s8
  %s11 = scalar_select 0, %s10, %s8
  $region1: #{tpu_custom_call.1} parent=0
    #allocation2 [shape = 'u8[32768]{0}', space=vmem, size = 0x8000, scoped, tag = 'input window, operand 0, single buffered']
    #allocation3 [shape = 's32[1]{0}', space=sflag, size = 0x4, scoped, tag = 'scoped memory for tpu_custom_call.1']
    #allocation4 [shape = 's32[1]{0}', space=sflag, size = 0x4, scoped, tag = 'scoped memory for tpu_custom_call.1']
    #allocation5 [shape = 'u8[1572864]{0}', space=vmem, size = 0x180000, scoped, tag = 'input window, operand 1, single buffered']
    #allocation6 [shape = 's32[1]{0}', space=sflag, size = 0x4, scoped, tag = 'scoped memory for tpu_custom_call.1']
    #allocation7 [shape = 'u8[3072]{0}', space=vmem, size = 0xc00, scoped, tag = 'input window, operand 2, single buffered']
    #allocation8 [shape = 'u8[589824]{0}', space=vmem, size = 0x90000, scoped, tag = 'input window, operand 3, single buffered']
    #allocation9 [shape = 's32[1]{0}', space=sflag, size = 0x4, scoped, tag = 'scoped memory for tpu_custom_call.1']
    #allocation10 [shape = 'u8[1536]{0}', space=vmem, size = 0x800, scoped, tag = 'input window, operand 4, single buffered']
    #allocation11 [shape = 'u8[98304]{0}', space=vmem, size = 0x18000, scoped, tag = 'input window, operand 5, single buffered']
    #allocation12 [shape = 's32[1]{0}', space=sflag, size = 0x4, scoped, tag = 'scoped memory for tpu_custom_call.1']
    #allocation13 [shape = 'u8[512]{0}', space=vmem, size = 0x400, scoped, tag = 'input window, operand 6, single buffered']
    #allocation14 [shape = 'u8[8192]{0}', space=vmem, size = 0x2000, scoped, tag = 'output window, operand 0, single buffered']
    %12 = vsyncpa [#allocation3], 0
    %13 = vsyncpa [#allocation6], 0
    %14 = vsyncpa [#allocation9], 0
    %15 = vsyncpa [#allocation12], 0
    %16 = vsyncpa [#allocation4], 0
    // Predicated region
    $region2: #{tpu_custom_call.1} parent=1 // pred_check
      _
    $region3: #{tpu_custom_call.1} parent=1 // pred_check_branch
      %18 = sbr.rel (0) target = $region5
    $region4: #{tpu_custom_call.1} parent=1 // pred_region
      %s20 = ssub.s32 1024, 1024
      %21 = vsyncadd [#allocation3], %s20
      %s22 = sshll.u32 [#allocation2], 4
      %s23 = int_to_ptr.vmem [resolvable:$true] %s22
      %28 = dma.hbm_to_vmem [thread:$0]  %s0, 1024, %s23, [#allocation3], 512, 512, 32
    $region5: #{tpu_custom_call.1} parent=1 // pred_fallthru
      _
    // Predicated region
    $region6: #{tpu_custom_call.1} parent=1 // pred_check
      _
    $region7: #{tpu_custom_call.1} parent=1 // pred_check_branch
      %30 = sbr.rel (0) target = $region9
    $region8: #{tpu_custom_call.1} parent=1 // pred_region
      %s32 = ssub.s32 49152, 49152
      %33 = vsyncadd [#allocation6], %s32
      %s34 = sshll.u32 [#allocation5], 4
      %s35 = int_to_ptr.vmem [resolvable:$true] %s34
      %40 = dma.hbm_to_vmem [thread:$0]  %s1, 49152, %s35, [#allocation6], 384, 384, 24
    $region9: #{tpu_custom_call.1} parent=1 // pred_fallthru
      _
    // Predicated region
    $region10: #{tpu_custom_call.1} parent=1 // pred_check
      _
    $region11: #{tpu_custom_call.1} parent=1 // pred_check_branch
      %42 = sbr.rel (0) target = $region13
    $region12: #{tpu_custom_call.1} parent=1 // pred_region
      %s44 = ssub.s32 96, 96
      %45 = vsyncadd [#allocation6], %s44
      %s47 = sshll.u32 [#allocation7], 4
      %s48 = int_to_ptr.vmem [resolvable:$true] %s47
      %50 = dma.hbm_to_vmem [thread:$0]  %s2, 96, %s48, [#allocation6]
    $region13: #{tpu_custom_call.1} parent=1 // pred_fallthru
      _
    // Predicated region
    $region14: #{tpu_custom_call.1} parent=1 // pred_check
      _
    $region15: #{tpu_custom_call.1} parent=1 // pred_check_branch
      %52 = sbr.rel (0) target = $region17
    $region16: #{tpu_custom_call.1} parent=1 // pred_region
      %s54 = ssub.s32 18432, 18432
      %55 = vsyncadd [#allocation9], %s54
      %s56 = sshll.u32 [#allocation8], 4
      %s57 = int_to_ptr.vmem [resolvable:$true] %s56
      %62 = dma.hbm_to_vmem [thread:$0]  %s3, 18432, %s57, [#allocation9], 192, 192, 12
    $region17: #{tpu_custom_call.1} parent=1 // pred_fallthru
      _
    // Predicated region
    $region18: #{tpu_custom_call.1} parent=1 // pred_check
      _
    $region19: #{tpu_custom_call.1} parent=1 // pred_check_branch
      %64 = sbr.rel (0) target = $region21
    $region20: #{tpu_custom_call.1} parent=1 // pred_region
      %s66 = ssub.s32 48, 48
      %67 = vsyncadd [#allocation9], %s66
      %s69 = sshll.u32 [#allocation10], 4
      %s70 = int_to_ptr.vmem [resolvable:$true] %s69
      %72 = dma.hbm_to_vmem [thread:$0]  %s4, 48, %s70, [#allocation9]
    $region21: #{tpu_custom_call.1} parent=1 // pred_fallthru
      _
    // Predicated region
    $region22: #{tpu_custom_call.1} parent=1 // pred_check
      _
    $region23: #{tpu_custom_call.1} parent=1 // pred_check_branch
      %74 = sbr.rel (0) target = $region25
    $region24: #{tpu_custom_call.1} parent=1 // pred_region
      %s76 = ssub.s32 3072, 3072
      %77 = vsyncadd [#allocation12], %s76
      %s78 = sshll.u32 [#allocation11], 4
      %s79 = int_to_ptr.vmem [resolvable:$true] %s78
      %84 = dma.hbm_to_vmem [thread:$0]  %s5, 3072, %s79, [#allocation12], 64, 64, 4
    $region25: #{tpu_custom_call.1} parent=1 // pred_fallthru
      _
    // Predicated region
    $region26: #{tpu_custom_call.1} parent=1 // pred_check
      _
    $region27: #{tpu_custom_call.1} parent=1 // pred_check_branch
      %86 = sbr.rel (0) target = $region29
    $region28: #{tpu_custom_call.1} parent=1 // pred_region
      %s88 = ssub.s32 16, 16
      %89 = vsyncadd [#allocation12], %s88
      %s91 = sshll.u32 [#allocation13], 4
      %s92 = int_to_ptr.vmem [resolvable:$true] %s91
      %94 = dma.hbm_to_vmem [thread:$0]  %s6, 16, %s92, [#allocation12]
    $region29: #{tpu_custom_call.1} parent=1 // pred_fallthru
      _
    // Predicated region
    $region30: #{tpu_custom_call.1} parent=1 // pred_check
      _
    $region31: #{tpu_custom_call.1} parent=1 // pred_check_branch
      %96 = sbr.rel (0) target = $region33
    $region32: #{tpu_custom_call.1} parent=1 // pred_region
      %97 = dma.done [#allocation3], 1024
    $region33: #{tpu_custom_call.1} parent=1 // pred_fallthru
      _
    // Predicated region
    $region34: #{tpu_custom_call.1} parent=1 // pred_check
      _
    $region35: #{tpu_custom_call.1} parent=1 // pred_check_branch
      %99 = sbr.rel (0) target = $region37
    $region36: #{tpu_custom_call.1} parent=1 // pred_region
      %100 = dma.done [#allocation6], 49152
    $region37: #{tpu_custom_call.1} parent=1 // pred_fallthru
      _
    // Predicated region
    $region38: #{tpu_custom_call.1} parent=1 // pred_check
      _
    $region39: #{tpu_custom_call.1} parent=1 // pred_check_branch
      %102 = sbr.rel (0) target = $region41
    $region40: #{tpu_custom_call.1} parent=1 // pred_region
      %103 = dma.done [#allocation6], 96
    $region41: #{tpu_custom_call.1} parent=1 // pred_fallthru
      _
    // Predicated region
    $region42: #{tpu_custom_call.1} parent=1 // pred_check
      _
    $region43: #{tpu_custom_call.1} parent=1 // pred_check_branch
      %105 = sbr.rel (0) target = $region45
    $region44: #{tpu_custom_call.1} parent=1 // pred_region
      %106 = dma.done [#allocation9], 18432
    $region45: #{tpu_custom_call.1} parent=1 // pred_fallthru
      _
    // Predicated region
    $region46: #{tpu_custom_call.1} parent=1 // pred_check
      _
    $region47: #{tpu_custom_call.1} parent=1 // pred_check_branch
      %108 = sbr.rel (0) target = $region49
    $region48: #{tpu_custom_call.1} parent=1 // pred_region
      %109 = dma.done [#allocation9], 48
    $region49: #{tpu_custom_call.1} parent=1 // pred_fallthru
      _
    // Predicated region
    $region50: #{tpu_custom_call.1} parent=1 // pred_check
      _
    $region51: #{tpu_custom_call.1} parent=1 // pred_check_branch
      %111 = sbr.rel (0) target = $region53
    $region52: #{tpu_custom_call.1} parent=1 // pred_region
      %112 = dma.done [#allocation12], 3072
    $region53: #{tpu_custom_call.1} parent=1 // pred_fallthru
      _
    // Predicated region
    $region54: #{tpu_custom_call.1} parent=1 // pred_check
      _
    $region55: #{tpu_custom_call.1} parent=1 // pred_check_branch
      %114 = sbr.rel (0) target = $region57
    $region56: #{tpu_custom_call.1} parent=1 // pred_region
      %115 = dma.done [#allocation12], 16
    $region57: #{tpu_custom_call.1} parent=1 // pred_fallthru
      _
    %v117 = vld [vmem:[#allocation2] sm:$0xff]
    %v118 = vld [vmem:[#allocation2 + $0x8] sm:$0xff]
    %v119 = vld [vmem:[#allocation2 + $0x10] sm:$0xff]
    %v120 = vld [vmem:[#allocation2 + $0x18] sm:$0xff]
    %v121 = vld [vmem:[#allocation2 + $0x20] sm:$0xff]
    %v122 = vld [vmem:[#allocation2 + $0x28] sm:$0xff]
    %v123 = vld [vmem:[#allocation2 + $0x30] sm:$0xff]
    %v124 = vld [vmem:[#allocation2 + $0x38] sm:$0xff]
    %v125 = vld [vmem:[#allocation5] sm:$0xff]
    %v126 = vld [vmem:[#allocation5 + $0x8] sm:$0xff]
    %v127 = vld [vmem:[#allocation5 + $0x10] sm:$0xff]
    %v128 = vld [vmem:[#allocation5 + $0x18] sm:$0xff]
    %v129 = vld [vmem:[#allocation5 + $0x20] sm:$0xff]
    %v130 = vld [vmem:[#allocation5 + $0x28] sm:$0xff]
    %v131 = vld [vmem:[#allocation5 + $0x30] sm:$0xff]
    %v132 = vld [vmem:[#allocation5 + $0x38] sm:$0xff]
    %v133 = vld [vmem:[#allocation5 + $0x40] sm:$0xff]
    %v134 = vld [vmem:[#allocation5 + $0x48] sm:$0xff]
    %v135 = vld [vmem:[#allocation5 + $0x50] sm:$0xff]
    %v136 = vld [vmem:[#allocation5 + $0x58] sm:$0xff]
    %v137 = vld [vmem:[#allocation5 + $0x60] sm:$0xff]
    %v138 = vld [vmem:[#allocation5 + $0x68] sm:$0xff]
    %v139 = vld [vmem:[#allocation5 + $0x70] sm:$0xff]
    %v140 = vld [vmem:[#allocation5 + $0x78] sm:$0xff]
    %v141 = vld [vmem:[#allocation5 + $0x80] sm:$0xff]
    %v142 = vld [vmem:[#allocation5 + $0x88] sm:$0xff]
    %v143 = vld [vmem:[#allocation5 + $0x90] sm:$0xff]
    %v144 = vld [vmem:[#allocation5 + $0x98] sm:$0xff]
    %v145 = vld [vmem:[#allocation5 + $0xa0] sm:$0xff]
    %v146 = vld [vmem:[#allocation5 + $0xa8] sm:$0xff]
    %v147 = vld [vmem:[#allocation5 + $0xb0] sm:$0xff]
    %v148 = vld [vmem:[#allocation5 + $0xb8] sm:$0xff]
    %v149 = vld [vmem:[#allocation5 + $0xc0] sm:$0xff]
    %v150 = vld [vmem:[#allocation5 + $0xc8] sm:$0xff]
    %v151 = vld [vmem:[#allocation5 + $0xd0] sm:$0xff]
    %v152 = vld [vmem:[#allocation5 + $0xd8] sm:$0xff]
    %v153 = vld [vmem:[#allocation5 + $0xe0] sm:$0xff]
    %v154 = vld [vmem:[#allocation5 + $0xe8] sm:$0xff]
    %v155 = vld [vmem:[#allocation5 + $0xf0] sm:$0xff]
    %v156 = vld [vmem:[#allocation5 + $0xf8] sm:$0xff]
    %v157 = vld [vmem:[#allocation5 + $0x100] sm:$0xff]
    %v158 = vld [vmem:[#allocation5 + $0x108] sm:$0xff]
    %v159 = vld [vmem:[#allocation5 + $0x110] sm:$0xff]
    %v160 = vld [vmem:[#allocation5 + $0x118] sm:$0xff]
    %v161 = vld [vmem:[#allocation5 + $0x120] sm:$0xff]
    %v162 = vld [vmem:[#allocation5 + $0x128] sm:$0xff]
    %v163 = vld [vmem:[#allocation5 + $0x130] sm:$0xff]
    %v164 = vld [vmem:[#allocation5 + $0x138] sm:$0xff]
    %v165 = vld [vmem:[#allocation5 + $0x140] sm:$0xff]
    %v166 = vld [vmem:[#allocation5 + $0x148] sm:$0xff]
    %v167 = vld [vmem:[#allocation5 + $0x150] sm:$0xff]
    %v168 = vld [vmem:[#allocation5 + $0x158] sm:$0xff]
    %v169 = vld [vmem:[#allocation5 + $0x160] sm:$0xff]
    %v170 = vld [vmem:[#allocation5 + $0x168] sm:$0xff]
    %v171 = vld [vmem:[#allocation5 + $0x170] sm:$0xff]
    %v172 = vld [vmem:[#allocation5 + $0x178] sm:$0xff]
    %v173 = vld [vmem:[#allocation5 + $0x180] sm:$0xff]
    %v174 = vld [vmem:[#allocation5 + $0x188] sm:$0xff]
    %v175 = vld [vmem:[#allocation5 + $0x190] sm:$0xff]
    %v176 = vld [vmem:[#allocation5 + $0x198] sm:$0xff]
    %v177 = vld [vmem:[#allocation5 + $0x1a0] sm:$0xff]
    %v178 = vld [vmem:[#allocation5 + $0x1a8] sm:$0xff]
    %v179 = vld [vmem:[#allocation5 + $0x1b0] sm:$0xff]
    %v180 = vld [vmem:[#allocation5 + $0x1b8] sm:$0xff]
    %v181 = vld [vmem:[#allocation5 + $0x1c0] sm:$0xff]
    %v182 = vld [vmem:[#allocation5 + $0x1c8] sm:$0xff]
    %v183 = vld [vmem:[#allocation5 + $0x1d0] sm:$0xff]
    %v184 = vld [vmem:[#allocation5 + $0x1d8] sm:$0xff]
    %v185 = vld [vmem:[#allocation5 + $0x1e0] sm:$0xff]
    %v186 = vld [vmem:[#allocation5 + $0x1e8] sm:$0xff]
    %v187 = vld [vmem:[#allocation5 + $0x1f0] sm:$0xff]
    %v188 = vld [vmem:[#allocation5 + $0x1f8] sm:$0xff]
    %v189 = vld [vmem:[#allocation5 + $0x200] sm:$0xff]
    %v190 = vld [vmem:[#allocation5 + $0x208] sm:$0xff]
    %v191 = vld [vmem:[#allocation5 + $0x210] sm:$0xff]
    %v192 = vld [vmem:[#allocation5 + $0x218] sm:$0xff]
    %v193 = vld [vmem:[#allocation5 + $0x220] sm:$0xff]
    %v194 = vld [vmem:[#allocation5 + $0x228] sm:$0xff]
    %v195 = vld [vmem:[#allocation5 + $0x230] sm:$0xff]
    %v196 = vld [vmem:[#allocation5 + $0x238] sm:$0xff]
    %v197 = vld [vmem:[#allocation5 + $0x240] sm:$0xff]
    %v198 = vld [vmem:[#allocation5 + $0x248] sm:$0xff]
    %v199 = vld [vmem:[#allocation5 + $0x250] sm:$0xff]
    %v200 = vld [vmem:[#allocation5 + $0x258] sm:$0xff]
    %v201 = vld [vmem:[#allocation5 + $0x260] sm:$0xff]
    %v202 = vld [vmem:[#allocation5 + $0x268] sm:$0xff]
    %v203 = vld [vmem:[#allocation5 + $0x270] sm:$0xff]
    %v204 = vld [vmem:[#allocation5 + $0x278] sm:$0xff]
    %v205 = vld [vmem:[#allocation5 + $0x280] sm:$0xff]
    %v206 = vld [vmem:[#allocation5 + $0x288] sm:$0xff]
    %v207 = vld [vmem:[#allocation5 + $0x290] sm:$0xff]
    %v208 = vld [vmem:[#allocation5 + $0x298] sm:$0xff]
    %v209 = vld [vmem:[#allocation5 + $0x2a0] sm:$0xff]
    %v210 = vld [vmem:[#allocation5 + $0x2a8] sm:$0xff]
    %v211 = vld [vmem:[#allocation5 + $0x2b0] sm:$0xff]
    %v212 = vld [vmem:[#allocation5 + $0x2b8] sm:$0xff]
    %v213 = vld [vmem:[#allocation5 + $0x2c0] sm:$0xff]
    %v214 = vld [vmem:[#allocation5 + $0x2c8] sm:$0xff]
    %v215 = vld [vmem:[#allocation5 + $0x2d0] sm:$0xff]
    %v216 = vld [vmem:[#allocation5 + $0x2d8] sm:$0xff]
    %v217 = vld [vmem:[#allocation5 + $0x2e0] sm:$0xff]
    %v218 = vld [vmem:[#allocation5 + $0x2e8] sm:$0xff]
    %v219 = vld [vmem:[#allocation5 + $0x2f0] sm:$0xff]
    %v220 = vld [vmem:[#allocation5 + $0x2f8] sm:$0xff]
    %v221 = vld [vmem:[#allocation5 + $0x300] sm:$0xff]
    %v222 = vld [vmem:[#allocation5 + $0x308] sm:$0xff]
    %v223 = vld [vmem:[#allocation5 + $0x310] sm:$0xff]
    %v224 = vld [vmem:[#allocation5 + $0x318] sm:$0xff]
    %v225 = vld [vmem:[#allocation5 + $0x320] sm:$0xff]
    %v226 = vld [vmem:[#allocation5 + $0x328] sm:$0xff]
    %v227 = vld [vmem:[#allocation5 + $0x330] sm:$0xff]
    %v228 = vld [vmem:[#allocation5 + $0x338] sm:$0xff]
    %v229 = vld [vmem:[#allocation5 + $0x340] sm:$0xff]
    %v230 = vld [vmem:[#allocation5 + $0x348] sm:$0xff]
    %v231 = vld [vmem:[#allocation5 + $0x350] sm:$0xff]
    %v232 = vld [vmem:[#allocation5 + $0x358] sm:$0xff]
    %v233 = vld [vmem:[#allocation5 + $0x360] sm:$0xff]
    %v234 = vld [vmem:[#allocation5 + $0x368] sm:$0xff]
    %v235 = vld [vmem:[#allocation5 + $0x370] sm:$0xff]
    %v236 = vld [vmem:[#allocation5 + $0x378] sm:$0xff]
    %v237 = vld [vmem:[#allocation5 + $0x380] sm:$0xff]
    %v238 = vld [vmem:[#allocation5 + $0x388] sm:$0xff]
    %v239 = vld [vmem:[#allocation5 + $0x390] sm:$0xff]
    %v240 = vld [vmem:[#allocation5 + $0x398] sm:$0xff]
    %v241 = vld [vmem:[#allocation5 + $0x3a0] sm:$0xff]
    %v242 = vld [vmem:[#allocation5 + $0x3a8] sm:$0xff]
    %v243 = vld [vmem:[#allocation5 + $0x3b0] sm:$0xff]
    %v244 = vld [vmem:[#allocation5 + $0x3b8] sm:$0xff]
    %v245 = vld [vmem:[#allocation5 + $0x3c0] sm:$0xff]
    %v246 = vld [vmem:[#allocation5 + $0x3c8] sm:$0xff]
    %v247 = vld [vmem:[#allocation5 + $0x3d0] sm:$0xff]
    %v248 = vld [vmem:[#allocation5 + $0x3d8] sm:$0xff]
    %v249 = vld [vmem:[#allocation5 + $0x3e0] sm:$0xff]
    %v250 = vld [vmem:[#allocation5 + $0x3e8] sm:$0xff]
    %v251 = vld [vmem:[#allocation5 + $0x3f0] sm:$0xff]
    %v252 = vld [vmem:[#allocation5 + $0x3f8] sm:$0xff]
    %v253 = vld [vmem:[#allocation5 + $0x400] sm:$0xff]
    %v254 = vld [vmem:[#allocation5 + $0x408] sm:$0xff]
    %v255 = vld [vmem:[#allocation5 + $0x410] sm:$0xff]
    %v256 = vld [vmem:[#allocation5 + $0x418] sm:$0xff]
    %v257 = vld [vmem:[#allocation5 + $0x420] sm:$0xff]
    %v258 = vld [vmem:[#allocation5 + $0x428] sm:$0xff]
    %v259 = vld [vmem:[#allocation5 + $0x430] sm:$0xff]
    %v260 = vld [vmem:[#allocation5 + $0x438] sm:$0xff]
    %v261 = vld [vmem:[#allocation5 + $0x440] sm:$0xff]
    %v262 = vld [vmem:[#allocation5 + $0x448] sm:$0xff]
    %v263 = vld [vmem:[#allocation5 + $0x450] sm:$0xff]
    %v264 = vld [vmem:[#allocation5 + $0x458] sm:$0xff]
    %v265 = vld [vmem:[#allocation5 + $0x460] sm:$0xff]
    %v266 = vld [vmem:[#allocation5 + $0x468] sm:$0xff]
    %v267 = vld [vmem:[#allocation5 + $0x470] sm:$0xff]
    %v268 = vld [vmem:[#allocation5 + $0x478] sm:$0xff]
    %v269 = vld [vmem:[#allocation5 + $0x480] sm:$0xff]
    %v270 = vld [vmem:[#allocation5 + $0x488] sm:$0xff]
    %v271 = vld [vmem:[#allocation5 + $0x490] sm:$0xff]
    %v272 = vld [vmem:[#allocation5 + $0x498] sm:$0xff]
    %v273 = vld [vmem:[#allocation5 + $0x4a0] sm:$0xff]
    %v274 = vld [vmem:[#allocation5 + $0x4a8] sm:$0xff]
    %v275 = vld [vmem:[#allocation5 + $0x4b0] sm:$0xff]
    %v276 = vld [vmem:[#allocation5 + $0x4b8] sm:$0xff]
    %v277 = vld [vmem:[#allocation5 + $0x4c0] sm:$0xff]
    %v278 = vld [vmem:[#allocation5 + $0x4c8] sm:$0xff]
    %v279 = vld [vmem:[#allocation5 + $0x4d0] sm:$0xff]
    %v280 = vld [vmem:[#allocation5 + $0x4d8] sm:$0xff]
    %v281 = vld [vmem:[#allocation5 + $0x4e0] sm:$0xff]
    %v282 = vld [vmem:[#allocation5 + $0x4e8] sm:$0xff]
    %v283 = vld [vmem:[#allocation5 + $0x4f0] sm:$0xff]
    %v284 = vld [vmem:[#allocation5 + $0x4f8] sm:$0xff]
    %v285 = vld [vmem:[#allocation5 + $0x500] sm:$0xff]
    %v286 = vld [vmem:[#allocation5 + $0x508] sm:$0xff]
    %v287 = vld [vmem:[#allocation5 + $0x510] sm:$0xff]
    %v288 = vld [vmem:[#allocation5 + $0x518] sm:$0xff]
    %v289 = vld [vmem:[#allocation5 + $0x520] sm:$0xff]
    %v290 = vld [vmem:[#allocation5 + $0x528] sm:$0xff]
    %v291 = vld [vmem:[#allocation5 + $0x530] sm:$0xff]
    %v292 = vld [vmem:[#allocation5 + $0x538] sm:$0xff]
    %v293 = vld [vmem:[#allocation5 + $0x540] sm:$0xff]
    %v294 = vld [vmem:[#allocation5 + $0x548] sm:$0xff]
    %v295 = vld [vmem:[#allocation5 + $0x550] sm:$0xff]
    %v296 = vld [vmem:[#allocation5 + $0x558] sm:$0xff]
    %v297 = vld [vmem:[#allocation5 + $0x560] sm:$0xff]
    %v298 = vld [vmem:[#allocation5 + $0x568] sm:$0xff]
    %v299 = vld [vmem:[#allocation5 + $0x570] sm:$0xff]
    %v300 = vld [vmem:[#allocation5 + $0x578] sm:$0xff]
    %v301 = vld [vmem:[#allocation5 + $0x580] sm:$0xff]
    %v302 = vld [vmem:[#allocation5 + $0x588] sm:$0xff]
    %v303 = vld [vmem:[#allocation5 + $0x590] sm:$0xff]
    %v304 = vld [vmem:[#allocation5 + $0x598] sm:$0xff]
    %v305 = vld [vmem:[#allocation5 + $0x5a0] sm:$0xff]
    %v306 = vld [vmem:[#allocation5 + $0x5a8] sm:$0xff]
    %v307 = vld [vmem:[#allocation5 + $0x5b0] sm:$0xff]
    %v308 = vld [vmem:[#allocation5 + $0x5b8] sm:$0xff]
    %v309 = vld [vmem:[#allocation5 + $0x5c0] sm:$0xff]
    %v310 = vld [vmem:[#allocation5 + $0x5c8] sm:$0xff]
    %v311 = vld [vmem:[#allocation5 + $0x5d0] sm:$0xff]
    %v312 = vld [vmem:[#allocation5 + $0x5d8] sm:$0xff]
    %v313 = vld [vmem:[#allocation5 + $0x5e0] sm:$0xff]
    %v314 = vld [vmem:[#allocation5 + $0x5e8] sm:$0xff]
    %v315 = vld [vmem:[#allocation5 + $0x5f0] sm:$0xff]
    %v316 = vld [vmem:[#allocation5 + $0x5f8] sm:$0xff]
    %v317 = vld [vmem:[#allocation5 + $0x600] sm:$0xff]
    %v318 = vld [vmem:[#allocation5 + $0x608] sm:$0xff]
    %v319 = vld [vmem:[#allocation5 + $0x610] sm:$0xff]
    %v320 = vld [vmem:[#allocation5 + $0x618] sm:$0xff]
    %v321 = vld [vmem:[#allocation5 + $0x620] sm:$0xff]
    %v322 = vld [vmem:[#allocation5 + $0x628] sm:$0xff]
    %v323 = vld [vmem:[#allocation5 + $0x630] sm:$0xff]
    %v324 = vld [vmem:[#allocation5 + $0x638] sm:$0xff]
    %v325 = vld [vmem:[#allocation5 + $0x640] sm:$0xff]
    %v326 = vld [vmem:[#allocation5 + $0x648] sm:$0xff]
    %v327 = vld [vmem:[#allocation5 + $0x650] sm:$0xff]
    %v328 = vld [vmem:[#allocation5 + $0x658] sm:$0xff]
    %v329 = vld [vmem:[#allocation5 + $0x660] sm:$0xff]
    %v330 = vld [vmem:[#allocation5 + $0x668] sm:$0xff]
    %v331 = vld [vmem:[#allocation5 + $0x670] sm:$0xff]
    %v332 = vld [vmem:[#allocation5 + $0x678] sm:$0xff]
    %v333 = vld [vmem:[#allocation5 + $0x680] sm:$0xff]
    %v334 = vld [vmem:[#allocation5 + $0x688] sm:$0xff]
    %v335 = vld [vmem:[#allocation5 + $0x690] sm:$0xff]
    %v336 = vld [vmem:[#allocation5 + $0x698] sm:$0xff]
    %v337 = vld [vmem:[#allocation5 + $0x6a0] sm:$0xff]
    %v338 = vld [vmem:[#allocation5 + $0x6a8] sm:$0xff]
    %v339 = vld [vmem:[#allocation5 + $0x6b0] sm:$0xff]
    %v340 = vld [vmem:[#allocation5 + $0x6b8] sm:$0xff]
    %v341 = vld [vmem:[#allocation5 + $0x6c0] sm:$0xff]
    %v342 = vld [vmem:[#allocation5 + $0x6c8] sm:$0xff]
    %v343 = vld [vmem:[#allocation5 + $0x6d0] sm:$0xff]
    %v344 = vld [vmem:[#allocation5 + $0x6d8] sm:$0xff]
    %v345 = vld [vmem:[#allocation5 + $0x6e0] sm:$0xff]
    %v346 = vld [vmem:[#allocation5 + $0x6e8] sm:$0xff]
    %v347 = vld [vmem:[#allocation5 + $0x6f0] sm:$0xff]
    %v348 = vld [vmem:[#allocation5 + $0x6f8] sm:$0xff]
    %v349 = vld [vmem:[#allocation5 + $0x700] sm:$0xff]
    %v350 = vld [vmem:[#allocation5 + $0x708] sm:$0xff]
    %v351 = vld [vmem:[#allocation5 + $0x710] sm:$0xff]
    %v352 = vld [vmem:[#allocation5 + $0x718] sm:$0xff]
    %v353 = vld [vmem:[#allocation5 + $0x720] sm:$0xff]
    %v354 = vld [vmem:[#allocation5 + $0x728] sm:$0xff]
    %v355 = vld [vmem:[#allocation5 + $0x730] sm:$0xff]
    %v356 = vld [vmem:[#allocation5 + $0x738] sm:$0xff]
    %v357 = vld [vmem:[#allocation5 + $0x740] sm:$0xff]
    %v358 = vld [vmem:[#allocation5 + $0x748] sm:$0xff]
    %v359 = vld [vmem:[#allocation5 + $0x750] sm:$0xff]
    %v360 = vld [vmem:[#allocation5 + $0x758] sm:$0xff]
    %v361 = vld [vmem:[#allocation5 + $0x760] sm:$0xff]
    %v362 = vld [vmem:[#allocation5 + $0x768] sm:$0xff]
    %v363 = vld [vmem:[#allocation5 + $0x770] sm:$0xff]
    %v364 = vld [vmem:[#allocation5 + $0x778] sm:$0xff]
    %v365 = vld [vmem:[#allocation5 + $0x780] sm:$0xff]
    %v366 = vld [vmem:[#allocation5 + $0x788] sm:$0xff]
    %v367 = vld [vmem:[#allocation5 + $0x790] sm:$0xff]
    %v368 = vld [vmem:[#allocation5 + $0x798] sm:$0xff]
    %v369 = vld [vmem:[#allocation5 + $0x7a0] sm:$0xff]
    %v370 = vld [vmem:[#allocation5 + $0x7a8] sm:$0xff]
    %v371 = vld [vmem:[#allocation5 + $0x7b0] sm:$0xff]
    %v372 = vld [vmem:[#allocation5 + $0x7b8] sm:$0xff]
    %v373 = vld [vmem:[#allocation5 + $0x7c0] sm:$0xff]
    %v374 = vld [vmem:[#allocation5 + $0x7c8] sm:$0xff]
    %v375 = vld [vmem:[#allocation5 + $0x7d0] sm:$0xff]
    %v376 = vld [vmem:[#allocation5 + $0x7d8] sm:$0xff]
    %v377 = vld [vmem:[#allocation5 + $0x7e0] sm:$0xff]
    %v378 = vld [vmem:[#allocation5 + $0x7e8] sm:$0xff]
    %v379 = vld [vmem:[#allocation5 + $0x7f0] sm:$0xff]
    %v380 = vld [vmem:[#allocation5 + $0x7f8] sm:$0xff]
    %v381 = vld [vmem:[#allocation5 + $0x800] sm:$0xff]
    %v382 = vld [vmem:[#allocation5 + $0x808] sm:$0xff]
    %v383 = vld [vmem:[#allocation5 + $0x810] sm:$0xff]
    %v384 = vld [vmem:[#allocation5 + $0x818] sm:$0xff]
    %v385 = vld [vmem:[#allocation5 + $0x820] sm:$0xff]
    %v386 = vld [vmem:[#allocation5 + $0x828] sm:$0xff]
    %v387 = vld [vmem:[#allocation5 + $0x830] sm:$0xff]
    %v388 = vld [vmem:[#allocation5 + $0x838] sm:$0xff]
    %v389 = vld [vmem:[#allocation5 + $0x840] sm:$0xff]
    %v390 = vld [vmem:[#allocation5 + $0x848] sm:$0xff]
    %v391 = vld [vmem:[#allocation5 + $0x850] sm:$0xff]
    %v392 = vld [vmem:[#allocation5 + $0x858] sm:$0xff]
    %v393 = vld [vmem:[#allocation5 + $0x860] sm:$0xff]
    %v394 = vld [vmem:[#allocation5 + $0x868] sm:$0xff]
    %v395 = vld [vmem:[#allocation5 + $0x870] sm:$0xff]
    %v396 = vld [vmem:[#allocation5 + $0x878] sm:$0xff]
    %v397 = vld [vmem:[#allocation5 + $0x880] sm:$0xff]
    %v398 = vld [vmem:[#allocation5 + $0x888] sm:$0xff]
    %v399 = vld [vmem:[#allocation5 + $0x890] sm:$0xff]
    %v400 = vld [vmem:[#allocation5 + $0x898] sm:$0xff]
    %v401 = vld [vmem:[#allocation5 + $0x8a0] sm:$0xff]
    %v402 = vld [vmem:[#allocation5 + $0x8a8] sm:$0xff]
    %v403 = vld [vmem:[#allocation5 + $0x8b0] sm:$0xff]
    %v404 = vld [vmem:[#allocation5 + $0x8b8] sm:$0xff]
    %v405 = vld [vmem:[#allocation5 + $0x8c0] sm:$0xff]
    %v406 = vld [vmem:[#allocation5 + $0x8c8] sm:$0xff]
    %v407 = vld [vmem:[#allocation5 + $0x8d0] sm:$0xff]
    %v408 = vld [vmem:[#allocation5 + $0x8d8] sm:$0xff]
    %v409 = vld [vmem:[#allocation5 + $0x8e0] sm:$0xff]
    %v410 = vld [vmem:[#allocation5 + $0x8e8] sm:$0xff]
    %v411 = vld [vmem:[#allocation5 + $0x8f0] sm:$0xff]
    %v412 = vld [vmem:[#allocation5 + $0x8f8] sm:$0xff]
    %v413 = vld [vmem:[#allocation5 + $0x900] sm:$0xff]
    %v414 = vld [vmem:[#allocation5 + $0x908] sm:$0xff]
    %v415 = vld [vmem:[#allocation5 + $0x910] sm:$0xff]
    %v416 = vld [vmem:[#allocation5 + $0x918] sm:$0xff]
    %v417 = vld [vmem:[#allocation5 + $0x920] sm:$0xff]
    %v418 = vld [vmem:[#allocation5 + $0x928] sm:$0xff]
    %v419 = vld [vmem:[#allocation5 + $0x930] sm:$0xff]
    %v420 = vld [vmem:[#allocation5 + $0x938] sm:$0xff]
    %v421 = vld [vmem:[#allocation5 + $0x940] sm:$0xff]
    %v422 = vld [vmem:[#allocation5 + $0x948] sm:$0xff]
    %v423 = vld [vmem:[#allocation5 + $0x950] sm:$0xff]
    %v424 = vld [vmem:[#allocation5 + $0x958] sm:$0xff]
    %v425 = vld [vmem:[#allocation5 + $0x960] sm:$0xff]
    %v426 = vld [vmem:[#allocation5 + $0x968] sm:$0xff]
    %v427 = vld [vmem:[#allocation5 + $0x970] sm:$0xff]
    %v428 = vld [vmem:[#allocation5 + $0x978] sm:$0xff]
    %v429 = vld [vmem:[#allocation5 + $0x980] sm:$0xff]
    %v430 = vld [vmem:[#allocation5 + $0x988] sm:$0xff]
    %v431 = vld [vmem:[#allocation5 + $0x990] sm:$0xff]
    %v432 = vld [vmem:[#allocation5 + $0x998] sm:$0xff]
    %v433 = vld [vmem:[#allocation5 + $0x9a0] sm:$0xff]
    %v434 = vld [vmem:[#allocation5 + $0x9a8] sm:$0xff]
    %v435 = vld [vmem:[#allocation5 + $0x9b0] sm:$0xff]
    %v436 = vld [vmem:[#allocation5 + $0x9b8] sm:$0xff]
    %v437 = vld [vmem:[#allocation5 + $0x9c0] sm:$0xff]
    %v438 = vld [vmem:[#allocation5 + $0x9c8] sm:$0xff]
    %v439 = vld [vmem:[#allocation5 + $0x9d0] sm:$0xff]
    %v440 = vld [vmem:[#allocation5 + $0x9d8] sm:$0xff]
    %v441 = vld [vmem:[#allocation5 + $0x9e0] sm:$0xff]
    %v442 = vld [vmem:[#allocation5 + $0x9e8] sm:$0xff]
    %v443 = vld [vmem:[#allocation5 + $0x9f0] sm:$0xff]
    %v444 = vld [vmem:[#allocation5 + $0x9f8] sm:$0xff]
    %v445 = vld [vmem:[#allocation5 + $0xa00] sm:$0xff]
    %v446 = vld [vmem:[#allocation5 + $0xa08] sm:$0xff]
    %v447 = vld [vmem:[#allocation5 + $0xa10] sm:$0xff]
    %v448 = vld [vmem:[#allocation5 + $0xa18] sm:$0xff]
    %v449 = vld [vmem:[#allocation5 + $0xa20] sm:$0xff]
    %v450 = vld [vmem:[#allocation5 + $0xa28] sm:$0xff]
    %v451 = vld [vmem:[#allocation5 + $0xa30] sm:$0xff]
    %v452 = vld [vmem:[#allocation5 + $0xa38] sm:$0xff]
    %v453 = vld [vmem:[#allocation5 + $0xa40] sm:$0xff]
    %v454 = vld [vmem:[#allocation5 + $0xa48] sm:$0xff]
    %v455 = vld [vmem:[#allocation5 + $0xa50] sm:$0xff]
    %v456 = vld [vmem:[#allocation5 + $0xa58] sm:$0xff]
    %v457 = vld [vmem:[#allocation5 + $0xa60] sm:$0xff]
    %v458 = vld [vmem:[#allocation5 + $0xa68] sm:$0xff]
    %v459 = vld [vmem:[#allocation5 + $0xa70] sm:$0xff]
    %v460 = vld [vmem:[#allocation5 + $0xa78] sm:$0xff]
    %v461 = vld [vmem:[#allocation5 + $0xa80] sm:$0xff]
    %v462 = vld [vmem:[#allocation5 + $0xa88] sm:$0xff]
    %v463 = vld [vmem:[#allocation5 + $0xa90] sm:$0xff]
    %v464 = vld [vmem:[#allocation5 + $0xa98] sm:$0xff]
    %v465 = vld [vmem:[#allocation5 + $0xaa0] sm:$0xff]
    %v466 = vld [vmem:[#allocation5 + $0xaa8] sm:$0xff]
    %v467 = vld [vmem:[#allocation5 + $0xab0] sm:$0xff]
    %v468 = vld [vmem:[#allocation5 + $0xab8] sm:$0xff]
    %v469 = vld [vmem:[#allocation5 + $0xac0] sm:$0xff]
    %v470 = vld [vmem:[#allocation5 + $0xac8] sm:$0xff]
    %v471 = vld [vmem:[#allocation5 + $0xad0] sm:$0xff]
    %v472 = vld [vmem:[#allocation5 + $0xad8] sm:$0xff]
    %v473 = vld [vmem:[#allocation5 + $0xae0] sm:$0xff]
    %v474 = vld [vmem:[#allocation5 + $0xae8] sm:$0xff]
    %v475 = vld [vmem:[#allocation5 + $0xaf0] sm:$0xff]
    %v476 = vld [vmem:[#allocation5 + $0xaf8] sm:$0xff]
    %v477 = vld [vmem:[#allocation5 + $0xb00] sm:$0xff]
    %v478 = vld [vmem:[#allocation5 + $0xb08] sm:$0xff]
    %v479 = vld [vmem:[#allocation5 + $0xb10] sm:$0xff]
    %v480 = vld [vmem:[#allocation5 + $0xb18] sm:$0xff]
    %v481 = vld [vmem:[#allocation5 + $0xb20] sm:$0xff]
    %v482 = vld [vmem:[#allocation5 + $0xb28] sm:$0xff]
    %v483 = vld [vmem:[#allocation5 + $0xb30] sm:$0xff]
    %v484 = vld [vmem:[#allocation5 + $0xb38] sm:$0xff]
    %v485 = vld [vmem:[#allocation5 + $0xb40] sm:$0xff]
    %v486 = vld [vmem:[#allocation5 + $0xb48] sm:$0xff]
    %v487 = vld [vmem:[#allocation5 + $0xb50] sm:$0xff]
    %v488 = vld [vmem:[#allocation5 + $0xb58] sm:$0xff]
    %v489 = vld [vmem:[#allocation5 + $0xb60] sm:$0xff]
    %v490 = vld [vmem:[#allocation5 + $0xb68] sm:$0xff]
    %v491 = vld [vmem:[#allocation5 + $0xb70] sm:$0xff]
    %v492 = vld [vmem:[#allocation5 + $0xb78] sm:$0xff]
    %v493 = vld [vmem:[#allocation5 + $0xb80] sm:$0xff]
    %v494 = vld [vmem:[#allocation5 + $0xb88] sm:$0xff]
    %v495 = vld [vmem:[#allocation5 + $0xb90] sm:$0xff]
    %v496 = vld [vmem:[#allocation5 + $0xb98] sm:$0xff]
    %v497 = vld [vmem:[#allocation5 + $0xba0] sm:$0xff]
    %v498 = vld [vmem:[#allocation5 + $0xba8] sm:$0xff]
    %v499 = vld [vmem:[#allocation5 + $0xbb0] sm:$0xff]
    %v500 = vld [vmem:[#allocation5 + $0xbb8] sm:$0xff]
    %v501 = vld [vmem:[#allocation5 + $0xbc0] sm:$0xff]
    %v502 = vld [vmem:[#allocation5 + $0xbc8] sm:$0xff]
    %v503 = vld [vmem:[#allocation5 + $0xbd0] sm:$0xff]
    %v504 = vld [vmem:[#allocation5 + $0xbd8] sm:$0xff]
    %v505 = vld [vmem:[#allocation5 + $0xbe0] sm:$0xff]
    %v506 = vld [vmem:[#allocation5 + $0xbe8] sm:$0xff]
    %v507 = vld [vmem:[#allocation5 + $0xbf0] sm:$0xff]
    %v508 = vld [vmem:[#allocation5 + $0xbf8] sm:$0xff]
    %v509 = vld [vmem:[#allocation7] sm:$0x3f]
    %v511 = vlaneseq
    %v512 = vshrl.u32 %v511, 7
    %v513 = vsub.s32 0, %v512
    %v514 = vrot.slane %v509, %v513
    %v515 = vlaneseq
    %v516 = vshrl.u32 %v515, 7
    %v517 = vsub.s32 1, %v516
    %v518 = vrot.slane %v509, %v517
    %v519 = vlaneseq
    %v520 = vshrl.u32 %v519, 7
    %v521 = vsub.s32 2, %v520
    %v522 = vrot.slane %v509, %v521
    %v523 = vlaneseq
    %v524 = vshrl.u32 %v523, 7
    %v525 = vsub.s32 3, %v524
    %v526 = vrot.slane %v509, %v525
    %v527 = vlaneseq
    %v528 = vshrl.u32 %v527, 7
    %v529 = vsub.s32 4, %v528
    %v530 = vrot.slane %v509, %v529
    %v531 = vlaneseq
    %v532 = vshrl.u32 %v531, 7
    %v533 = vsub.s32 5, %v532
    %v534 = vrot.slane %v509, %v533
    %v549 = vunpack.c.l.b16 %v117
    %v550 = vunpack.c.h.b16 %v117
    %v551 = vunpack.c.l.b16 %v118
    %v552 = vunpack.c.h.b16 %v118
    %v553 = vunpack.c.l.b16 %v119
    %v554 = vunpack.c.h.b16 %v119
    %v555 = vunpack.c.l.b16 %v120
    %v556 = vunpack.c.h.b16 %v120
    %v557 = vunpack.c.l.b16 %v121
    %v558 = vunpack.c.h.b16 %v121
    %v559 = vunpack.c.l.b16 %v122
    %v560 = vunpack.c.h.b16 %v122
    %v561 = vunpack.c.l.b16 %v123
    %v562 = vunpack.c.h.b16 %v123
    %v563 = vunpack.c.l.b16 %v124
    %v564 = vunpack.c.h.b16 %v124
    %v565 = vpack.c.b16 %v557, %v549
    %v566 = vpack.c.b16 %v558, %v550
    %v567 = vpack.c.b16 %v559, %v551
    %v568 = vpack.c.b16 %v560, %v552
    %v569 = vpack.c.b16 %v561, %v553
    %v570 = vpack.c.b16 %v562, %v554
    %v571 = vpack.c.b16 %v563, %v555
    %v572 = vpack.c.b16 %v564, %v556
    %v965 = vunpack.c.l.b16 %v125
    %v966 = vunpack.c.h.b16 %v125
    %v967 = vunpack.c.l.b16 %v126
    %v968 = vunpack.c.h.b16 %v126
    %v969 = vunpack.c.l.b16 %v127
    %v970 = vunpack.c.h.b16 %v127
    %v971 = vunpack.c.l.b16 %v128
    %v972 = vunpack.c.h.b16 %v128
    %v973 = vunpack.c.l.b16 %v129
    %v974 = vunpack.c.h.b16 %v129
    %v975 = vunpack.c.l.b16 %v130
    %v976 = vunpack.c.h.b16 %v130
    %v977 = vunpack.c.l.b16 %v131
    %v978 = vunpack.c.h.b16 %v131
    %v979 = vunpack.c.l.b16 %v132
    %v980 = vunpack.c.h.b16 %v132
    %v981 = vunpack.c.l.b16 %v133
    %v982 = vunpack.c.h.b16 %v133
    %v983 = vunpack.c.l.b16 %v134
    %v984 = vunpack.c.h.b16 %v134
    %v985 = vunpack.c.l.b16 %v135
    %v986 = vunpack.c.h.b16 %v135
    %v987 = vunpack.c.l.b16 %v136
    %v988 = vunpack.c.h.b16 %v136
    %v989 = vunpack.c.l.b16 %v137
    %v990 = vunpack.c.h.b16 %v137
    %v991 = vunpack.c.l.b16 %v138
    %v992 = vunpack.c.h.b16 %v138
    %v993 = vunpack.c.l.b16 %v139
    %v994 = vunpack.c.h.b16 %v139
    %v995 = vunpack.c.l.b16 %v140
    %v996 = vunpack.c.h.b16 %v140
    %v997 = vunpack.c.l.b16 %v141
    %v998 = vunpack.c.h.b16 %v141
    %v999 = vunpack.c.l.b16 %v142
    %v1000 = vunpack.c.h.b16 %v142
    %v1001 = vunpack.c.l.b16 %v143
    %v1002 = vunpack.c.h.b16 %v143
    %v1003 = vunpack.c.l.b16 %v144
    %v1004 = vunpack.c.h.b16 %v144
    %v1005 = vunpack.c.l.b16 %v145
    %v1006 = vunpack.c.h.b16 %v145
    %v1007 = vunpack.c.l.b16 %v146
    %v1008 = vunpack.c.h.b16 %v146
    %v1009 = vunpack.c.l.b16 %v147
    %v1010 = vunpack.c.h.b16 %v147
    %v1011 = vunpack.c.l.b16 %v148
    %v1012 = vunpack.c.h.b16 %v148
    %v1013 = vunpack.c.l.b16 %v149
    %v1014 = vunpack.c.h.b16 %v149
    %v1015 = vunpack.c.l.b16 %v150
    %v1016 = vunpack.c.h.b16 %v150
    %v1017 = vunpack.c.l.b16 %v151
    %v1018 = vunpack.c.h.b16 %v151
    %v1019 = vunpack.c.l.b16 %v152
    %v1020 = vunpack.c.h.b16 %v152
    %v1021 = vunpack.c.l.b16 %v153
    %v1022 = vunpack.c.h.b16 %v153
    %v1023 = vunpack.c.l.b16 %v154
    %v1024 = vunpack.c.h.b16 %v154
    %v1025 = vunpack.c.l.b16 %v155
    %v1026 = vunpack.c.h.b16 %v155
    %v1027 = vunpack.c.l.b16 %v156
    %v1028 = vunpack.c.h.b16 %v156
    %v1029 = vunpack.c.l.b16 %v157
    %v1030 = vunpack.c.h.b16 %v157
    %v1031 = vunpack.c.l.b16 %v158
    %v1032 = vunpack.c.h.b16 %v158
    %v1033 = vunpack.c.l.b16 %v159
    %v1034 = vunpack.c.h.b16 %v159
    %v1035 = vunpack.c.l.b16 %v160
    %v1036 = vunpack.c.h.b16 %v160
    %v1037 = vunpack.c.l.b16 %v161
    %v1038 = vunpack.c.h.b16 %v161
    %v1039 = vunpack.c.l.b16 %v162
    %v1040 = vunpack.c.h.b16 %v162
    %v1041 = vunpack.c.l.b16 %v163
    %v1042 = vunpack.c.h.b16 %v163
    %v1043 = vunpack.c.l.b16 %v164
    %v1044 = vunpack.c.h.b16 %v164
    %v1045 = vunpack.c.l.b16 %v165
    %v1046 = vunpack.c.h.b16 %v165
    %v1047 = vunpack.c.l.b16 %v166
    %v1048 = vunpack.c.h.b16 %v166
    %v1049 = vunpack.c.l.b16 %v167
    %v1050 = vunpack.c.h.b16 %v167
    %v1051 = vunpack.c.l.b16 %v168
    %v1052 = vunpack.c.h.b16 %v168
    %v1053 = vunpack.c.l.b16 %v169
    %v1054 = vunpack.c.h.b16 %v169
    %v1055 = vunpack.c.l.b16 %v170
    %v1056 = vunpack.c.h.b16 %v170
    %v1057 = vunpack.c.l.b16 %v171
    %v1058 = vunpack.c.h.b16 %v171
    %v1059 = vunpack.c.l.b16 %v172
    %v1060 = vunpack.c.h.b16 %v172
    %v1061 = vunpack.c.l.b16 %v173
    %v1062 = vunpack.c.h.b16 %v173
    %v1063 = vunpack.c.l.b16 %v174
    %v1064 = vunpack.c.h.b16 %v174
    %v1065 = vunpack.c.l.b16 %v175
    %v1066 = vunpack.c.h.b16 %v175
    %v1067 = vunpack.c.l.b16 %v176
    %v1068 = vunpack.c.h.b16 %v176
    %v1069 = vunpack.c.l.b16 %v177
    %v1070 = vunpack.c.h.b16 %v177
    %v1071 = vunpack.c.l.b16 %v178
    %v1072 = vunpack.c.h.b16 %v178
    %v1073 = vunpack.c.l.b16 %v179
    %v1074 = vunpack.c.h.b16 %v179
    %v1075 = vunpack.c.l.b16 %v180
    %v1076 = vunpack.c.h.b16 %v180
    %v1077 = vunpack.c.l.b16 %v181
    %v1078 = vunpack.c.h.b16 %v181
    %v1079 = vunpack.c.l.b16 %v182
    %v1080 = vunpack.c.h.b16 %v182
    %v1081 = vunpack.c.l.b16 %v183
    %v1082 = vunpack.c.h.b16 %v183
    %v1083 = vunpack.c.l.b16 %v184
    %v1084 = vunpack.c.h.b16 %v184
    %v1085 = vunpack.c.l.b16 %v185
    %v1086 = vunpack.c.h.b16 %v185
    %v1087 = vunpack.c.l.b16 %v186
    %v1088 = vunpack.c.h.b16 %v186
    %v1089 = vunpack.c.l.b16 %v187
    %v1090 = vunpack.c.h.b16 %v187
    %v1091 = vunpack.c.l.b16 %v188
    %v1092 = vunpack.c.h.b16 %v188
    %v1093 = vunpack.c.l.b16 %v189
    %v1094 = vunpack.c.h.b16 %v189
    %v1095 = vunpack.c.l.b16 %v190
    %v1096 = vunpack.c.h.b16 %v190
    %v1097 = vunpack.c.l.b16 %v191
    %v1098 = vunpack.c.h.b16 %v191
    %v1099 = vunpack.c.l.b16 %v192
    %v1100 = vunpack.c.h.b16 %v192
    %v1101 = vunpack.c.l.b16 %v193
    %v1102 = vunpack.c.h.b16 %v193
    %v1103 = vunpack.c.l.b16 %v194
    %v1104 = vunpack.c.h.b16 %v194
    %v1105 = vunpack.c.l.b16 %v195
    %v1106 = vunpack.c.h.b16 %v195
    %v1107 = vunpack.c.l.b16 %v196
    %v1108 = vunpack.c.h.b16 %v196
    %v1109 = vunpack.c.l.b16 %v197
    %v1110 = vunpack.c.h.b16 %v197
    %v1111 = vunpack.c.l.b16 %v198
    %v1112 = vunpack.c.h.b16 %v198
    %v1113 = vunpack.c.l.b16 %v199
    %v1114 = vunpack.c.h.b16 %v199
    %v1115 = vunpack.c.l.b16 %v200
    %v1116 = vunpack.c.h.b16 %v200
    %v1117 = vunpack.c.l.b16 %v201
    %v1118 = vunpack.c.h.b16 %v201
    %v1119 = vunpack.c.l.b16 %v202
    %v1120 = vunpack.c.h.b16 %v202
    %v1121 = vunpack.c.l.b16 %v203
    %v1122 = vunpack.c.h.b16 %v203
    %v1123 = vunpack.c.l.b16 %v204
    %v1124 = vunpack.c.h.b16 %v204
    %v1125 = vunpack.c.l.b16 %v205
    %v1126 = vunpack.c.h.b16 %v205
    %v1127 = vunpack.c.l.b16 %v206
    %v1128 = vunpack.c.h.b16 %v206
    %v1129 = vunpack.c.l.b16 %v207
    %v1130 = vunpack.c.h.b16 %v207
    %v1131 = vunpack.c.l.b16 %v208
    %v1132 = vunpack.c.h.b16 %v208
    %v1133 = vunpack.c.l.b16 %v209
    %v1134 = vunpack.c.h.b16 %v209
    %v1135 = vunpack.c.l.b16 %v210
    %v1136 = vunpack.c.h.b16 %v210
    %v1137 = vunpack.c.l.b16 %v211
    %v1138 = vunpack.c.h.b16 %v211
    %v1139 = vunpack.c.l.b16 %v212
    %v1140 = vunpack.c.h.b16 %v212
    %v1141 = vunpack.c.l.b16 %v213
    %v1142 = vunpack.c.h.b16 %v213
    %v1143 = vunpack.c.l.b16 %v214
    %v1144 = vunpack.c.h.b16 %v214
    %v1145 = vunpack.c.l.b16 %v215
    %v1146 = vunpack.c.h.b16 %v215
    %v1147 = vunpack.c.l.b16 %v216
    %v1148 = vunpack.c.h.b16 %v216
    %v1149 = vunpack.c.l.b16 %v217
    %v1150 = vunpack.c.h.b16 %v217
    %v1151 = vunpack.c.l.b16 %v218
    %v1152 = vunpack.c.h.b16 %v218
    %v1153 = vunpack.c.l.b16 %v219
    %v1154 = vunpack.c.h.b16 %v219
    %v1155 = vunpack.c.l.b16 %v220
    %v1156 = vunpack.c.h.b16 %v220
    %v1157 = vunpack.c.l.b16 %v221
    %v1158 = vunpack.c.h.b16 %v221
    %v1159 = vunpack.c.l.b16 %v222
    %v1160 = vunpack.c.h.b16 %v222
    %v1161 = vunpack.c.l.b16 %v223
    %v1162 = vunpack.c.h.b16 %v223
    %v1163 = vunpack.c.l.b16 %v224
    %v1164 = vunpack.c.h.b16 %v224
    %v1165 = vunpack.c.l.b16 %v225
    %v1166 = vunpack.c.h.b16 %v225
    %v1167 = vunpack.c.l.b16 %v226
    %v1168 = vunpack.c.h.b16 %v226
    %v1169 = vunpack.c.l.b16 %v227
    %v1170 = vunpack.c.h.b16 %v227
    %v1171 = vunpack.c.l.b16 %v228
    %v1172 = vunpack.c.h.b16 %v228
    %v1173 = vunpack.c.l.b16 %v229
    %v1174 = vunpack.c.h.b16 %v229
    %v1175 = vunpack.c.l.b16 %v230
    %v1176 = vunpack.c.h.b16 %v230
    %v1177 = vunpack.c.l.b16 %v231
    %v1178 = vunpack.c.h.b16 %v231
    %v1179 = vunpack.c.l.b16 %v232
    %v1180 = vunpack.c.h.b16 %v232
    %v1181 = vunpack.c.l.b16 %v233
    %v1182 = vunpack.c.h.b16 %v233
    %v1183 = vunpack.c.l.b16 %v234
    %v1184 = vunpack.c.h.b16 %v234
    %v1185 = vunpack.c.l.b16 %v235
    %v1186 = vunpack.c.h.b16 %v235
    %v1187 = vunpack.c.l.b16 %v236
    %v1188 = vunpack.c.h.b16 %v236
    %v1189 = vunpack.c.l.b16 %v237
    %v1190 = vunpack.c.h.b16 %v237
    %v1191 = vunpack.c.l.b16 %v238
    %v1192 = vunpack.c.h.b16 %v238
    %v1193 = vunpack.c.l.b16 %v239
    %v1194 = vunpack.c.h.b16 %v239
    %v1195 = vunpack.c.l.b16 %v240
    %v1196 = vunpack.c.h.b16 %v240
    %v1197 = vunpack.c.l.b16 %v241
    %v1198 = vunpack.c.h.b16 %v241
    %v1199 = vunpack.c.l.b16 %v242
    %v1200 = vunpack.c.h.b16 %v242
    %v1201 = vunpack.c.l.b16 %v243
    %v1202 = vunpack.c.h.b16 %v243
    %v1203 = vunpack.c.l.b16 %v244
    %v1204 = vunpack.c.h.b16 %v244
    %v1205 = vunpack.c.l.b16 %v245
    %v1206 = vunpack.c.h.b16 %v245
    %v1207 = vunpack.c.l.b16 %v246
    %v1208 = vunpack.c.h.b16 %v246
    %v1209 = vunpack.c.l.b16 %v247
    %v1210 = vunpack.c.h.b16 %v247
    %v1211 = vunpack.c.l.b16 %v248
    %v1212 = vunpack.c.h.b16 %v248
    %v1213 = vunpack.c.l.b16 %v249
    %v1214 = vunpack.c.h.b16 %v249
    %v1215 = vunpack.c.l.b16 %v250
    %v1216 = vunpack.c.h.b16 %v250
    %v1217 = vunpack.c.l.b16 %v251
    %v1218 = vunpack.c.h.b16 %v251
    %v1219 = vunpack.c.l.b16 %v252
    %v1220 = vunpack.c.h.b16 %v252
    %v1221 = vunpack.c.l.b16 %v253
    %v1222 = vunpack.c.h.b16 %v253
    %v1223 = vunpack.c.l.b16 %v254
    %v1224 = vunpack.c.h.b16 %v254
    %v1225 = vunpack.c.l.b16 %v255
    %v1226 = vunpack.c.h.b16 %v255
    %v1227 = vunpack.c.l.b16 %v256
    %v1228 = vunpack.c.h.b16 %v256
    %v1229 = vunpack.c.l.b16 %v257
    %v1230 = vunpack.c.h.b16 %v257
    %v1231 = vunpack.c.l.b16 %v258
    %v1232 = vunpack.c.h.b16 %v258
    %v1233 = vunpack.c.l.b16 %v259
    %v1234 = vunpack.c.h.b16 %v259
    %v1235 = vunpack.c.l.b16 %v260
    %v1236 = vunpack.c.h.b16 %v260
    %v1237 = vunpack.c.l.b16 %v261
    %v1238 = vunpack.c.h.b16 %v261
    %v1239 = vunpack.c.l.b16 %v262
    %v1240 = vunpack.c.h.b16 %v262
    %v1241 = vunpack.c.l.b16 %v263
    %v1242 = vunpack.c.h.b16 %v263
    %v1243 = vunpack.c.l.b16 %v264
    %v1244 = vunpack.c.h.b16 %v264
    %v1245 = vunpack.c.l.b16 %v265
    %v1246 = vunpack.c.h.b16 %v265
    %v1247 = vunpack.c.l.b16 %v266
    %v1248 = vunpack.c.h.b16 %v266
    %v1249 = vunpack.c.l.b16 %v267
    %v1250 = vunpack.c.h.b16 %v267
    %v1251 = vunpack.c.l.b16 %v268
    %v1252 = vunpack.c.h.b16 %v268
    %v1253 = vunpack.c.l.b16 %v269
    %v1254 = vunpack.c.h.b16 %v269
    %v1255 = vunpack.c.l.b16 %v270
    %v1256 = vunpack.c.h.b16 %v270
    %v1257 = vunpack.c.l.b16 %v271
    %v1258 = vunpack.c.h.b16 %v271
    %v1259 = vunpack.c.l.b16 %v272
    %v1260 = vunpack.c.h.b16 %v272
    %v1261 = vunpack.c.l.b16 %v273
    %v1262 = vunpack.c.h.b16 %v273
    %v1263 = vunpack.c.l.b16 %v274
    %v1264 = vunpack.c.h.b16 %v274
    %v1265 = vunpack.c.l.b16 %v275
    %v1266 = vunpack.c.h.b16 %v275
    %v1267 = vunpack.c.l.b16 %v276
    %v1268 = vunpack.c.h.b16 %v276
    %v1269 = vunpack.c.l.b16 %v277
    %v1270 = vunpack.c.h.b16 %v277
    %v1271 = vunpack.c.l.b16 %v278
    %v1272 = vunpack.c.h.b16 %v278
    %v1273 = vunpack.c.l.b16 %v279
    %v1274 = vunpack.c.h.b16 %v279
    %v1275 = vunpack.c.l.b16 %v280
    %v1276 = vunpack.c.h.b16 %v280
    %v1277 = vunpack.c.l.b16 %v281
    %v1278 = vunpack.c.h.b16 %v281
    %v1279 = vunpack.c.l.b16 %v282
    %v1280 = vunpack.c.h.b16 %v282
    %v1281 = vunpack.c.l.b16 %v283
    %v1282 = vunpack.c.h.b16 %v283
    %v1283 = vunpack.c.l.b16 %v284
    %v1284 = vunpack.c.h.b16 %v284
    %v1285 = vunpack.c.l.b16 %v285
    %v1286 = vunpack.c.h.b16 %v285
    %v1287 = vunpack.c.l.b16 %v286
    %v1288 = vunpack.c.h.b16 %v286
    %v1289 = vunpack.c.l.b16 %v287
    %v1290 = vunpack.c.h.b16 %v287
    %v1291 = vunpack.c.l.b16 %v288
    %v1292 = vunpack.c.h.b16 %v288
    %v1293 = vunpack.c.l.b16 %v289
    %v1294 = vunpack.c.h.b16 %v289
    %v1295 = vunpack.c.l.b16 %v290
    %v1296 = vunpack.c.h.b16 %v290
    %v1297 = vunpack.c.l.b16 %v291
    %v1298 = vunpack.c.h.b16 %v291
    %v1299 = vunpack.c.l.b16 %v292
    %v1300 = vunpack.c.h.b16 %v292
    %v1301 = vunpack.c.l.b16 %v293
    %v1302 = vunpack.c.h.b16 %v293
    %v1303 = vunpack.c.l.b16 %v294
    %v1304 = vunpack.c.h.b16 %v294
    %v1305 = vunpack.c.l.b16 %v295
    %v1306 = vunpack.c.h.b16 %v295
    %v1307 = vunpack.c.l.b16 %v296
    %v1308 = vunpack.c.h.b16 %v296
    %v1309 = vunpack.c.l.b16 %v297
    %v1310 = vunpack.c.h.b16 %v297
    %v1311 = vunpack.c.l.b16 %v298
    %v1312 = vunpack.c.h.b16 %v298
    %v1313 = vunpack.c.l.b16 %v299
    %v1314 = vunpack.c.h.b16 %v299
    %v1315 = vunpack.c.l.b16 %v300
    %v1316 = vunpack.c.h.b16 %v300
    %v1317 = vunpack.c.l.b16 %v301
    %v1318 = vunpack.c.h.b16 %v301
    %v1319 = vunpack.c.l.b16 %v302
    %v1320 = vunpack.c.h.b16 %v302
    %v1321 = vunpack.c.l.b16 %v303
    %v1322 = vunpack.c.h.b16 %v303
    %v1323 = vunpack.c.l.b16 %v304
    %v1324 = vunpack.c.h.b16 %v304
    %v1325 = vunpack.c.l.b16 %v305
    %v1326 = vunpack.c.h.b16 %v305
    %v1327 = vunpack.c.l.b16 %v306
    %v1328 = vunpack.c.h.b16 %v306
    %v1329 = vunpack.c.l.b16 %v307
    %v1330 = vunpack.c.h.b16 %v307
    %v1331 = vunpack.c.l.b16 %v308
    %v1332 = vunpack.c.h.b16 %v308
    %v1333 = vunpack.c.l.b16 %v309
    %v1334 = vunpack.c.h.b16 %v309
    %v1335 = vunpack.c.l.b16 %v310
    %v1336 = vunpack.c.h.b16 %v310
    %v1337 = vunpack.c.l.b16 %v311
    %v1338 = vunpack.c.h.b16 %v311
    %v1339 = vunpack.c.l.b16 %v312
    %v1340 = vunpack.c.h.b16 %v312
    %v1341 = vunpack.c.l.b16 %v313
    %v1342 = vunpack.c.h.b16 %v313
    %v1343 = vunpack.c.l.b16 %v314
    %v1344 = vunpack.c.h.b16 %v314
    %v1345 = vunpack.c.l.b16 %v315
    %v1346 = vunpack.c.h.b16 %v315
    %v1347 = vunpack.c.l.b16 %v316
    %v1348 = vunpack.c.h.b16 %v316
    %v1349 = vunpack.c.l.b16 %v317
    %v1350 = vunpack.c.h.b16 %v317
    %v1351 = vunpack.c.l.b16 %v318
    %v1352 = vunpack.c.h.b16 %v318
    %v1353 = vunpack.c.l.b16 %v319
    %v1354 = vunpack.c.h.b16 %v319
    %v1355 = vunpack.c.l.b16 %v320
    %v1356 = vunpack.c.h.b16 %v320
    %v1357 = vunpack.c.l.b16 %v321
    %v1358 = vunpack.c.h.b16 %v321
    %v1359 = vunpack.c.l.b16 %v322
    %v1360 = vunpack.c.h.b16 %v322
    %v1361 = vunpack.c.l.b16 %v323
    %v1362 = vunpack.c.h.b16 %v323
    %v1363 = vunpack.c.l.b16 %v324
    %v1364 = vunpack.c.h.b16 %v324
    %v1365 = vunpack.c.l.b16 %v325
    %v1366 = vunpack.c.h.b16 %v325
    %v1367 = vunpack.c.l.b16 %v326
    %v1368 = vunpack.c.h.b16 %v326
    %v1369 = vunpack.c.l.b16 %v327
    %v1370 = vunpack.c.h.b16 %v327
    %v1371 = vunpack.c.l.b16 %v328
    %v1372 = vunpack.c.h.b16 %v328
    %v1373 = vunpack.c.l.b16 %v329
    %v1374 = vunpack.c.h.b16 %v329
    %v1375 = vunpack.c.l.b16 %v330
    %v1376 = vunpack.c.h.b16 %v330
    %v1377 = vunpack.c.l.b16 %v331
    %v1378 = vunpack.c.h.b16 %v331
    %v1379 = vunpack.c.l.b16 %v332
    %v1380 = vunpack.c.h.b16 %v332
    %v1381 = vunpack.c.l.b16 %v333
    %v1382 = vunpack.c.h.b16 %v333
    %v1383 = vunpack.c.l.b16 %v334
    %v1384 = vunpack.c.h.b16 %v334
    %v1385 = vunpack.c.l.b16 %v335
    %v1386 = vunpack.c.h.b16 %v335
    %v1387 = vunpack.c.l.b16 %v336
    %v1388 = vunpack.c.h.b16 %v336
    %v1389 = vunpack.c.l.b16 %v337
    %v1390 = vunpack.c.h.b16 %v337
    %v1391 = vunpack.c.l.b16 %v338
    %v1392 = vunpack.c.h.b16 %v338
    %v1393 = vunpack.c.l.b16 %v339
    %v1394 = vunpack.c.h.b16 %v339
    %v1395 = vunpack.c.l.b16 %v340
    %v1396 = vunpack.c.h.b16 %v340
    %v1397 = vunpack.c.l.b16 %v341
    %v1398 = vunpack.c.h.b16 %v341
    %v1399 = vunpack.c.l.b16 %v342
    %v1400 = vunpack.c.h.b16 %v342
    %v1401 = vunpack.c.l.b16 %v343
    %v1402 = vunpack.c.h.b16 %v343
    %v1403 = vunpack.c.l.b16 %v344
    %v1404 = vunpack.c.h.b16 %v344
    %v1405 = vunpack.c.l.b16 %v345
    %v1406 = vunpack.c.h.b16 %v345
    %v1407 = vunpack.c.l.b16 %v346
    %v1408 = vunpack.c.h.b16 %v346
    %v1409 = vunpack.c.l.b16 %v347
    %v1410 = vunpack.c.h.b16 %v347
    %v1411 = vunpack.c.l.b16 %v348
    %v1412 = vunpack.c.h.b16 %v348
    %v1413 = vunpack.c.l.b16 %v349
    %v1414 = vunpack.c.h.b16 %v349
    %v1415 = vunpack.c.l.b16 %v350
    %v1416 = vunpack.c.h.b16 %v350
    %v1417 = vunpack.c.l.b16 %v351
    %v1418 = vunpack.c.h.b16 %v351
    %v1419 = vunpack.c.l.b16 %v352
    %v1420 = vunpack.c.h.b16 %v352
    %v1421 = vunpack.c.l.b16 %v353
    %v1422 = vunpack.c.h.b16 %v353
    %v1423 = vunpack.c.l.b16 %v354
    %v1424 = vunpack.c.h.b16 %v354
    %v1425 = vunpack.c.l.b16 %v355
    %v1426 = vunpack.c.h.b16 %v355
    %v1427 = vunpack.c.l.b16 %v356
    %v1428 = vunpack.c.h.b16 %v356
    %v1429 = vunpack.c.l.b16 %v357
    %v1430 = vunpack.c.h.b16 %v357
    %v1431 = vunpack.c.l.b16 %v358
    %v1432 = vunpack.c.h.b16 %v358
    %v1433 = vunpack.c.l.b16 %v359
    %v1434 = vunpack.c.h.b16 %v359
    %v1435 = vunpack.c.l.b16 %v360
    %v1436 = vunpack.c.h.b16 %v360
    %v1437 = vunpack.c.l.b16 %v361
    %v1438 = vunpack.c.h.b16 %v361
    %v1439 = vunpack.c.l.b16 %v362
    %v1440 = vunpack.c.h.b16 %v362
    %v1441 = vunpack.c.l.b16 %v363
    %v1442 = vunpack.c.h.b16 %v363
    %v1443 = vunpack.c.l.b16 %v364
    %v1444 = vunpack.c.h.b16 %v364
    %v1445 = vunpack.c.l.b16 %v365
    %v1446 = vunpack.c.h.b16 %v365
    %v1447 = vunpack.c.l.b16 %v366
    %v1448 = vunpack.c.h.b16 %v366
    %v1449 = vunpack.c.l.b16 %v367
    %v1450 = vunpack.c.h.b16 %v367
    %v1451 = vunpack.c.l.b16 %v368
    %v1452 = vunpack.c.h.b16 %v368
    %v1453 = vunpack.c.l.b16 %v369
    %v1454 = vunpack.c.h.b16 %v369
    %v1455 = vunpack.c.l.b16 %v370
    %v1456 = vunpack.c.h.b16 %v370
    %v1457 = vunpack.c.l.b16 %v371
    %v1458 = vunpack.c.h.b16 %v371
    %v1459 = vunpack.c.l.b16 %v372
    %v1460 = vunpack.c.h.b16 %v372
    %v1461 = vunpack.c.l.b16 %v373
    %v1462 = vunpack.c.h.b16 %v373
    %v1463 = vunpack.c.l.b16 %v374
    %v1464 = vunpack.c.h.b16 %v374
    %v1465 = vunpack.c.l.b16 %v375
    %v1466 = vunpack.c.h.b16 %v375
    %v1467 = vunpack.c.l.b16 %v376
    %v1468 = vunpack.c.h.b16 %v376
    %v1469 = vunpack.c.l.b16 %v377
    %v1470 = vunpack.c.h.b16 %v377
    %v1471 = vunpack.c.l.b16 %v378
    %v1472 = vunpack.c.h.b16 %v378
    %v1473 = vunpack.c.l.b16 %v379
    %v1474 = vunpack.c.h.b16 %v379
    %v1475 = vunpack.c.l.b16 %v380
    %v1476 = vunpack.c.h.b16 %v380
    %v1477 = vunpack.c.l.b16 %v381
    %v1478 = vunpack.c.h.b16 %v381
    %v1479 = vunpack.c.l.b16 %v382
    %v1480 = vunpack.c.h.b16 %v382
    %v1481 = vunpack.c.l.b16 %v383
    %v1482 = vunpack.c.h.b16 %v383
    %v1483 = vunpack.c.l.b16 %v384
    %v1484 = vunpack.c.h.b16 %v384
    %v1485 = vunpack.c.l.b16 %v385
    %v1486 = vunpack.c.h.b16 %v385
    %v1487 = vunpack.c.l.b16 %v386
    %v1488 = vunpack.c.h.b16 %v386
    %v1489 = vunpack.c.l.b16 %v387
    %v1490 = vunpack.c.h.b16 %v387
    %v1491 = vunpack.c.l.b16 %v388
    %v1492 = vunpack.c.h.b16 %v388
    %v1493 = vunpack.c.l.b16 %v389
    %v1494 = vunpack.c.h.b16 %v389
    %v1495 = vunpack.c.l.b16 %v390
    %v1496 = vunpack.c.h.b16 %v390
    %v1497 = vunpack.c.l.b16 %v391
    %v1498 = vunpack.c.h.b16 %v391
    %v1499 = vunpack.c.l.b16 %v392
    %v1500 = vunpack.c.h.b16 %v392
    %v1501 = vunpack.c.l.b16 %v393
    %v1502 = vunpack.c.h.b16 %v393
    %v1503 = vunpack.c.l.b16 %v394
    %v1504 = vunpack.c.h.b16 %v394
    %v1505 = vunpack.c.l.b16 %v395
    %v1506 = vunpack.c.h.b16 %v395
    %v1507 = vunpack.c.l.b16 %v396
    %v1508 = vunpack.c.h.b16 %v396
    %v1509 = vunpack.c.l.b16 %v397
    %v1510 = vunpack.c.h.b16 %v397
    %v1511 = vunpack.c.l.b16 %v398
    %v1512 = vunpack.c.h.b16 %v398
    %v1513 = vunpack.c.l.b16 %v399
    %v1514 = vunpack.c.h.b16 %v399
    %v1515 = vunpack.c.l.b16 %v400
    %v1516 = vunpack.c.h.b16 %v400
    %v1517 = vunpack.c.l.b16 %v401
    %v1518 = vunpack.c.h.b16 %v401
    %v1519 = vunpack.c.l.b16 %v402
    %v1520 = vunpack.c.h.b16 %v402
    %v1521 = vunpack.c.l.b16 %v403
    %v1522 = vunpack.c.h.b16 %v403
    %v1523 = vunpack.c.l.b16 %v404
    %v1524 = vunpack.c.h.b16 %v404
    %v1525 = vunpack.c.l.b16 %v405
    %v1526 = vunpack.c.h.b16 %v405
    %v1527 = vunpack.c.l.b16 %v406
    %v1528 = vunpack.c.h.b16 %v406
    %v1529 = vunpack.c.l.b16 %v407
    %v1530 = vunpack.c.h.b16 %v407
    %v1531 = vunpack.c.l.b16 %v408
    %v1532 = vunpack.c.h.b16 %v408
    %v1533 = vunpack.c.l.b16 %v409
    %v1534 = vunpack.c.h.b16 %v409
    %v1535 = vunpack.c.l.b16 %v410
    %v1536 = vunpack.c.h.b16 %v410
    %v1537 = vunpack.c.l.b16 %v411
    %v1538 = vunpack.c.h.b16 %v411
    %v1539 = vunpack.c.l.b16 %v412
    %v1540 = vunpack.c.h.b16 %v412
    %v1541 = vunpack.c.l.b16 %v413
    %v1542 = vunpack.c.h.b16 %v413
    %v1543 = vunpack.c.l.b16 %v414
    %v1544 = vunpack.c.h.b16 %v414
    %v1545 = vunpack.c.l.b16 %v415
    %v1546 = vunpack.c.h.b16 %v415
    %v1547 = vunpack.c.l.b16 %v416
    %v1548 = vunpack.c.h.b16 %v416
    %v1549 = vunpack.c.l.b16 %v417
    %v1550 = vunpack.c.h.b16 %v417
    %v1551 = vunpack.c.l.b16 %v418
    %v1552 = vunpack.c.h.b16 %v418
    %v1553 = vunpack.c.l.b16 %v419
    %v1554 = vunpack.c.h.b16 %v419
    %v1555 = vunpack.c.l.b16 %v420
    %v1556 = vunpack.c.h.b16 %v420
    %v1557 = vunpack.c.l.b16 %v421
    %v1558 = vunpack.c.h.b16 %v421
    %v1559 = vunpack.c.l.b16 %v422
    %v1560 = vunpack.c.h.b16 %v422
    %v1561 = vunpack.c.l.b16 %v423
    %v1562 = vunpack.c.h.b16 %v423
    %v1563 = vunpack.c.l.b16 %v424
    %v1564 = vunpack.c.h.b16 %v424
    %v1565 = vunpack.c.l.b16 %v425
    %v1566 = vunpack.c.h.b16 %v425
    %v1567 = vunpack.c.l.b16 %v426
    %v1568 = vunpack.c.h.b16 %v426
    %v1569 = vunpack.c.l.b16 %v427
    %v1570 = vunpack.c.h.b16 %v427
    %v1571 = vunpack.c.l.b16 %v428
    %v1572 = vunpack.c.h.b16 %v428
    %v1573 = vunpack.c.l.b16 %v429
    %v1574 = vunpack.c.h.b16 %v429
    %v1575 = vunpack.c.l.b16 %v430
    %v1576 = vunpack.c.h.b16 %v430
    %v1577 = vunpack.c.l.b16 %v431
    %v1578 = vunpack.c.h.b16 %v431
    %v1579 = vunpack.c.l.b16 %v432
    %v1580 = vunpack.c.h.b16 %v432
    %v1581 = vunpack.c.l.b16 %v433
    %v1582 = vunpack.c.h.b16 %v433
    %v1583 = vunpack.c.l.b16 %v434
    %v1584 = vunpack.c.h.b16 %v434
    %v1585 = vunpack.c.l.b16 %v435
    %v1586 = vunpack.c.h.b16 %v435
    %v1587 = vunpack.c.l.b16 %v436
    %v1588 = vunpack.c.h.b16 %v436
    %v1589 = vunpack.c.l.b16 %v437
    %v1590 = vunpack.c.h.b16 %v437
    %v1591 = vunpack.c.l.b16 %v438
    %v1592 = vunpack.c.h.b16 %v438
    %v1593 = vunpack.c.l.b16 %v439
    %v1594 = vunpack.c.h.b16 %v439
    %v1595 = vunpack.c.l.b16 %v440
    %v1596 = vunpack.c.h.b16 %v440
    %v1597 = vunpack.c.l.b16 %v441
    %v1598 = vunpack.c.h.b16 %v441
    %v1599 = vunpack.c.l.b16 %v442
    %v1600 = vunpack.c.h.b16 %v442
    %v1601 = vunpack.c.l.b16 %v443
    %v1602 = vunpack.c.h.b16 %v443
    %v1603 = vunpack.c.l.b16 %v444
    %v1604 = vunpack.c.h.b16 %v444
    %v1605 = vunpack.c.l.b16 %v445
    %v1606 = vunpack.c.h.b16 %v445
    %v1607 = vunpack.c.l.b16 %v446
    %v1608 = vunpack.c.h.b16 %v446
    %v1609 = vunpack.c.l.b16 %v447
    %v1610 = vunpack.c.h.b16 %v447
    %v1611 = vunpack.c.l.b16 %v448
    %v1612 = vunpack.c.h.b16 %v448
    %v1613 = vunpack.c.l.b16 %v449
    %v1614 = vunpack.c.h.b16 %v449
    %v1615 = vunpack.c.l.b16 %v450
    %v1616 = vunpack.c.h.b16 %v450
    %v1617 = vunpack.c.l.b16 %v451
    %v1618 = vunpack.c.h.b16 %v451
    %v1619 = vunpack.c.l.b16 %v452
    %v1620 = vunpack.c.h.b16 %v452
    %v1621 = vunpack.c.l.b16 %v453
    %v1622 = vunpack.c.h.b16 %v453
    %v1623 = vunpack.c.l.b16 %v454
    %v1624 = vunpack.c.h.b16 %v454
    %v1625 = vunpack.c.l.b16 %v455
    %v1626 = vunpack.c.h.b16 %v455
    %v1627 = vunpack.c.l.b16 %v456
    %v1628 = vunpack.c.h.b16 %v456
    %v1629 = vunpack.c.l.b16 %v457
    %v1630 = vunpack.c.h.b16 %v457
    %v1631 = vunpack.c.l.b16 %v458
    %v1632 = vunpack.c.h.b16 %v458
    %v1633 = vunpack.c.l.b16 %v459
    %v1634 = vunpack.c.h.b16 %v459
    %v1635 = vunpack.c.l.b16 %v460
    %v1636 = vunpack.c.h.b16 %v460
    %v1637 = vunpack.c.l.b16 %v461
    %v1638 = vunpack.c.h.b16 %v461
    %v1639 = vunpack.c.l.b16 %v462
    %v1640 = vunpack.c.h.b16 %v462
    %v1641 = vunpack.c.l.b16 %v463
    %v1642 = vunpack.c.h.b16 %v463
    %v1643 = vunpack.c.l.b16 %v464
    %v1644 = vunpack.c.h.b16 %v464
    %v1645 = vunpack.c.l.b16 %v465
    %v1646 = vunpack.c.h.b16 %v465
    %v1647 = vunpack.c.l.b16 %v466
    %v1648 = vunpack.c.h.b16 %v466
    %v1649 = vunpack.c.l.b16 %v467
    %v1650 = vunpack.c.h.b16 %v467
    %v1651 = vunpack.c.l.b16 %v468
    %v1652 = vunpack.c.h.b16 %v468
    %v1653 = vunpack.c.l.b16 %v469
    %v1654 = vunpack.c.h.b16 %v469
    %v1655 = vunpack.c.l.b16 %v470
    %v1656 = vunpack.c.h.b16 %v470
    %v1657 = vunpack.c.l.b16 %v471
    %v1658 = vunpack.c.h.b16 %v471
    %v1659 = vunpack.c.l.b16 %v472
    %v1660 = vunpack.c.h.b16 %v472
    %v1661 = vunpack.c.l.b16 %v473
    %v1662 = vunpack.c.h.b16 %v473
    %v1663 = vunpack.c.l.b16 %v474
    %v1664 = vunpack.c.h.b16 %v474
    %v1665 = vunpack.c.l.b16 %v475
    %v1666 = vunpack.c.h.b16 %v475
    %v1667 = vunpack.c.l.b16 %v476
    %v1668 = vunpack.c.h.b16 %v476
    %v1669 = vunpack.c.l.b16 %v477
    %v1670 = vunpack.c.h.b16 %v477
    %v1671 = vunpack.c.l.b16 %v478
    %v1672 = vunpack.c.h.b16 %v478
    %v1673 = vunpack.c.l.b16 %v479
    %v1674 = vunpack.c.h.b16 %v479
    %v1675 = vunpack.c.l.b16 %v480
    %v1676 = vunpack.c.h.b16 %v480
    %v1677 = vunpack.c.l.b16 %v481
    %v1678 = vunpack.c.h.b16 %v481
    %v1679 = vunpack.c.l.b16 %v482
    %v1680 = vunpack.c.h.b16 %v482
    %v1681 = vunpack.c.l.b16 %v483
    %v1682 = vunpack.c.h.b16 %v483
    %v1683 = vunpack.c.l.b16 %v484
    %v1684 = vunpack.c.h.b16 %v484
    %v1685 = vunpack.c.l.b16 %v485
    %v1686 = vunpack.c.h.b16 %v485
    %v1687 = vunpack.c.l.b16 %v486
    %v1688 = vunpack.c.h.b16 %v486
    %v1689 = vunpack.c.l.b16 %v487
    %v1690 = vunpack.c.h.b16 %v487
    %v1691 = vunpack.c.l.b16 %v488
    %v1692 = vunpack.c.h.b16 %v488
    %v1693 = vunpack.c.l.b16 %v489
    %v1694 = vunpack.c.h.b16 %v489
    %v1695 = vunpack.c.l.b16 %v490
    %v1696 = vunpack.c.h.b16 %v490
    %v1697 = vunpack.c.l.b16 %v491
    %v1698 = vunpack.c.h.b16 %v491
    %v1699 = vunpack.c.l.b16 %v492
    %v1700 = vunpack.c.h.b16 %v492
    %v1701 = vunpack.c.l.b16 %v493
    %v1702 = vunpack.c.h.b16 %v493
    %v1703 = vunpack.c.l.b16 %v494
    %v1704 = vunpack.c.h.b16 %v494
    %v1705 = vunpack.c.l.b16 %v495
    %v1706 = vunpack.c.h.b16 %v495
    %v1707 = vunpack.c.l.b16 %v496
    %v1708 = vunpack.c.h.b16 %v496
    %v1709 = vunpack.c.l.b16 %v497
    %v1710 = vunpack.c.h.b16 %v497
    %v1711 = vunpack.c.l.b16 %v498
    %v1712 = vunpack.c.h.b16 %v498
    %v1713 = vunpack.c.l.b16 %v499
    %v1714 = vunpack.c.h.b16 %v499
    %v1715 = vunpack.c.l.b16 %v500
    %v1716 = vunpack.c.h.b16 %v500
    %v1717 = vunpack.c.l.b16 %v501
    %v1718 = vunpack.c.h.b16 %v501
    %v1719 = vunpack.c.l.b16 %v502
    %v1720 = vunpack.c.h.b16 %v502
    %v1721 = vunpack.c.l.b16 %v503
    %v1722 = vunpack.c.h.b16 %v503
    %v1723 = vunpack.c.l.b16 %v504
    %v1724 = vunpack.c.h.b16 %v504
    %v1725 = vunpack.c.l.b16 %v505
    %v1726 = vunpack.c.h.b16 %v505
    %v1727 = vunpack.c.l.b16 %v506
    %v1728 = vunpack.c.h.b16 %v506
    %v1729 = vunpack.c.l.b16 %v507
    %v1730 = vunpack.c.h.b16 %v507
    %v1731 = vunpack.c.l.b16 %v508
    %v1732 = vunpack.c.h.b16 %v508
    %v1733 = vpack.c.b16 %v971, %v965
    %v1734 = vpack.c.b16 %v972, %v966
    %v1735 = vpack.c.b16 %v973, %v967
    %v1736 = vpack.c.b16 %v974, %v968
    %v1737 = vpack.c.b16 %v975, %v969
    %v1738 = vpack.c.b16 %v976, %v970
    %v1739 = vpack.c.b16 %v983, %v977
    %v1740 = vpack.c.b16 %v984, %v978
    %v1741 = vpack.c.b16 %v985, %v979
    %v1742 = vpack.c.b16 %v986, %v980
    %v1743 = vpack.c.b16 %v987, %v981
    %v1744 = vpack.c.b16 %v988, %v982
    %v1745 = vpack.c.b16 %v995, %v989
    %v1746 = vpack.c.b16 %v996, %v990
    %v1747 = vpack.c.b16 %v997, %v991
    %v1748 = vpack.c.b16 %v998, %v992
    %v1749 = vpack.c.b16 %v999, %v993
    %v1750 = vpack.c.b16 %v1000, %v994
    %v1751 = vpack.c.b16 %v1007, %v1001
    %v1752 = vpack.c.b16 %v1008, %v1002
    %v1753 = vpack.c.b16 %v1009, %v1003
    %v1754 = vpack.c.b16 %v1010, %v1004
    %v1755 = vpack.c.b16 %v1011, %v1005
    %v1756 = vpack.c.b16 %v1012, %v1006
    %v1757 = vpack.c.b16 %v1019, %v1013
    %v1758 = vpack.c.b16 %v1020, %v1014
    %v1759 = vpack.c.b16 %v1021, %v1015
    %v1760 = vpack.c.b16 %v1022, %v1016
    %v1761 = vpack.c.b16 %v1023, %v1017
    %v1762 = vpack.c.b16 %v1024, %v1018
    %v1763 = vpack.c.b16 %v1031, %v1025
    %v1764 = vpack.c.b16 %v1032, %v1026
    %v1765 = vpack.c.b16 %v1033, %v1027
    %v1766 = vpack.c.b16 %v1034, %v1028
    %v1767 = vpack.c.b16 %v1035, %v1029
    %v1768 = vpack.c.b16 %v1036, %v1030
    %v1769 = vpack.c.b16 %v1043, %v1037
    %v1770 = vpack.c.b16 %v1044, %v1038
    %v1771 = vpack.c.b16 %v1045, %v1039
    %v1772 = vpack.c.b16 %v1046, %v1040
    %v1773 = vpack.c.b16 %v1047, %v1041
    %v1774 = vpack.c.b16 %v1048, %v1042
    %v1775 = vpack.c.b16 %v1055, %v1049
    %v1776 = vpack.c.b16 %v1056, %v1050
    %v1777 = vpack.c.b16 %v1057, %v1051
    %v1778 = vpack.c.b16 %v1058, %v1052
    %v1779 = vpack.c.b16 %v1059, %v1053
    %v1780 = vpack.c.b16 %v1060, %v1054
    %v1781 = vpack.c.b16 %v1067, %v1061
    %v1782 = vpack.c.b16 %v1068, %v1062
    %v1783 = vpack.c.b16 %v1069, %v1063
    %v1784 = vpack.c.b16 %v1070, %v1064
    %v1785 = vpack.c.b16 %v1071, %v1065
    %v1786 = vpack.c.b16 %v1072, %v1066
    %v1787 = vpack.c.b16 %v1079, %v1073
    %v1788 = vpack.c.b16 %v1080, %v1074
    %v1789 = vpack.c.b16 %v1081, %v1075
    %v1790 = vpack.c.b16 %v1082, %v1076
    %v1791 = vpack.c.b16 %v1083, %v1077
    %v1792 = vpack.c.b16 %v1084, %v1078
    %v1793 = vpack.c.b16 %v1091, %v1085
    %v1794 = vpack.c.b16 %v1092, %v1086
    %v1795 = vpack.c.b16 %v1093, %v1087
    %v1796 = vpack.c.b16 %v1094, %v1088
    %v1797 = vpack.c.b16 %v1095, %v1089
    %v1798 = vpack.c.b16 %v1096, %v1090
    %v1799 = vpack.c.b16 %v1103, %v1097
    %v1800 = vpack.c.b16 %v1104, %v1098
    %v1801 = vpack.c.b16 %v1105, %v1099
    %v1802 = vpack.c.b16 %v1106, %v1100
    %v1803 = vpack.c.b16 %v1107, %v1101
    %v1804 = vpack.c.b16 %v1108, %v1102
    %v1805 = vpack.c.b16 %v1115, %v1109
    %v1806 = vpack.c.b16 %v1116, %v1110
    %v1807 = vpack.c.b16 %v1117, %v1111
    %v1808 = vpack.c.b16 %v1118, %v1112
    %v1809 = vpack.c.b16 %v1119, %v1113
    %v1810 = vpack.c.b16 %v1120, %v1114
    %v1811 = vpack.c.b16 %v1127, %v1121
    %v1812 = vpack.c.b16 %v1128, %v1122
    %v1813 = vpack.c.b16 %v1129, %v1123
    %v1814 = vpack.c.b16 %v1130, %v1124
    %v1815 = vpack.c.b16 %v1131, %v1125
    %v1816 = vpack.c.b16 %v1132, %v1126
    %v1817 = vpack.c.b16 %v1139, %v1133
    %v1818 = vpack.c.b16 %v1140, %v1134
    %v1819 = vpack.c.b16 %v1141, %v1135
    %v1820 = vpack.c.b16 %v1142, %v1136
    %v1821 = vpack.c.b16 %v1143, %v1137
    %v1822 = vpack.c.b16 %v1144, %v1138
    %v1823 = vpack.c.b16 %v1151, %v1145
    %v1824 = vpack.c.b16 %v1152, %v1146
    %v1825 = vpack.c.b16 %v1153, %v1147
    %v1826 = vpack.c.b16 %v1154, %v1148
    %v1827 = vpack.c.b16 %v1155, %v1149
    %v1828 = vpack.c.b16 %v1156, %v1150
    %v1829 = vpack.c.b16 %v1163, %v1157
    %v1830 = vpack.c.b16 %v1164, %v1158
    %v1831 = vpack.c.b16 %v1165, %v1159
    %v1832 = vpack.c.b16 %v1166, %v1160
    %v1833 = vpack.c.b16 %v1167, %v1161
    %v1834 = vpack.c.b16 %v1168, %v1162
    %v1835 = vpack.c.b16 %v1175, %v1169
    %v1836 = vpack.c.b16 %v1176, %v1170
    %v1837 = vpack.c.b16 %v1177, %v1171
    %v1838 = vpack.c.b16 %v1178, %v1172
    %v1839 = vpack.c.b16 %v1179, %v1173
    %v1840 = vpack.c.b16 %v1180, %v1174
    %v1841 = vpack.c.b16 %v1187, %v1181
    %v1842 = vpack.c.b16 %v1188, %v1182
    %v1843 = vpack.c.b16 %v1189, %v1183
    %v1844 = vpack.c.b16 %v1190, %v1184
    %v1845 = vpack.c.b16 %v1191, %v1185
    %v1846 = vpack.c.b16 %v1192, %v1186
    %v1847 = vpack.c.b16 %v1199, %v1193
    %v1848 = vpack.c.b16 %v1200, %v1194
    %v1849 = vpack.c.b16 %v1201, %v1195
    %v1850 = vpack.c.b16 %v1202, %v1196
    %v1851 = vpack.c.b16 %v1203, %v1197
    %v1852 = vpack.c.b16 %v1204, %v1198
    %v1853 = vpack.c.b16 %v1211, %v1205
    %v1854 = vpack.c.b16 %v1212, %v1206
    %v1855 = vpack.c.b16 %v1213, %v1207
    %v1856 = vpack.c.b16 %v1214, %v1208
    %v1857 = vpack.c.b16 %v1215, %v1209
    %v1858 = vpack.c.b16 %v1216, %v1210
    %v1859 = vpack.c.b16 %v1223, %v1217
    %v1860 = vpack.c.b16 %v1224, %v1218
    %v1861 = vpack.c.b16 %v1225, %v1219
    %v1862 = vpack.c.b16 %v1226, %v1220
    %v1863 = vpack.c.b16 %v1227, %v1221
    %v1864 = vpack.c.b16 %v1228, %v1222
    %v1865 = vpack.c.b16 %v1235, %v1229
    %v1866 = vpack.c.b16 %v1236, %v1230
    %v1867 = vpack.c.b16 %v1237, %v1231
    %v1868 = vpack.c.b16 %v1238, %v1232
    %v1869 = vpack.c.b16 %v1239, %v1233
    %v1870 = vpack.c.b16 %v1240, %v1234
    %v1871 = vpack.c.b16 %v1247, %v1241
    %v1872 = vpack.c.b16 %v1248, %v1242
    %v1873 = vpack.c.b16 %v1249, %v1243
    %v1874 = vpack.c.b16 %v1250, %v1244
    %v1875 = vpack.c.b16 %v1251, %v1245
    %v1876 = vpack.c.b16 %v1252, %v1246
    %v1877 = vpack.c.b16 %v1259, %v1253
    %v1878 = vpack.c.b16 %v1260, %v1254
    %v1879 = vpack.c.b16 %v1261, %v1255
    %v1880 = vpack.c.b16 %v1262, %v1256
    %v1881 = vpack.c.b16 %v1263, %v1257
    %v1882 = vpack.c.b16 %v1264, %v1258
    %v1883 = vpack.c.b16 %v1271, %v1265
    %v1884 = vpack.c.b16 %v1272, %v1266
    %v1885 = vpack.c.b16 %v1273, %v1267
    %v1886 = vpack.c.b16 %v1274, %v1268
    %v1887 = vpack.c.b16 %v1275, %v1269
    %v1888 = vpack.c.b16 %v1276, %v1270
    %v1889 = vpack.c.b16 %v1283, %v1277
    %v1890 = vpack.c.b16 %v1284, %v1278
    %v1891 = vpack.c.b16 %v1285, %v1279
    %v1892 = vpack.c.b16 %v1286, %v1280
    %v1893 = vpack.c.b16 %v1287, %v1281
    %v1894 = vpack.c.b16 %v1288, %v1282
    %v1895 = vpack.c.b16 %v1295, %v1289
    %v1896 = vpack.c.b16 %v1296, %v1290
    %v1897 = vpack.c.b16 %v1297, %v1291
    %v1898 = vpack.c.b16 %v1298, %v1292
    %v1899 = vpack.c.b16 %v1299, %v1293
    %v1900 = vpack.c.b16 %v1300, %v1294
    %v1901 = vpack.c.b16 %v1307, %v1301
    %v1902 = vpack.c.b16 %v1308, %v1302
    %v1903 = vpack.c.b16 %v1309, %v1303
    %v1904 = vpack.c.b16 %v1310, %v1304
    %v1905 = vpack.c.b16 %v1311, %v1305
    %v1906 = vpack.c.b16 %v1312, %v1306
    %v1907 = vpack.c.b16 %v1319, %v1313
    %v1908 = vpack.c.b16 %v1320, %v1314
    %v1909 = vpack.c.b16 %v1321, %v1315
    %v1910 = vpack.c.b16 %v1322, %v1316
    %v1911 = vpack.c.b16 %v1323, %v1317
    %v1912 = vpack.c.b16 %v1324, %v1318
    %v1913 = vpack.c.b16 %v1331, %v1325
    %v1914 = vpack.c.b16 %v1332, %v1326
    %v1915 = vpack.c.b16 %v1333, %v1327
    %v1916 = vpack.c.b16 %v1334, %v1328
    %v1917 = vpack.c.b16 %v1335, %v1329
    %v1918 = vpack.c.b16 %v1336, %v1330
    %v1919 = vpack.c.b16 %v1343, %v1337
    %v1920 = vpack.c.b16 %v1344, %v1338
    %v1921 = vpack.c.b16 %v1345, %v1339
    %v1922 = vpack.c.b16 %v1346, %v1340
    %v1923 = vpack.c.b16 %v1347, %v1341
    %v1924 = vpack.c.b16 %v1348, %v1342
    %v1925 = vpack.c.b16 %v1355, %v1349
    %v1926 = vpack.c.b16 %v1356, %v1350
    %v1927 = vpack.c.b16 %v1357, %v1351
    %v1928 = vpack.c.b16 %v1358, %v1352
    %v1929 = vpack.c.b16 %v1359, %v1353
    %v1930 = vpack.c.b16 %v1360, %v1354
    %v1931 = vpack.c.b16 %v1367, %v1361
    %v1932 = vpack.c.b16 %v1368, %v1362
    %v1933 = vpack.c.b16 %v1369, %v1363
    %v1934 = vpack.c.b16 %v1370, %v1364
    %v1935 = vpack.c.b16 %v1371, %v1365
    %v1936 = vpack.c.b16 %v1372, %v1366
    %v1937 = vpack.c.b16 %v1379, %v1373
    %v1938 = vpack.c.b16 %v1380, %v1374
    %v1939 = vpack.c.b16 %v1381, %v1375
    %v1940 = vpack.c.b16 %v1382, %v1376
    %v1941 = vpack.c.b16 %v1383, %v1377
    %v1942 = vpack.c.b16 %v1384, %v1378
    %v1943 = vpack.c.b16 %v1391, %v1385
    %v1944 = vpack.c.b16 %v1392, %v1386
    %v1945 = vpack.c.b16 %v1393, %v1387
    %v1946 = vpack.c.b16 %v1394, %v1388
    %v1947 = vpack.c.b16 %v1395, %v1389
    %v1948 = vpack.c.b16 %v1396, %v1390
    %v1949 = vpack.c.b16 %v1403, %v1397
    %v1950 = vpack.c.b16 %v1404, %v1398
    %v1951 = vpack.c.b16 %v1405, %v1399
    %v1952 = vpack.c.b16 %v1406, %v1400
    %v1953 = vpack.c.b16 %v1407, %v1401
    %v1954 = vpack.c.b16 %v1408, %v1402
    %v1955 = vpack.c.b16 %v1415, %v1409
    %v1956 = vpack.c.b16 %v1416, %v1410
    %v1957 = vpack.c.b16 %v1417, %v1411
    %v1958 = vpack.c.b16 %v1418, %v1412
    %v1959 = vpack.c.b16 %v1419, %v1413
    %v1960 = vpack.c.b16 %v1420, %v1414
    %v1961 = vpack.c.b16 %v1427, %v1421
    %v1962 = vpack.c.b16 %v1428, %v1422
    %v1963 = vpack.c.b16 %v1429, %v1423
    %v1964 = vpack.c.b16 %v1430, %v1424
    %v1965 = vpack.c.b16 %v1431, %v1425
    %v1966 = vpack.c.b16 %v1432, %v1426
    %v1967 = vpack.c.b16 %v1439, %v1433
    %v1968 = vpack.c.b16 %v1440, %v1434
    %v1969 = vpack.c.b16 %v1441, %v1435
    %v1970 = vpack.c.b16 %v1442, %v1436
    %v1971 = vpack.c.b16 %v1443, %v1437
    %v1972 = vpack.c.b16 %v1444, %v1438
    %v1973 = vpack.c.b16 %v1451, %v1445
    %v1974 = vpack.c.b16 %v1452, %v1446
    %v1975 = vpack.c.b16 %v1453, %v1447
    %v1976 = vpack.c.b16 %v1454, %v1448
    %v1977 = vpack.c.b16 %v1455, %v1449
    %v1978 = vpack.c.b16 %v1456, %v1450
    %v1979 = vpack.c.b16 %v1463, %v1457
    %v1980 = vpack.c.b16 %v1464, %v1458
    %v1981 = vpack.c.b16 %v1465, %v1459
    %v1982 = vpack.c.b16 %v1466, %v1460
    %v1983 = vpack.c.b16 %v1467, %v1461
    %v1984 = vpack.c.b16 %v1468, %v1462
    %v1985 = vpack.c.b16 %v1475, %v1469
    %v1986 = vpack.c.b16 %v1476, %v1470
    %v1987 = vpack.c.b16 %v1477, %v1471
    %v1988 = vpack.c.b16 %v1478, %v1472
    %v1989 = vpack.c.b16 %v1479, %v1473
    %v1990 = vpack.c.b16 %v1480, %v1474
    %v1991 = vpack.c.b16 %v1487, %v1481
    %v1992 = vpack.c.b16 %v1488, %v1482
    %v1993 = vpack.c.b16 %v1489, %v1483
    %v1994 = vpack.c.b16 %v1490, %v1484
    %v1995 = vpack.c.b16 %v1491, %v1485
    %v1996 = vpack.c.b16 %v1492, %v1486
    %v1997 = vpack.c.b16 %v1499, %v1493
    %v1998 = vpack.c.b16 %v1500, %v1494
    %v1999 = vpack.c.b16 %v1501, %v1495
    %v2000 = vpack.c.b16 %v1502, %v1496
    %v2001 = vpack.c.b16 %v1503, %v1497
    %v2002 = vpack.c.b16 %v1504, %v1498
    %v2003 = vpack.c.b16 %v1511, %v1505
    %v2004 = vpack.c.b16 %v1512, %v1506
    %v2005 = vpack.c.b16 %v1513, %v1507
    %v2006 = vpack.c.b16 %v1514, %v1508
    %v2007 = vpack.c.b16 %v1515, %v1509
    %v2008 = vpack.c.b16 %v1516, %v1510
    %v2009 = vpack.c.b16 %v1523, %v1517
    %v2010 = vpack.c.b16 %v1524, %v1518
    %v2011 = vpack.c.b16 %v1525, %v1519
    %v2012 = vpack.c.b16 %v1526, %v1520
    %v2013 = vpack.c.b16 %v1527, %v1521
    %v2014 = vpack.c.b16 %v1528, %v1522
    %v2015 = vpack.c.b16 %v1535, %v1529
    %v2016 = vpack.c.b16 %v1536, %v1530
    %v2017 = vpack.c.b16 %v1537, %v1531
    %v2018 = vpack.c.b16 %v1538, %v1532
    %v2019 = vpack.c.b16 %v1539, %v1533
    %v2020 = vpack.c.b16 %v1540, %v1534
    %v2021 = vpack.c.b16 %v1547, %v1541
    %v2022 = vpack.c.b16 %v1548, %v1542
    %v2023 = vpack.c.b16 %v1549, %v1543
    %v2024 = vpack.c.b16 %v1550, %v1544
    %v2025 = vpack.c.b16 %v1551, %v1545
    %v2026 = vpack.c.b16 %v1552, %v1546
    %v2027 = vpack.c.b16 %v1559, %v1553
    %v2028 = vpack.c.b16 %v1560, %v1554
    %v2029 = vpack.c.b16 %v1561, %v1555
    %v2030 = vpack.c.b16 %v1562, %v1556
    %v2031 = vpack.c.b16 %v1563, %v1557
    %v2032 = vpack.c.b16 %v1564, %v1558
    %v2033 = vpack.c.b16 %v1571, %v1565
    %v2034 = vpack.c.b16 %v1572, %v1566
    %v2035 = vpack.c.b16 %v1573, %v1567
    %v2036 = vpack.c.b16 %v1574, %v1568
    %v2037 = vpack.c.b16 %v1575, %v1569
    %v2038 = vpack.c.b16 %v1576, %v1570
    %v2039 = vpack.c.b16 %v1583, %v1577
    %v2040 = vpack.c.b16 %v1584, %v1578
    %v2041 = vpack.c.b16 %v1585, %v1579
    %v2042 = vpack.c.b16 %v1586, %v1580
    %v2043 = vpack.c.b16 %v1587, %v1581
    %v2044 = vpack.c.b16 %v1588, %v1582
    %v2045 = vpack.c.b16 %v1595, %v1589
    %v2046 = vpack.c.b16 %v1596, %v1590
    %v2047 = vpack.c.b16 %v1597, %v1591
    %v2048 = vpack.c.b16 %v1598, %v1592
    %v2049 = vpack.c.b16 %v1599, %v1593
    %v2050 = vpack.c.b16 %v1600, %v1594
    %v2051 = vpack.c.b16 %v1607, %v1601
    %v2052 = vpack.c.b16 %v1608, %v1602
    %v2053 = vpack.c.b16 %v1609, %v1603
    %v2054 = vpack.c.b16 %v1610, %v1604
    %v2055 = vpack.c.b16 %v1611, %v1605
    %v2056 = vpack.c.b16 %v1612, %v1606
    %v2057 = vpack.c.b16 %v1619, %v1613
    %v2058 = vpack.c.b16 %v1620, %v1614
    %v2059 = vpack.c.b16 %v1621, %v1615
    %v2060 = vpack.c.b16 %v1622, %v1616
    %v2061 = vpack.c.b16 %v1623, %v1617
    %v2062 = vpack.c.b16 %v1624, %v1618
    %v2063 = vpack.c.b16 %v1631, %v1625
    %v2064 = vpack.c.b16 %v1632, %v1626
    %v2065 = vpack.c.b16 %v1633, %v1627
    %v2066 = vpack.c.b16 %v1634, %v1628
    %v2067 = vpack.c.b16 %v1635, %v1629
    %v2068 = vpack.c.b16 %v1636, %v1630
    %v2069 = vpack.c.b16 %v1643, %v1637
    %v2070 = vpack.c.b16 %v1644, %v1638
    %v2071 = vpack.c.b16 %v1645, %v1639
    %v2072 = vpack.c.b16 %v1646, %v1640
    %v2073 = vpack.c.b16 %v1647, %v1641
    %v2074 = vpack.c.b16 %v1648, %v1642
    %v2075 = vpack.c.b16 %v1655, %v1649
    %v2076 = vpack.c.b16 %v1656, %v1650
    %v2077 = vpack.c.b16 %v1657, %v1651
    %v2078 = vpack.c.b16 %v1658, %v1652
    %v2079 = vpack.c.b16 %v1659, %v1653
    %v2080 = vpack.c.b16 %v1660, %v1654
    %v2081 = vpack.c.b16 %v1667, %v1661
    %v2082 = vpack.c.b16 %v1668, %v1662
    %v2083 = vpack.c.b16 %v1669, %v1663
    %v2084 = vpack.c.b16 %v1670, %v1664
    %v2085 = vpack.c.b16 %v1671, %v1665
    %v2086 = vpack.c.b16 %v1672, %v1666
    %v2087 = vpack.c.b16 %v1679, %v1673
    %v2088 = vpack.c.b16 %v1680, %v1674
    %v2089 = vpack.c.b16 %v1681, %v1675
    %v2090 = vpack.c.b16 %v1682, %v1676
    %v2091 = vpack.c.b16 %v1683, %v1677
    %v2092 = vpack.c.b16 %v1684, %v1678
    %v2093 = vpack.c.b16 %v1691, %v1685
    %v2094 = vpack.c.b16 %v1692, %v1686
    %v2095 = vpack.c.b16 %v1693, %v1687
    %v2096 = vpack.c.b16 %v1694, %v1688
    %v2097 = vpack.c.b16 %v1695, %v1689
    %v2098 = vpack.c.b16 %v1696, %v1690
    %v2099 = vpack.c.b16 %v1703, %v1697
    %v2100 = vpack.c.b16 %v1704, %v1698
    %v2101 = vpack.c.b16 %v1705, %v1699
    %v2102 = vpack.c.b16 %v1706, %v1700
    %v2103 = vpack.c.b16 %v1707, %v1701
    %v2104 = vpack.c.b16 %v1708, %v1702
    %v2105 = vpack.c.b16 %v1715, %v1709
    %v2106 = vpack.c.b16 %v1716, %v1710
    %v2107 = vpack.c.b16 %v1717, %v1711
    %v2108 = vpack.c.b16 %v1718, %v1712
    %v2109 = vpack.c.b16 %v1719, %v1713
    %v2110 = vpack.c.b16 %v1720, %v1714
    %v2111 = vpack.c.b16 %v1727, %v1721
    %v2112 = vpack.c.b16 %v1728, %v1722
    %v2113 = vpack.c.b16 %v1729, %v1723
    %v2114 = vpack.c.b16 %v1730, %v1724
    %v2115 = vpack.c.b16 %v1731, %v1725
    %v2116 = vpack.c.b16 %v1732, %v1726
    %2501 = vmatprep.subr.bf16.mxu0 %v1734
    %2502 = vmatpush1.bf16.msra.mxu0 %v1733
    %2503 = vmatprep.subr.bf16.mxu0 %v1740
    %2504 = vmatpush1.bf16.msra.mxu0 %v1739
    %2505 = vmatprep.subr.bf16.mxu0 %v1746
    %2506 = vmatpush1.bf16.msra.mxu0 %v1745
    %2507 = vmatprep.subr.bf16.mxu0 %v1752
    %2508 = vmatpush1.bf16.msra.mxu0 %v1751
    %2509 = vmatprep.subr.bf16.mxu0 %v1758
    %2510 = vmatpush1.bf16.msra.mxu0 %v1757
    %2511 = vmatprep.subr.bf16.mxu0 %v1764
    %2512 = vmatpush1.bf16.msra.mxu0 %v1763
    %2513 = vmatprep.subr.bf16.mxu0 %v1770
    %2514 = vmatpush1.bf16.msra.mxu0 %v1769
    %2515 = vmatprep.subr.bf16.mxu0 %v1776
    %2516 = vmatpush1.bf16.msra.mxu0 %v1775
    %2517 = vmatprep.subr.bf16.mxu0 %v1782
    %2518 = vmatpush1.bf16.msra.mxu0 %v1781
    %2519 = vmatprep.subr.bf16.mxu0 %v1788
    %2520 = vmatpush1.bf16.msra.mxu0 %v1787
    %2521 = vmatprep.subr.bf16.mxu0 %v1794
    %2522 = vmatpush1.bf16.msra.mxu0 %v1793
    %2523 = vmatprep.subr.bf16.mxu0 %v1800
    %2524 = vmatpush1.bf16.msra.mxu0 %v1799
    %2525 = vmatprep.subr.bf16.mxu0 %v1806
    %2526 = vmatpush1.bf16.msra.mxu0 %v1805
    %2527 = vmatprep.subr.bf16.mxu0 %v1812
    %2528 = vmatpush1.bf16.msra.mxu0 %v1811
    %2529 = vmatprep.subr.bf16.mxu0 %v1818
    %2530 = vmatpush1.bf16.msra.mxu0 %v1817
    %2531 = vmatprep.subr.bf16.mxu0 %v1824
    %2532 = vmatpush1.bf16.msra.mxu0 %v1823
    %2533 = vmatprep.mubr.bf16.mxu0 %v566
    %2534 = vmatmul.mubr.bf16.gmra.mrb[0].mxu0 %v565
    %v2535 = vpop.f32.mrb[0].mxu0
    %v2536 = vadd.f32 %v514, %v2535
    %v2537 = vpop.f32.mrb[0].mxu0
    %v2538 = vadd.f32 %v518, %v2537
    %v2539 = vpop.f32.mrb[0].mxu0
    %v2540 = vadd.f32 %v514, %v2539
    %v2541 = vpop.f32.mrb[0].mxu0
    %v2542 = vadd.f32 %v518, %v2541
    %2543 = vdwg.mxu0
    %2544 = vmatprep.subr.bf16.mxu0 %v1830
    %2545 = vmatpush1.bf16.msra.mxu0 %v1829
    %2546 = vmatprep.subr.bf16.mxu0 %v1836
    %2547 = vmatpush1.bf16.msra.mxu0 %v1835
    %2548 = vmatprep.subr.bf16.mxu0 %v1842
    %2549 = vmatpush1.bf16.msra.mxu0 %v1841
    %2550 = vmatprep.subr.bf16.mxu0 %v1848
    %2551 = vmatpush1.bf16.msra.mxu0 %v1847
    %2552 = vmatprep.subr.bf16.mxu0 %v1854
    %2553 = vmatpush1.bf16.msra.mxu0 %v1853
    %2554 = vmatprep.subr.bf16.mxu0 %v1860
    %2555 = vmatpush1.bf16.msra.mxu0 %v1859
    %2556 = vmatprep.subr.bf16.mxu0 %v1866
    %2557 = vmatpush1.bf16.msra.mxu0 %v1865
    %2558 = vmatprep.subr.bf16.mxu0 %v1872
    %2559 = vmatpush1.bf16.msra.mxu0 %v1871
    %2560 = vmatprep.subr.bf16.mxu0 %v1878
    %2561 = vmatpush1.bf16.msra.mxu0 %v1877
    %2562 = vmatprep.subr.bf16.mxu0 %v1884
    %2563 = vmatpush1.bf16.msra.mxu0 %v1883
    %2564 = vmatprep.subr.bf16.mxu0 %v1890
    %2565 = vmatpush1.bf16.msra.mxu0 %v1889
    %2566 = vmatprep.subr.bf16.mxu0 %v1896
    %2567 = vmatpush1.bf16.msra.mxu0 %v1895
    %2568 = vmatprep.subr.bf16.mxu0 %v1902
    %2569 = vmatpush1.bf16.msra.mxu0 %v1901
    %2570 = vmatprep.subr.bf16.mxu0 %v1908
    %2571 = vmatpush1.bf16.msra.mxu0 %v1907
    %2572 = vmatprep.subr.bf16.mxu0 %v1914
    %2573 = vmatpush1.bf16.msra.mxu0 %v1913
    %2574 = vmatprep.subr.bf16.mxu0 %v1920
    %2575 = vmatpush1.bf16.msra.mxu0 %v1919
    %2576 = vmatprep.mubr.bf16.mxu0 %v568
    %2577 = vmatmul.mubr.bf16.gmra.mrb[0].mxu0 %v567
    %v2578 = vpop.f32.mrb[0].mxu0
    %v2579 = vadd.f32 %v2536, %v2578
    %v2580 = vpop.f32.mrb[0].mxu0
    %v2581 = vadd.f32 %v2538, %v2580
    %v2582 = vpop.f32.mrb[0].mxu0
    %v2583 = vadd.f32 %v2540, %v2582
    %v2584 = vpop.f32.mrb[0].mxu0
    %v2585 = vadd.f32 %v2542, %v2584
    %2586 = vdwg.mxu0
    %2587 = vmatprep.subr.bf16.mxu0 %v1926
    %2588 = vmatpush1.bf16.msra.mxu0 %v1925
    %2589 = vmatprep.subr.bf16.mxu0 %v1932
    %2590 = vmatpush1.bf16.msra.mxu0 %v1931
    %2591 = vmatprep.subr.bf16.mxu0 %v1938
    %2592 = vmatpush1.bf16.msra.mxu0 %v1937
    %2593 = vmatprep.subr.bf16.mxu0 %v1944
    %2594 = vmatpush1.bf16.msra.mxu0 %v1943
    %2595 = vmatprep.subr.bf16.mxu0 %v1950
    %2596 = vmatpush1.bf16.msra.mxu0 %v1949
    %2597 = vmatprep.subr.bf16.mxu0 %v1956
    %2598 = vmatpush1.bf16.msra.mxu0 %v1955
    %2599 = vmatprep.subr.bf16.mxu0 %v1962
    %2600 = vmatpush1.bf16.msra.mxu0 %v1961
    %2601 = vmatprep.subr.bf16.mxu0 %v1968
    %2602 = vmatpush1.bf16.msra.mxu0 %v1967
    %2603 = vmatprep.subr.bf16.mxu0 %v1974
    %2604 = vmatpush1.bf16.msra.mxu0 %v1973
    %2605 = vmatprep.subr.bf16.mxu0 %v1980
    %2606 = vmatpush1.bf16.msra.mxu0 %v1979
    %2607 = vmatprep.subr.bf16.mxu0 %v1986
    %2608 = vmatpush1.bf16.msra.mxu0 %v1985
    %2609 = vmatprep.subr.bf16.mxu0 %v1992
    %2610 = vmatpush1.bf16.msra.mxu0 %v1991
    %2611 = vmatprep.subr.bf16.mxu0 %v1998
    %2612 = vmatpush1.bf16.msra.mxu0 %v1997
    %2613 = vmatprep.subr.bf16.mxu0 %v2004
    %2614 = vmatpush1.bf16.msra.mxu0 %v2003
    %2615 = vmatprep.subr.bf16.mxu0 %v2010
    %2616 = vmatpush1.bf16.msra.mxu0 %v2009
    %2617 = vmatprep.subr.bf16.mxu0 %v2016
    %2618 = vmatpush1.bf16.msra.mxu0 %v2015
    %2619 = vmatprep.mubr.bf16.mxu0 %v570
    %2620 = vmatmul.mubr.bf16.gmra.mrb[0].mxu0 %v569
    %v2621 = vpop.f32.mrb[0].mxu0
    %v2622 = vadd.f32 %v2579, %v2621
    %v2623 = vpop.f32.mrb[0].mxu0
    %v2624 = vadd.f32 %v2581, %v2623
    %v2625 = vpop.f32.mrb[0].mxu0
    %v2626 = vadd.f32 %v2583, %v2625
    %v2627 = vpop.f32.mrb[0].mxu0
    %v2628 = vadd.f32 %v2585, %v2627
    %2629 = vdwg.mxu0
    %2630 = vmatprep.subr.bf16.mxu0 %v2022
    %2631 = vmatpush1.bf16.msra.mxu0 %v2021
    %2632 = vmatprep.subr.bf16.mxu0 %v2028
    %2633 = vmatpush1.bf16.msra.mxu0 %v2027
    %2634 = vmatprep.subr.bf16.mxu0 %v2034
    %2635 = vmatpush1.bf16.msra.mxu0 %v2033
    %2636 = vmatprep.subr.bf16.mxu0 %v2040
    %2637 = vmatpush1.bf16.msra.mxu0 %v2039
    %2638 = vmatprep.subr.bf16.mxu0 %v2046
    %2639 = vmatpush1.bf16.msra.mxu0 %v2045
    %2640 = vmatprep.subr.bf16.mxu0 %v2052
    %2641 = vmatpush1.bf16.msra.mxu0 %v2051
    %2642 = vmatprep.subr.bf16.mxu0 %v2058
    %2643 = vmatpush1.bf16.msra.mxu0 %v2057
    %2644 = vmatprep.subr.bf16.mxu0 %v2064
    %2645 = vmatpush1.bf16.msra.mxu0 %v2063
    %2646 = vmatprep.subr.bf16.mxu0 %v2070
    %2647 = vmatpush1.bf16.msra.mxu0 %v2069
    %2648 = vmatprep.subr.bf16.mxu0 %v2076
    %2649 = vmatpush1.bf16.msra.mxu0 %v2075
    %2650 = vmatprep.subr.bf16.mxu0 %v2082
    %2651 = vmatpush1.bf16.msra.mxu0 %v2081
    %2652 = vmatprep.subr.bf16.mxu0 %v2088
    %2653 = vmatpush1.bf16.msra.mxu0 %v2087
    %2654 = vmatprep.subr.bf16.mxu0 %v2094
    %2655 = vmatpush1.bf16.msra.mxu0 %v2093
    %2656 = vmatprep.subr.bf16.mxu0 %v2100
    %2657 = vmatpush1.bf16.msra.mxu0 %v2099
    %2658 = vmatprep.subr.bf16.mxu0 %v2106
    %2659 = vmatpush1.bf16.msra.mxu0 %v2105
    %2660 = vmatprep.subr.bf16.mxu0 %v2112
    %2661 = vmatpush1.bf16.msra.mxu0 %v2111
    %2662 = vmatprep.mubr.bf16.mxu0 %v572
    %2663 = vmatmul.mubr.bf16.gmra.mrb[0].mxu0 %v571
    %v2664 = vpop.f32.mrb[0].mxu0
    %v2665 = vadd.f32 %v2622, %v2664
    %v2666 = vpop.f32.mrb[0].mxu0
    %v2667 = vadd.f32 %v2624, %v2666
    %v2668 = vpop.f32.mrb[0].mxu0
    %v2669 = vadd.f32 %v2626, %v2668
    %v2670 = vpop.f32.mrb[0].mxu0
    %v2671 = vadd.f32 %v2628, %v2670
    %2672 = vdwg.mxu0
    %2673 = vmatprep.subr.bf16.mxu0 %v1736
    %2674 = vmatpush1.bf16.msra.mxu0 %v1735
    %2675 = vmatprep.subr.bf16.mxu0 %v1742
    %2676 = vmatpush1.bf16.msra.mxu0 %v1741
    %2677 = vmatprep.subr.bf16.mxu0 %v1748
    %2678 = vmatpush1.bf16.msra.mxu0 %v1747
    %2679 = vmatprep.subr.bf16.mxu0 %v1754
    %2680 = vmatpush1.bf16.msra.mxu0 %v1753
    %2681 = vmatprep.subr.bf16.mxu0 %v1760
    %2682 = vmatpush1.bf16.msra.mxu0 %v1759
    %2683 = vmatprep.subr.bf16.mxu0 %v1766
    %2684 = vmatpush1.bf16.msra.mxu0 %v1765
    %2685 = vmatprep.subr.bf16.mxu0 %v1772
    %2686 = vmatpush1.bf16.msra.mxu0 %v1771
    %2687 = vmatprep.subr.bf16.mxu0 %v1778
    %2688 = vmatpush1.bf16.msra.mxu0 %v1777
    %2689 = vmatprep.subr.bf16.mxu0 %v1784
    %2690 = vmatpush1.bf16.msra.mxu0 %v1783
    %2691 = vmatprep.subr.bf16.mxu0 %v1790
    %2692 = vmatpush1.bf16.msra.mxu0 %v1789
    %2693 = vmatprep.subr.bf16.mxu0 %v1796
    %2694 = vmatpush1.bf16.msra.mxu0 %v1795
    %2695 = vmatprep.subr.bf16.mxu0 %v1802
    %2696 = vmatpush1.bf16.msra.mxu0 %v1801
    %2697 = vmatprep.subr.bf16.mxu0 %v1808
    %2698 = vmatpush1.bf16.msra.mxu0 %v1807
    %2699 = vmatprep.subr.bf16.mxu0 %v1814
    %2700 = vmatpush1.bf16.msra.mxu0 %v1813
    %2701 = vmatprep.subr.bf16.mxu0 %v1820
    %2702 = vmatpush1.bf16.msra.mxu0 %v1819
    %2703 = vmatprep.subr.bf16.mxu0 %v1826
    %2704 = vmatpush1.bf16.msra.mxu0 %v1825
    %2705 = vmatprep.mubr.bf16.mxu0 %v566
    %2706 = vmatmul.mubr.bf16.gmra.mrb[0].mxu0 %v565
    %v2707 = vpop.f32.mrb[0].mxu0
    %v2708 = vadd.f32 %v522, %v2707
    %v2709 = vpop.f32.mrb[0].mxu0
    %v2710 = vadd.f32 %v526, %v2709
    %v2711 = vpop.f32.mrb[0].mxu0
    %v2712 = vadd.f32 %v522, %v2711
    %v2713 = vpop.f32.mrb[0].mxu0
    %v2714 = vadd.f32 %v526, %v2713
    %2715 = vdwg.mxu0
    %2716 = vmatprep.subr.bf16.mxu0 %v1832
    %2717 = vmatpush1.bf16.msra.mxu0 %v1831
    %2718 = vmatprep.subr.bf16.mxu0 %v1838
    %2719 = vmatpush1.bf16.msra.mxu0 %v1837
    %2720 = vmatprep.subr.bf16.mxu0 %v1844
    %2721 = vmatpush1.bf16.msra.mxu0 %v1843
    %2722 = vmatprep.subr.bf16.mxu0 %v1850
    %2723 = vmatpush1.bf16.msra.mxu0 %v1849
    %2724 = vmatprep.subr.bf16.mxu0 %v1856
    %2725 = vmatpush1.bf16.msra.mxu0 %v1855
    %2726 = vmatprep.subr.bf16.mxu0 %v1862
    %2727 = vmatpush1.bf16.msra.mxu0 %v1861
    %2728 = vmatprep.subr.bf16.mxu0 %v1868
    %2729 = vmatpush1.bf16.msra.mxu0 %v1867
    %2730 = vmatprep.subr.bf16.mxu0 %v1874
    %2731 = vmatpush1.bf16.msra.mxu0 %v1873
    %2732 = vmatprep.subr.bf16.mxu0 %v1880
    %2733 = vmatpush1.bf16.msra.mxu0 %v1879
    %2734 = vmatprep.subr.bf16.mxu0 %v1886
    %2735 = vmatpush1.bf16.msra.mxu0 %v1885
    %2736 = vmatprep.subr.bf16.mxu0 %v1892
    %2737 = vmatpush1.bf16.msra.mxu0 %v1891
    %2738 = vmatprep.subr.bf16.mxu0 %v1898
    %2739 = vmatpush1.bf16.msra.mxu0 %v1897
    %2740 = vmatprep.subr.bf16.mxu0 %v1904
    %2741 = vmatpush1.bf16.msra.mxu0 %v1903
    %2742 = vmatprep.subr.bf16.mxu0 %v1910
    %2743 = vmatpush1.bf16.msra.mxu0 %v1909
    %2744 = vmatprep.subr.bf16.mxu0 %v1916
    %2745 = vmatpush1.bf16.msra.mxu0 %v1915
    %2746 = vmatprep.subr.bf16.mxu0 %v1922
    %2747 = vmatpush1.bf16.msra.mxu0 %v1921
    %2748 = vmatprep.mubr.bf16.mxu0 %v568
    %2749 = vmatmul.mubr.bf16.gmra.mrb[0].mxu0 %v567
    %v2750 = vpop.f32.mrb[0].mxu0
    %v2751 = vadd.f32 %v2708, %v2750
    %v2752 = vpop.f32.mrb[0].mxu0
    %v2753 = vadd.f32 %v2710, %v2752
    %v2754 = vpop.f32.mrb[0].mxu0
    %v2755 = vadd.f32 %v2712, %v2754
    %v2756 = vpop.f32.mrb[0].mxu0
    %v2757 = vadd.f32 %v2714, %v2756
    %2758 = vdwg.mxu0
    %2759 = vmatprep.subr.bf16.mxu0 %v1928
    %2760 = vmatpush1.bf16.msra.mxu0 %v1927
    %2761 = vmatprep.subr.bf16.mxu0 %v1934
    %2762 = vmatpush1.bf16.msra.mxu0 %v1933
    %2763 = vmatprep.subr.bf16.mxu0 %v1940
    %2764 = vmatpush1.bf16.msra.mxu0 %v1939
    %2765 = vmatprep.subr.bf16.mxu0 %v1946
    %2766 = vmatpush1.bf16.msra.mxu0 %v1945
    %2767 = vmatprep.subr.bf16.mxu0 %v1952
    %2768 = vmatpush1.bf16.msra.mxu0 %v1951
    %2769 = vmatprep.subr.bf16.mxu0 %v1958
    %2770 = vmatpush1.bf16.msra.mxu0 %v1957
    %2771 = vmatprep.subr.bf16.mxu0 %v1964
    %2772 = vmatpush1.bf16.msra.mxu0 %v1963
    %2773 = vmatprep.subr.bf16.mxu0 %v1970
    %2774 = vmatpush1.bf16.msra.mxu0 %v1969
    %2775 = vmatprep.subr.bf16.mxu0 %v1976
    %2776 = vmatpush1.bf16.msra.mxu0 %v1975
    %2777 = vmatprep.subr.bf16.mxu0 %v1982
    %2778 = vmatpush1.bf16.msra.mxu0 %v1981
    %2779 = vmatprep.subr.bf16.mxu0 %v1988
    %2780 = vmatpush1.bf16.msra.mxu0 %v1987
    %2781 = vmatprep.subr.bf16.mxu0 %v1994
    %2782 = vmatpush1.bf16.msra.mxu0 %v1993
    %2783 = vmatprep.subr.bf16.mxu0 %v2000
    %2784 = vmatpush1.bf16.msra.mxu0 %v1999
    %2785 = vmatprep.subr.bf16.mxu0 %v2006
    %2786 = vmatpush1.bf16.msra.mxu0 %v2005
    %2787 = vmatprep.subr.bf16.mxu0 %v2012
    %2788 = vmatpush1.bf16.msra.mxu0 %v2011
    %2789 = vmatprep.subr.bf16.mxu0 %v2018
    %2790 = vmatpush1.bf16.msra.mxu0 %v2017
    %2791 = vmatprep.mubr.bf16.mxu0 %v570
    %2792 = vmatmul.mubr.bf16.gmra.mrb[0].mxu0 %v569
    %v2793 = vpop.f32.mrb[0].mxu0
    %v2794 = vadd.f32 %v2751, %v2793
    %v2795 = vpop.f32.mrb[0].mxu0
    %v2796 = vadd.f32 %v2753, %v2795
    %v2797 = vpop.f32.mrb[0].mxu0
    %v2798 = vadd.f32 %v2755, %v2797
    %v2799 = vpop.f32.mrb[0].mxu0
    %v2800 = vadd.f32 %v2757, %v2799
    %2801 = vdwg.mxu0
    %2802 = vmatprep.subr.bf16.mxu0 %v2024
    %2803 = vmatpush1.bf16.msra.mxu0 %v2023
    %2804 = vmatprep.subr.bf16.mxu0 %v2030
    %2805 = vmatpush1.bf16.msra.mxu0 %v2029
    %2806 = vmatprep.subr.bf16.mxu0 %v2036
    %2807 = vmatpush1.bf16.msra.mxu0 %v2035
    %2808 = vmatprep.subr.bf16.mxu0 %v2042
    %2809 = vmatpush1.bf16.msra.mxu0 %v2041
    %2810 = vmatprep.subr.bf16.mxu0 %v2048
    %2811 = vmatpush1.bf16.msra.mxu0 %v2047
    %2812 = vmatprep.subr.bf16.mxu0 %v2054
    %2813 = vmatpush1.bf16.msra.mxu0 %v2053
    %2814 = vmatprep.subr.bf16.mxu0 %v2060
    %2815 = vmatpush1.bf16.msra.mxu0 %v2059
    %2816 = vmatprep.subr.bf16.mxu0 %v2066
    %2817 = vmatpush1.bf16.msra.mxu0 %v2065
    %2818 = vmatprep.subr.bf16.mxu0 %v2072
    %2819 = vmatpush1.bf16.msra.mxu0 %v2071
    %2820 = vmatprep.subr.bf16.mxu0 %v2078
    %2821 = vmatpush1.bf16.msra.mxu0 %v2077
    %2822 = vmatprep.subr.bf16.mxu0 %v2084
    %2823 = vmatpush1.bf16.msra.mxu0 %v2083
    %2824 = vmatprep.subr.bf16.mxu0 %v2090
    %2825 = vmatpush1.bf16.msra.mxu0 %v2089
    %2826 = vmatprep.subr.bf16.mxu0 %v2096
    %2827 = vmatpush1.bf16.msra.mxu0 %v2095
    %2828 = vmatprep.subr.bf16.mxu0 %v2102
    %2829 = vmatpush1.bf16.msra.mxu0 %v2101
    %2830 = vmatprep.subr.bf16.mxu0 %v2108
    %2831 = vmatpush1.bf16.msra.mxu0 %v2107
    %2832 = vmatprep.subr.bf16.mxu0 %v2114
    %2833 = vmatpush1.bf16.msra.mxu0 %v2113
    %2834 = vmatprep.mubr.bf16.mxu0 %v572
    %2835 = vmatmul.mubr.bf16.gmra.mrb[0].mxu0 %v571
    %v2836 = vpop.f32.mrb[0].mxu0
    %v2837 = vadd.f32 %v2794, %v2836
    %v2838 = vpop.f32.mrb[0].mxu0
    %v2839 = vadd.f32 %v2796, %v2838
    %v2840 = vpop.f32.mrb[0].mxu0
    %v2841 = vadd.f32 %v2798, %v2840
    %v2842 = vpop.f32.mrb[0].mxu0
    %v2843 = vadd.f32 %v2800, %v2842
    %2844 = vdwg.mxu0
    %2845 = vmatprep.subr.bf16.mxu0 %v1738
    %2846 = vmatpush1.bf16.msra.mxu0 %v1737
    %2847 = vmatprep.subr.bf16.mxu0 %v1744
    %2848 = vmatpush1.bf16.msra.mxu0 %v1743
    %2849 = vmatprep.subr.bf16.mxu0 %v1750
    %2850 = vmatpush1.bf16.msra.mxu0 %v1749
    %2851 = vmatprep.subr.bf16.mxu0 %v1756
    %2852 = vmatpush1.bf16.msra.mxu0 %v1755
    %2853 = vmatprep.subr.bf16.mxu0 %v1762
    %2854 = vmatpush1.bf16.msra.mxu0 %v1761
    %2855 = vmatprep.subr.bf16.mxu0 %v1768
    %2856 = vmatpush1.bf16.msra.mxu0 %v1767
    %2857 = vmatprep.subr.bf16.mxu0 %v1774
    %2858 = vmatpush1.bf16.msra.mxu0 %v1773
    %2859 = vmatprep.subr.bf16.mxu0 %v1780
    %2860 = vmatpush1.bf16.msra.mxu0 %v1779
    %2861 = vmatprep.subr.bf16.mxu0 %v1786
    %2862 = vmatpush1.bf16.msra.mxu0 %v1785
    %2863 = vmatprep.subr.bf16.mxu0 %v1792
    %2864 = vmatpush1.bf16.msra.mxu0 %v1791
    %2865 = vmatprep.subr.bf16.mxu0 %v1798
    %2866 = vmatpush1.bf16.msra.mxu0 %v1797
    %2867 = vmatprep.subr.bf16.mxu0 %v1804
    %2868 = vmatpush1.bf16.msra.mxu0 %v1803
    %2869 = vmatprep.subr.bf16.mxu0 %v1810
    %2870 = vmatpush1.bf16.msra.mxu0 %v1809
    %2871 = vmatprep.subr.bf16.mxu0 %v1816
    %2872 = vmatpush1.bf16.msra.mxu0 %v1815
    %2873 = vmatprep.subr.bf16.mxu0 %v1822
    %2874 = vmatpush1.bf16.msra.mxu0 %v1821
    %2875 = vmatprep.subr.bf16.mxu0 %v1828
    %2876 = vmatpush1.bf16.msra.mxu0 %v1827
    %2877 = vmatprep.mubr.bf16.mxu0 %v566
    %2878 = vmatmul.mubr.bf16.gmra.mrb[0].mxu0 %v565
    %v2879 = vpop.f32.mrb[0].mxu0
    %v2880 = vadd.f32 %v530, %v2879
    %v2881 = vpop.f32.mrb[0].mxu0
    %v2882 = vadd.f32 %v534, %v2881
    %v2883 = vpop.f32.mrb[0].mxu0
    %v2884 = vadd.f32 %v530, %v2883
    %v2885 = vpop.f32.mrb[0].mxu0
    %v2886 = vadd.f32 %v534, %v2885
    %2887 = vdwg.mxu0
    %2888 = vmatprep.subr.bf16.mxu0 %v1834
    %2889 = vmatpush1.bf16.msra.mxu0 %v1833
    %2890 = vmatprep.subr.bf16.mxu0 %v1840
    %2891 = vmatpush1.bf16.msra.mxu0 %v1839
    %2892 = vmatprep.subr.bf16.mxu0 %v1846
    %2893 = vmatpush1.bf16.msra.mxu0 %v1845
    %2894 = vmatprep.subr.bf16.mxu0 %v1852
    %2895 = vmatpush1.bf16.msra.mxu0 %v1851
    %2896 = vmatprep.subr.bf16.mxu0 %v1858
    %2897 = vmatpush1.bf16.msra.mxu0 %v1857
    %2898 = vmatprep.subr.bf16.mxu0 %v1864
    %2899 = vmatpush1.bf16.msra.mxu0 %v1863
    %2900 = vmatprep.subr.bf16.mxu0 %v1870
    %2901 = vmatpush1.bf16.msra.mxu0 %v1869
    %2902 = vmatprep.subr.bf16.mxu0 %v1876
    %2903 = vmatpush1.bf16.msra.mxu0 %v1875
    %2904 = vmatprep.subr.bf16.mxu0 %v1882
    %2905 = vmatpush1.bf16.msra.mxu0 %v1881
    %2906 = vmatprep.subr.bf16.mxu0 %v1888
    %2907 = vmatpush1.bf16.msra.mxu0 %v1887
    %2908 = vmatprep.subr.bf16.mxu0 %v1894
    %2909 = vmatpush1.bf16.msra.mxu0 %v1893
    %2910 = vmatprep.subr.bf16.mxu0 %v1900
    %2911 = vmatpush1.bf16.msra.mxu0 %v1899
    %2912 = vmatprep.subr.bf16.mxu0 %v1906
    %2913 = vmatpush1.bf16.msra.mxu0 %v1905
    %2914 = vmatprep.subr.bf16.mxu0 %v1912
    %2915 = vmatpush1.bf16.msra.mxu0 %v1911
    %2916 = vmatprep.subr.bf16.mxu0 %v1918
    %2917 = vmatpush1.bf16.msra.mxu0 %v1917
    %2918 = vmatprep.subr.bf16.mxu0 %v1924
    %2919 = vmatpush1.bf16.msra.mxu0 %v1923
    %2920 = vmatprep.mubr.bf16.mxu0 %v568
    %2921 = vmatmul.mubr.bf16.gmra.mrb[0].mxu0 %v567
    %v2922 = vpop.f32.mrb[0].mxu0
    %v2923 = vadd.f32 %v2880, %v2922
    %v2924 = vpop.f32.mrb[0].mxu0
    %v2925 = vadd.f32 %v2882, %v2924
    %v2926 = vpop.f32.mrb[0].mxu0
    %v2927 = vadd.f32 %v2884, %v2926
    %v2928 = vpop.f32.mrb[0].mxu0
    %v2929 = vadd.f32 %v2886, %v2928
    %2930 = vdwg.mxu0
    %2931 = vmatprep.subr.bf16.mxu0 %v1930
    %2932 = vmatpush1.bf16.msra.mxu0 %v1929
    %2933 = vmatprep.subr.bf16.mxu0 %v1936
    %2934 = vmatpush1.bf16.msra.mxu0 %v1935
    %2935 = vmatprep.subr.bf16.mxu0 %v1942
    %2936 = vmatpush1.bf16.msra.mxu0 %v1941
    %2937 = vmatprep.subr.bf16.mxu0 %v1948
    %2938 = vmatpush1.bf16.msra.mxu0 %v1947
    %2939 = vmatprep.subr.bf16.mxu0 %v1954
    %2940 = vmatpush1.bf16.msra.mxu0 %v1953
    %2941 = vmatprep.subr.bf16.mxu0 %v1960
    %2942 = vmatpush1.bf16.msra.mxu0 %v1959
    %2943 = vmatprep.subr.bf16.mxu0 %v1966
    %2944 = vmatpush1.bf16.msra.mxu0 %v1965
    %2945 = vmatprep.subr.bf16.mxu0 %v1972
    %2946 = vmatpush1.bf16.msra.mxu0 %v1971
    %2947 = vmatprep.subr.bf16.mxu0 %v1978
    %2948 = vmatpush1.bf16.msra.mxu0 %v1977
    %2949 = vmatprep.subr.bf16.mxu0 %v1984
    %2950 = vmatpush1.bf16.msra.mxu0 %v1983
    %2951 = vmatprep.subr.bf16.mxu0 %v1990
    %2952 = vmatpush1.bf16.msra.mxu0 %v1989
    %2953 = vmatprep.subr.bf16.mxu0 %v1996
    %2954 = vmatpush1.bf16.msra.mxu0 %v1995
    %2955 = vmatprep.subr.bf16.mxu0 %v2002
    %2956 = vmatpush1.bf16.msra.mxu0 %v2001
    %2957 = vmatprep.subr.bf16.mxu0 %v2008
    %2958 = vmatpush1.bf16.msra.mxu0 %v2007
    %2959 = vmatprep.subr.bf16.mxu0 %v2014
    %2960 = vmatpush1.bf16.msra.mxu0 %v2013
    %2961 = vmatprep.subr.bf16.mxu0 %v2020
    %2962 = vmatpush1.bf16.msra.mxu0 %v2019
    %2963 = vmatprep.mubr.bf16.mxu0 %v570
    %2964 = vmatmul.mubr.bf16.gmra.mrb[0].mxu0 %v569
    %v2965 = vpop.f32.mrb[0].mxu0
    %v2966 = vadd.f32 %v2923, %v2965
    %v2967 = vpop.f32.mrb[0].mxu0
    %v2968 = vadd.f32 %v2925, %v2967
    %v2969 = vpop.f32.mrb[0].mxu0
    %v2970 = vadd.f32 %v2927, %v2969
    %v2971 = vpop.f32.mrb[0].mxu0
    %v2972 = vadd.f32 %v2929, %v2971
    %2973 = vdwg.mxu0
    %2974 = vmatprep.subr.bf16.mxu0 %v2026
    %2975 = vmatpush1.bf16.msra.mxu0 %v2025
    %2976 = vmatprep.subr.bf16.mxu0 %v2032
    %2977 = vmatpush1.bf16.msra.mxu0 %v2031
    %2978 = vmatprep.subr.bf16.mxu0 %v2038
    %2979 = vmatpush1.bf16.msra.mxu0 %v2037
    %2980 = vmatprep.subr.bf16.mxu0 %v2044
    %2981 = vmatpush1.bf16.msra.mxu0 %v2043
    %2982 = vmatprep.subr.bf16.mxu0 %v2050
    %2983 = vmatpush1.bf16.msra.mxu0 %v2049
    %2984 = vmatprep.subr.bf16.mxu0 %v2056
    %2985 = vmatpush1.bf16.msra.mxu0 %v2055
    %2986 = vmatprep.subr.bf16.mxu0 %v2062
    %2987 = vmatpush1.bf16.msra.mxu0 %v2061
    %2988 = vmatprep.subr.bf16.mxu0 %v2068
    %2989 = vmatpush1.bf16.msra.mxu0 %v2067
    %2990 = vmatprep.subr.bf16.mxu0 %v2074
    %2991 = vmatpush1.bf16.msra.mxu0 %v2073
    %2992 = vmatprep.subr.bf16.mxu0 %v2080
    %2993 = vmatpush1.bf16.msra.mxu0 %v2079
    %2994 = vmatprep.subr.bf16.mxu0 %v2086
    %2995 = vmatpush1.bf16.msra.mxu0 %v2085
    %2996 = vmatprep.subr.bf16.mxu0 %v2092
    %2997 = vmatpush1.bf16.msra.mxu0 %v2091
    %2998 = vmatprep.subr.bf16.mxu0 %v2098
    %2999 = vmatpush1.bf16.msra.mxu0 %v2097
    %3000 = vmatprep.subr.bf16.mxu0 %v2104
    %3001 = vmatpush1.bf16.msra.mxu0 %v2103
    %3002 = vmatprep.subr.bf16.mxu0 %v2110
    %3003 = vmatpush1.bf16.msra.mxu0 %v2109
    %3004 = vmatprep.subr.bf16.mxu0 %v2116
    %3005 = vmatpush1.bf16.msra.mxu0 %v2115
    %3006 = vmatprep.mubr.bf16.mxu0 %v572
    %3007 = vmatmul.mubr.bf16.gmra.mrb[0].mxu0 %v571
    %v3008 = vpop.f32.mrb[0].mxu0
    %v3009 = vadd.f32 %v2966, %v3008
    %v3010 = vpop.f32.mrb[0].mxu0
    %v3011 = vadd.f32 %v2968, %v3010
    %v3012 = vpop.f32.mrb[0].mxu0
    %v3013 = vadd.f32 %v2970, %v3012
    %v3014 = vpop.f32.mrb[0].mxu0
    %v3015 = vadd.f32 %v2972, %v3014
    %3016 = vdwg.mxu0
    %v3017 = vmax.f32 %v2665, 0.0
    %v3018 = vmax.f32 %v2667, 0.0
    %v3019 = vmax.f32 %v2837, 0.0
    %v3020 = vmax.f32 %v2839, 0.0
    %v3021 = vmax.f32 %v3009, 0.0
    %v3022 = vmax.f32 %v3011, 0.0
    %v3023 = vmax.f32 %v2669, 0.0
    %v3024 = vmax.f32 %v2671, 0.0
    %v3025 = vmax.f32 %v2841, 0.0
    %v3026 = vmax.f32 %v2843, 0.0
    %v3027 = vmax.f32 %v3013, 0.0
    %v3028 = vmax.f32 %v3015, 0.0
    %v3029 = vpack.c.bf16 %v3023, %v3017
    %v3030 = vpack.c.bf16 %v3024, %v3018
    %v3031 = vpack.c.bf16 %v3025, %v3019
    %v3032 = vpack.c.bf16 %v3026, %v3020
    %v3033 = vpack.c.bf16 %v3027, %v3021
    %v3034 = vpack.c.bf16 %v3028, %v3022
    %v3035 = vld [vmem:[#allocation8] sm:$0xff]
    %v3036 = vld [vmem:[#allocation8 + $0x8] sm:$0xf]
    %v3037 = vld [vmem:[#allocation8 + $0xc] sm:$0xff]
    %v3038 = vld [vmem:[#allocation8 + $0x14] sm:$0xf]
    %v3039 = vld [vmem:[#allocation8 + $0x18] sm:$0xff]
    %v3040 = vld [vmem:[#allocation8 + $0x20] sm:$0xf]
    %v3041 = vld [vmem:[#allocation8 + $0x24] sm:$0xff]
    %v3042 = vld [vmem:[#allocation8 + $0x2c] sm:$0xf]
    %v3043 = vld [vmem:[#allocation8 + $0x30] sm:$0xff]
    %v3044 = vld [vmem:[#allocation8 + $0x38] sm:$0xf]
    %v3045 = vld [vmem:[#allocation8 + $0x3c] sm:$0xff]
    %v3046 = vld [vmem:[#allocation8 + $0x44] sm:$0xf]
    %v3047 = vld [vmem:[#allocation8 + $0x48] sm:$0xff]
    %v3048 = vld [vmem:[#allocation8 + $0x50] sm:$0xf]
    %v3049 = vld [vmem:[#allocation8 + $0x54] sm:$0xff]
    %v3050 = vld [vmem:[#allocation8 + $0x5c] sm:$0xf]
    %v3051 = vld [vmem:[#allocation8 + $0x60] sm:$0xff]
    %v3052 = vld [vmem:[#allocation8 + $0x68] sm:$0xf]
    %v3053 = vld [vmem:[#allocation8 + $0x6c] sm:$0xff]
    %v3054 = vld [vmem:[#allocation8 + $0x74] sm:$0xf]
    %v3055 = vld [vmem:[#allocation8 + $0x78] sm:$0xff]
    %v3056 = vld [vmem:[#allocation8 + $0x80] sm:$0xf]
    %v3057 = vld [vmem:[#allocation8 + $0x84] sm:$0xff]
    %v3058 = vld [vmem:[#allocation8 + $0x8c] sm:$0xf]
    %v3059 = vld [vmem:[#allocation8 + $0x90] sm:$0xff]
    %v3060 = vld [vmem:[#allocation8 + $0x98] sm:$0xf]
    %v3061 = vld [vmem:[#allocation8 + $0x9c] sm:$0xff]
    %v3062 = vld [vmem:[#allocation8 + $0xa4] sm:$0xf]
    %v3063 = vld [vmem:[#allocation8 + $0xa8] sm:$0xff]
    %v3064 = vld [vmem:[#allocation8 + $0xb0] sm:$0xf]
    %v3065 = vld [vmem:[#allocation8 + $0xb4] sm:$0xff]
    %v3066 = vld [vmem:[#allocation8 + $0xbc] sm:$0xf]
    %v3067 = vld [vmem:[#allocation8 + $0xc0] sm:$0xff]
    %v3068 = vld [vmem:[#allocation8 + $0xc8] sm:$0xf]
    %v3069 = vld [vmem:[#allocation8 + $0xcc] sm:$0xff]
    %v3070 = vld [vmem:[#allocation8 + $0xd4] sm:$0xf]
    %v3071 = vld [vmem:[#allocation8 + $0xd8] sm:$0xff]
    %v3072 = vld [vmem:[#allocation8 + $0xe0] sm:$0xf]
    %v3073 = vld [vmem:[#allocation8 + $0xe4] sm:$0xff]
    %v3074 = vld [vmem:[#allocation8 + $0xec] sm:$0xf]
    %v3075 = vld [vmem:[#allocation8 + $0xf0] sm:$0xff]
    %v3076 = vld [vmem:[#allocation8 + $0xf8] sm:$0xf]
    %v3077 = vld [vmem:[#allocation8 + $0xfc] sm:$0xff]
    %v3078 = vld [vmem:[#allocation8 + $0x104] sm:$0xf]
    %v3079 = vld [vmem:[#allocation8 + $0x108] sm:$0xff]
    %v3080 = vld [vmem:[#allocation8 + $0x110] sm:$0xf]
    %v3081 = vld [vmem:[#allocation8 + $0x114] sm:$0xff]
    %v3082 = vld [vmem:[#allocation8 + $0x11c] sm:$0xf]
    %v3083 = vld [vmem:[#allocation8 + $0x120] sm:$0xff]
    %v3084 = vld [vmem:[#allocation8 + $0x128] sm:$0xf]
    %v3085 = vld [vmem:[#allocation8 + $0x12c] sm:$0xff]
    %v3086 = vld [vmem:[#allocation8 + $0x134] sm:$0xf]
    %v3087 = vld [vmem:[#allocation8 + $0x138] sm:$0xff]
    %v3088 = vld [vmem:[#allocation8 + $0x140] sm:$0xf]
    %v3089 = vld [vmem:[#allocation8 + $0x144] sm:$0xff]
    %v3090 = vld [vmem:[#allocation8 + $0x14c] sm:$0xf]
    %v3091 = vld [vmem:[#allocation8 + $0x150] sm:$0xff]
    %v3092 = vld [vmem:[#allocation8 + $0x158] sm:$0xf]
    %v3093 = vld [vmem:[#allocation8 + $0x15c] sm:$0xff]
    %v3094 = vld [vmem:[#allocation8 + $0x164] sm:$0xf]
    %v3095 = vld [vmem:[#allocation8 + $0x168] sm:$0xff]
    %v3096 = vld [vmem:[#allocation8 + $0x170] sm:$0xf]
    %v3097 = vld [vmem:[#allocation8 + $0x174] sm:$0xff]
    %v3098 = vld [vmem:[#allocation8 + $0x17c] sm:$0xf]
    %v3099 = vld [vmem:[#allocation8 + $0x180] sm:$0xff]
    %v3100 = vld [vmem:[#allocation8 + $0x188] sm:$0xf]
    %v3101 = vld [vmem:[#allocation8 + $0x18c] sm:$0xff]
    %v3102 = vld [vmem:[#allocation8 + $0x194] sm:$0xf]
    %v3103 = vld [vmem:[#allocation8 + $0x198] sm:$0xff]
    %v3104 = vld [vmem:[#allocation8 + $0x1a0] sm:$0xf]
    %v3105 = vld [vmem:[#allocation8 + $0x1a4] sm:$0xff]
    %v3106 = vld [vmem:[#allocation8 + $0x1ac] sm:$0xf]
    %v3107 = vld [vmem:[#allocation8 + $0x1b0] sm:$0xff]
    %v3108 = vld [vmem:[#allocation8 + $0x1b8] sm:$0xf]
    %v3109 = vld [vmem:[#allocation8 + $0x1bc] sm:$0xff]
    %v3110 = vld [vmem:[#allocation8 + $0x1c4] sm:$0xf]
    %v3111 = vld [vmem:[#allocation8 + $0x1c8] sm:$0xff]
    %v3112 = vld [vmem:[#allocation8 + $0x1d0] sm:$0xf]
    %v3113 = vld [vmem:[#allocation8 + $0x1d4] sm:$0xff]
    %v3114 = vld [vmem:[#allocation8 + $0x1dc] sm:$0xf]
    %v3115 = vld [vmem:[#allocation8 + $0x1e0] sm:$0xff]
    %v3116 = vld [vmem:[#allocation8 + $0x1e8] sm:$0xf]
    %v3117 = vld [vmem:[#allocation8 + $0x1ec] sm:$0xff]
    %v3118 = vld [vmem:[#allocation8 + $0x1f4] sm:$0xf]
    %v3119 = vld [vmem:[#allocation8 + $0x1f8] sm:$0xff]
    %v3120 = vld [vmem:[#allocation8 + $0x200] sm:$0xf]
    %v3121 = vld [vmem:[#allocation8 + $0x204] sm:$0xff]
    %v3122 = vld [vmem:[#allocation8 + $0x20c] sm:$0xf]
    %v3123 = vld [vmem:[#allocation8 + $0x210] sm:$0xff]
    %v3124 = vld [vmem:[#allocation8 + $0x218] sm:$0xf]
    %v3125 = vld [vmem:[#allocation8 + $0x21c] sm:$0xff]
    %v3126 = vld [vmem:[#allocation8 + $0x224] sm:$0xf]
    %v3127 = vld [vmem:[#allocation8 + $0x228] sm:$0xff]
    %v3128 = vld [vmem:[#allocation8 + $0x230] sm:$0xf]
    %v3129 = vld [vmem:[#allocation8 + $0x234] sm:$0xff]
    %v3130 = vld [vmem:[#allocation8 + $0x23c] sm:$0xf]
    %v3131 = vld [vmem:[#allocation8 + $0x240] sm:$0xff]
    %v3132 = vld [vmem:[#allocation8 + $0x248] sm:$0xf]
    %v3133 = vld [vmem:[#allocation8 + $0x24c] sm:$0xff]
    %v3134 = vld [vmem:[#allocation8 + $0x254] sm:$0xf]
    %v3135 = vld [vmem:[#allocation8 + $0x258] sm:$0xff]
    %v3136 = vld [vmem:[#allocation8 + $0x260] sm:$0xf]
    %v3137 = vld [vmem:[#allocation8 + $0x264] sm:$0xff]
    %v3138 = vld [vmem:[#allocation8 + $0x26c] sm:$0xf]
    %v3139 = vld [vmem:[#allocation8 + $0x270] sm:$0xff]
    %v3140 = vld [vmem:[#allocation8 + $0x278] sm:$0xf]
    %v3141 = vld [vmem:[#allocation8 + $0x27c] sm:$0xff]
    %v3142 = vld [vmem:[#allocation8 + $0x284] sm:$0xf]
    %v3143 = vld [vmem:[#allocation8 + $0x288] sm:$0xff]
    %v3144 = vld [vmem:[#allocation8 + $0x290] sm:$0xf]
    %v3145 = vld [vmem:[#allocation8 + $0x294] sm:$0xff]
    %v3146 = vld [vmem:[#allocation8 + $0x29c] sm:$0xf]
    %v3147 = vld [vmem:[#allocation8 + $0x2a0] sm:$0xff]
    %v3148 = vld [vmem:[#allocation8 + $0x2a8] sm:$0xf]
    %v3149 = vld [vmem:[#allocation8 + $0x2ac] sm:$0xff]
    %v3150 = vld [vmem:[#allocation8 + $0x2b4] sm:$0xf]
    %v3151 = vld [vmem:[#allocation8 + $0x2b8] sm:$0xff]
    %v3152 = vld [vmem:[#allocation8 + $0x2c0] sm:$0xf]
    %v3153 = vld [vmem:[#allocation8 + $0x2c4] sm:$0xff]
    %v3154 = vld [vmem:[#allocation8 + $0x2cc] sm:$0xf]
    %v3155 = vld [vmem:[#allocation8 + $0x2d0] sm:$0xff]
    %v3156 = vld [vmem:[#allocation8 + $0x2d8] sm:$0xf]
    %v3157 = vld [vmem:[#allocation8 + $0x2dc] sm:$0xff]
    %v3158 = vld [vmem:[#allocation8 + $0x2e4] sm:$0xf]
    %v3159 = vld [vmem:[#allocation8 + $0x2e8] sm:$0xff]
    %v3160 = vld [vmem:[#allocation8 + $0x2f0] sm:$0xf]
    %v3161 = vld [vmem:[#allocation8 + $0x2f4] sm:$0xff]
    %v3162 = vld [vmem:[#allocation8 + $0x2fc] sm:$0xf]
    %v3163 = vld [vmem:[#allocation8 + $0x300] sm:$0xff]
    %v3164 = vld [vmem:[#allocation8 + $0x308] sm:$0xf]
    %v3165 = vld [vmem:[#allocation8 + $0x30c] sm:$0xff]
    %v3166 = vld [vmem:[#allocation8 + $0x314] sm:$0xf]
    %v3167 = vld [vmem:[#allocation8 + $0x318] sm:$0xff]
    %v3168 = vld [vmem:[#allocation8 + $0x320] sm:$0xf]
    %v3169 = vld [vmem:[#allocation8 + $0x324] sm:$0xff]
    %v3170 = vld [vmem:[#allocation8 + $0x32c] sm:$0xf]
    %v3171 = vld [vmem:[#allocation8 + $0x330] sm:$0xff]
    %v3172 = vld [vmem:[#allocation8 + $0x338] sm:$0xf]
    %v3173 = vld [vmem:[#allocation8 + $0x33c] sm:$0xff]
    %v3174 = vld [vmem:[#allocation8 + $0x344] sm:$0xf]
    %v3175 = vld [vmem:[#allocation8 + $0x348] sm:$0xff]
    %v3176 = vld [vmem:[#allocation8 + $0x350] sm:$0xf]
    %v3177 = vld [vmem:[#allocation8 + $0x354] sm:$0xff]
    %v3178 = vld [vmem:[#allocation8 + $0x35c] sm:$0xf]
    %v3179 = vld [vmem:[#allocation8 + $0x360] sm:$0xff]
    %v3180 = vld [vmem:[#allocation8 + $0x368] sm:$0xf]
    %v3181 = vld [vmem:[#allocation8 + $0x36c] sm:$0xff]
    %v3182 = vld [vmem:[#allocation8 + $0x374] sm:$0xf]
    %v3183 = vld [vmem:[#allocation8 + $0x378] sm:$0xff]
    %v3184 = vld [vmem:[#allocation8 + $0x380] sm:$0xf]
    %v3185 = vld [vmem:[#allocation8 + $0x384] sm:$0xff]
    %v3186 = vld [vmem:[#allocation8 + $0x38c] sm:$0xf]
    %v3187 = vld [vmem:[#allocation8 + $0x390] sm:$0xff]
    %v3188 = vld [vmem:[#allocation8 + $0x398] sm:$0xf]
    %v3189 = vld [vmem:[#allocation8 + $0x39c] sm:$0xff]
    %v3190 = vld [vmem:[#allocation8 + $0x3a4] sm:$0xf]
    %v3191 = vld [vmem:[#allocation8 + $0x3a8] sm:$0xff]
    %v3192 = vld [vmem:[#allocation8 + $0x3b0] sm:$0xf]
    %v3193 = vld [vmem:[#allocation8 + $0x3b4] sm:$0xff]
    %v3194 = vld [vmem:[#allocation8 + $0x3bc] sm:$0xf]
    %v3195 = vld [vmem:[#allocation8 + $0x3c0] sm:$0xff]
    %v3196 = vld [vmem:[#allocation8 + $0x3c8] sm:$0xf]
    %v3197 = vld [vmem:[#allocation8 + $0x3cc] sm:$0xff]
    %v3198 = vld [vmem:[#allocation8 + $0x3d4] sm:$0xf]
    %v3199 = vld [vmem:[#allocation8 + $0x3d8] sm:$0xff]
    %v3200 = vld [vmem:[#allocation8 + $0x3e0] sm:$0xf]
    %v3201 = vld [vmem:[#allocation8 + $0x3e4] sm:$0xff]
    %v3202 = vld [vmem:[#allocation8 + $0x3ec] sm:$0xf]
    %v3203 = vld [vmem:[#allocation8 + $0x3f0] sm:$0xff]
    %v3204 = vld [vmem:[#allocation8 + $0x3f8] sm:$0xf]
    %v3205 = vld [vmem:[#allocation8 + $0x3fc] sm:$0xff]
    %v3206 = vld [vmem:[#allocation8 + $0x404] sm:$0xf]
    %v3207 = vld [vmem:[#allocation8 + $0x408] sm:$0xff]
    %v3208 = vld [vmem:[#allocation8 + $0x410] sm:$0xf]
    %v3209 = vld [vmem:[#allocation8 + $0x414] sm:$0xff]
    %v3210 = vld [vmem:[#allocation8 + $0x41c] sm:$0xf]
    %v3211 = vld [vmem:[#allocation8 + $0x420] sm:$0xff]
    %v3212 = vld [vmem:[#allocation8 + $0x428] sm:$0xf]
    %v3213 = vld [vmem:[#allocation8 + $0x42c] sm:$0xff]
    %v3214 = vld [vmem:[#allocation8 + $0x434] sm:$0xf]
    %v3215 = vld [vmem:[#allocation8 + $0x438] sm:$0xff]
    %v3216 = vld [vmem:[#allocation8 + $0x440] sm:$0xf]
    %v3217 = vld [vmem:[#allocation8 + $0x444] sm:$0xff]
    %v3218 = vld [vmem:[#allocation8 + $0x44c] sm:$0xf]
    %v3219 = vld [vmem:[#allocation8 + $0x450] sm:$0xff]
    %v3220 = vld [vmem:[#allocation8 + $0x458] sm:$0xf]
    %v3221 = vld [vmem:[#allocation8 + $0x45c] sm:$0xff]
    %v3222 = vld [vmem:[#allocation8 + $0x464] sm:$0xf]
    %v3223 = vld [vmem:[#allocation8 + $0x468] sm:$0xff]
    %v3224 = vld [vmem:[#allocation8 + $0x470] sm:$0xf]
    %v3225 = vld [vmem:[#allocation8 + $0x474] sm:$0xff]
    %v3226 = vld [vmem:[#allocation8 + $0x47c] sm:$0xf]
    %v3227 = vld [vmem:[#allocation10] sm:$0x7]
    %v3229 = vlaneseq
    %v3230 = vshrl.u32 %v3229, 7
    %v3231 = vsub.s32 0, %v3230
    %v3232 = vrot.slane %v3227, %v3231
    %v3233 = vlaneseq
    %v3234 = vshrl.u32 %v3233, 7
    %v3235 = vsub.s32 1, %v3234
    %v3236 = vrot.slane %v3227, %v3235
    %v3237 = vlaneseq
    %v3238 = vshrl.u32 %v3237, 7
    %v3239 = vsub.s32 2, %v3238
    %v3240 = vrot.slane %v3227, %v3239
    %v3436 = vunpack.c.l.b16 %v3035
    %v3437 = vunpack.c.h.b16 %v3035
    %v3438 = vunpack.c.l.b16 %v3036
    %v3439 = vunpack.c.l.b16 %v3037
    %v3440 = vunpack.c.h.b16 %v3037
    %v3441 = vunpack.c.l.b16 %v3038
    %v3442 = vunpack.c.l.b16 %v3039
    %v3443 = vunpack.c.h.b16 %v3039
    %v3444 = vunpack.c.l.b16 %v3040
    %v3445 = vunpack.c.l.b16 %v3041
    %v3446 = vunpack.c.h.b16 %v3041
    %v3447 = vunpack.c.l.b16 %v3042
    %v3448 = vunpack.c.l.b16 %v3043
    %v3449 = vunpack.c.h.b16 %v3043
    %v3450 = vunpack.c.l.b16 %v3044
    %v3451 = vunpack.c.l.b16 %v3045
    %v3452 = vunpack.c.h.b16 %v3045
    %v3453 = vunpack.c.l.b16 %v3046
    %v3454 = vunpack.c.l.b16 %v3047
    %v3455 = vunpack.c.h.b16 %v3047
    %v3456 = vunpack.c.l.b16 %v3048
    %v3457 = vunpack.c.l.b16 %v3049
    %v3458 = vunpack.c.h.b16 %v3049
    %v3459 = vunpack.c.l.b16 %v3050
    %v3460 = vunpack.c.l.b16 %v3051
    %v3461 = vunpack.c.h.b16 %v3051
    %v3462 = vunpack.c.l.b16 %v3052
    %v3463 = vunpack.c.l.b16 %v3053
    %v3464 = vunpack.c.h.b16 %v3053
    %v3465 = vunpack.c.l.b16 %v3054
    %v3466 = vunpack.c.l.b16 %v3055
    %v3467 = vunpack.c.h.b16 %v3055
    %v3468 = vunpack.c.l.b16 %v3056
    %v3469 = vunpack.c.l.b16 %v3057
    %v3470 = vunpack.c.h.b16 %v3057
    %v3471 = vunpack.c.l.b16 %v3058
    %v3472 = vunpack.c.l.b16 %v3059
    %v3473 = vunpack.c.h.b16 %v3059
    %v3474 = vunpack.c.l.b16 %v3060
    %v3475 = vunpack.c.l.b16 %v3061
    %v3476 = vunpack.c.h.b16 %v3061
    %v3477 = vunpack.c.l.b16 %v3062
    %v3478 = vunpack.c.l.b16 %v3063
    %v3479 = vunpack.c.h.b16 %v3063
    %v3480 = vunpack.c.l.b16 %v3064
    %v3481 = vunpack.c.l.b16 %v3065
    %v3482 = vunpack.c.h.b16 %v3065
    %v3483 = vunpack.c.l.b16 %v3066
    %v3484 = vunpack.c.l.b16 %v3067
    %v3485 = vunpack.c.h.b16 %v3067
    %v3486 = vunpack.c.l.b16 %v3068
    %v3487 = vunpack.c.l.b16 %v3069
    %v3488 = vunpack.c.h.b16 %v3069
    %v3489 = vunpack.c.l.b16 %v3070
    %v3490 = vunpack.c.l.b16 %v3071
    %v3491 = vunpack.c.h.b16 %v3071
    %v3492 = vunpack.c.l.b16 %v3072
    %v3493 = vunpack.c.l.b16 %v3073
    %v3494 = vunpack.c.h.b16 %v3073
    %v3495 = vunpack.c.l.b16 %v3074
    %v3496 = vunpack.c.l.b16 %v3075
    %v3497 = vunpack.c.h.b16 %v3075
    %v3498 = vunpack.c.l.b16 %v3076
    %v3499 = vunpack.c.l.b16 %v3077
    %v3500 = vunpack.c.h.b16 %v3077
    %v3501 = vunpack.c.l.b16 %v3078
    %v3502 = vunpack.c.l.b16 %v3079
    %v3503 = vunpack.c.h.b16 %v3079
    %v3504 = vunpack.c.l.b16 %v3080
    %v3505 = vunpack.c.l.b16 %v3081
    %v3506 = vunpack.c.h.b16 %v3081
    %v3507 = vunpack.c.l.b16 %v3082
    %v3508 = vunpack.c.l.b16 %v3083
    %v3509 = vunpack.c.h.b16 %v3083
    %v3510 = vunpack.c.l.b16 %v3084
    %v3511 = vunpack.c.l.b16 %v3085
    %v3512 = vunpack.c.h.b16 %v3085
    %v3513 = vunpack.c.l.b16 %v3086
    %v3514 = vunpack.c.l.b16 %v3087
    %v3515 = vunpack.c.h.b16 %v3087
    %v3516 = vunpack.c.l.b16 %v3088
    %v3517 = vunpack.c.l.b16 %v3089
    %v3518 = vunpack.c.h.b16 %v3089
    %v3519 = vunpack.c.l.b16 %v3090
    %v3520 = vunpack.c.l.b16 %v3091
    %v3521 = vunpack.c.h.b16 %v3091
    %v3522 = vunpack.c.l.b16 %v3092
    %v3523 = vunpack.c.l.b16 %v3093
    %v3524 = vunpack.c.h.b16 %v3093
    %v3525 = vunpack.c.l.b16 %v3094
    %v3526 = vunpack.c.l.b16 %v3095
    %v3527 = vunpack.c.h.b16 %v3095
    %v3528 = vunpack.c.l.b16 %v3096
    %v3529 = vunpack.c.l.b16 %v3097
    %v3530 = vunpack.c.h.b16 %v3097
    %v3531 = vunpack.c.l.b16 %v3098
    %v3532 = vunpack.c.l.b16 %v3099
    %v3533 = vunpack.c.h.b16 %v3099
    %v3534 = vunpack.c.l.b16 %v3100
    %v3535 = vunpack.c.l.b16 %v3101
    %v3536 = vunpack.c.h.b16 %v3101
    %v3537 = vunpack.c.l.b16 %v3102
    %v3538 = vunpack.c.l.b16 %v3103
    %v3539 = vunpack.c.h.b16 %v3103
    %v3540 = vunpack.c.l.b16 %v3104
    %v3541 = vunpack.c.l.b16 %v3105
    %v3542 = vunpack.c.h.b16 %v3105
    %v3543 = vunpack.c.l.b16 %v3106
    %v3544 = vunpack.c.l.b16 %v3107
    %v3545 = vunpack.c.h.b16 %v3107
    %v3546 = vunpack.c.l.b16 %v3108
    %v3547 = vunpack.c.l.b16 %v3109
    %v3548 = vunpack.c.h.b16 %v3109
    %v3549 = vunpack.c.l.b16 %v3110
    %v3550 = vunpack.c.l.b16 %v3111
    %v3551 = vunpack.c.h.b16 %v3111
    %v3552 = vunpack.c.l.b16 %v3112
    %v3553 = vunpack.c.l.b16 %v3113
    %v3554 = vunpack.c.h.b16 %v3113
    %v3555 = vunpack.c.l.b16 %v3114
    %v3556 = vunpack.c.l.b16 %v3115
    %v3557 = vunpack.c.h.b16 %v3115
    %v3558 = vunpack.c.l.b16 %v3116
    %v3559 = vunpack.c.l.b16 %v3117
    %v3560 = vunpack.c.h.b16 %v3117
    %v3561 = vunpack.c.l.b16 %v3118
    %v3562 = vunpack.c.l.b16 %v3119
    %v3563 = vunpack.c.h.b16 %v3119
    %v3564 = vunpack.c.l.b16 %v3120
    %v3565 = vunpack.c.l.b16 %v3121
    %v3566 = vunpack.c.h.b16 %v3121
    %v3567 = vunpack.c.l.b16 %v3122
    %v3568 = vunpack.c.l.b16 %v3123
    %v3569 = vunpack.c.h.b16 %v3123
    %v3570 = vunpack.c.l.b16 %v3124
    %v3571 = vunpack.c.l.b16 %v3125
    %v3572 = vunpack.c.h.b16 %v3125
    %v3573 = vunpack.c.l.b16 %v3126
    %v3574 = vunpack.c.l.b16 %v3127
    %v3575 = vunpack.c.h.b16 %v3127
    %v3576 = vunpack.c.l.b16 %v3128
    %v3577 = vunpack.c.l.b16 %v3129
    %v3578 = vunpack.c.h.b16 %v3129
    %v3579 = vunpack.c.l.b16 %v3130
    %v3580 = vunpack.c.l.b16 %v3131
    %v3581 = vunpack.c.h.b16 %v3131
    %v3582 = vunpack.c.l.b16 %v3132
    %v3583 = vunpack.c.l.b16 %v3133
    %v3584 = vunpack.c.h.b16 %v3133
    %v3585 = vunpack.c.l.b16 %v3134
    %v3586 = vunpack.c.l.b16 %v3135
    %v3587 = vunpack.c.h.b16 %v3135
    %v3588 = vunpack.c.l.b16 %v3136
    %v3589 = vunpack.c.l.b16 %v3137
    %v3590 = vunpack.c.h.b16 %v3137
    %v3591 = vunpack.c.l.b16 %v3138
    %v3592 = vunpack.c.l.b16 %v3139
    %v3593 = vunpack.c.h.b16 %v3139
    %v3594 = vunpack.c.l.b16 %v3140
    %v3595 = vunpack.c.l.b16 %v3141
    %v3596 = vunpack.c.h.b16 %v3141
    %v3597 = vunpack.c.l.b16 %v3142
    %v3598 = vunpack.c.l.b16 %v3143
    %v3599 = vunpack.c.h.b16 %v3143
    %v3600 = vunpack.c.l.b16 %v3144
    %v3601 = vunpack.c.l.b16 %v3145
    %v3602 = vunpack.c.h.b16 %v3145
    %v3603 = vunpack.c.l.b16 %v3146
    %v3604 = vunpack.c.l.b16 %v3147
    %v3605 = vunpack.c.h.b16 %v3147
    %v3606 = vunpack.c.l.b16 %v3148
    %v3607 = vunpack.c.l.b16 %v3149
    %v3608 = vunpack.c.h.b16 %v3149
    %v3609 = vunpack.c.l.b16 %v3150
    %v3610 = vunpack.c.l.b16 %v3151
    %v3611 = vunpack.c.h.b16 %v3151
    %v3612 = vunpack.c.l.b16 %v3152
    %v3613 = vunpack.c.l.b16 %v3153
    %v3614 = vunpack.c.h.b16 %v3153
    %v3615 = vunpack.c.l.b16 %v3154
    %v3616 = vunpack.c.l.b16 %v3155
    %v3617 = vunpack.c.h.b16 %v3155
    %v3618 = vunpack.c.l.b16 %v3156
    %v3619 = vunpack.c.l.b16 %v3157
    %v3620 = vunpack.c.h.b16 %v3157
    %v3621 = vunpack.c.l.b16 %v3158
    %v3622 = vunpack.c.l.b16 %v3159
    %v3623 = vunpack.c.h.b16 %v3159
    %v3624 = vunpack.c.l.b16 %v3160
    %v3625 = vunpack.c.l.b16 %v3161
    %v3626 = vunpack.c.h.b16 %v3161
    %v3627 = vunpack.c.l.b16 %v3162
    %v3628 = vunpack.c.l.b16 %v3163
    %v3629 = vunpack.c.h.b16 %v3163
    %v3630 = vunpack.c.l.b16 %v3164
    %v3631 = vunpack.c.l.b16 %v3165
    %v3632 = vunpack.c.h.b16 %v3165
    %v3633 = vunpack.c.l.b16 %v3166
    %v3634 = vunpack.c.l.b16 %v3167
    %v3635 = vunpack.c.h.b16 %v3167
    %v3636 = vunpack.c.l.b16 %v3168
    %v3637 = vunpack.c.l.b16 %v3169
    %v3638 = vunpack.c.h.b16 %v3169
    %v3639 = vunpack.c.l.b16 %v3170
    %v3640 = vunpack.c.l.b16 %v3171
    %v3641 = vunpack.c.h.b16 %v3171
    %v3642 = vunpack.c.l.b16 %v3172
    %v3643 = vunpack.c.l.b16 %v3173
    %v3644 = vunpack.c.h.b16 %v3173
    %v3645 = vunpack.c.l.b16 %v3174
    %v3646 = vunpack.c.l.b16 %v3175
    %v3647 = vunpack.c.h.b16 %v3175
    %v3648 = vunpack.c.l.b16 %v3176
    %v3649 = vunpack.c.l.b16 %v3177
    %v3650 = vunpack.c.h.b16 %v3177
    %v3651 = vunpack.c.l.b16 %v3178
    %v3652 = vunpack.c.l.b16 %v3179
    %v3653 = vunpack.c.h.b16 %v3179
    %v3654 = vunpack.c.l.b16 %v3180
    %v3655 = vunpack.c.l.b16 %v3181
    %v3656 = vunpack.c.h.b16 %v3181
    %v3657 = vunpack.c.l.b16 %v3182
    %v3658 = vunpack.c.l.b16 %v3183
    %v3659 = vunpack.c.h.b16 %v3183
    %v3660 = vunpack.c.l.b16 %v3184
    %v3661 = vunpack.c.l.b16 %v3185
    %v3662 = vunpack.c.h.b16 %v3185
    %v3663 = vunpack.c.l.b16 %v3186
    %v3664 = vunpack.c.l.b16 %v3187
    %v3665 = vunpack.c.h.b16 %v3187
    %v3666 = vunpack.c.l.b16 %v3188
    %v3667 = vunpack.c.l.b16 %v3189
    %v3668 = vunpack.c.h.b16 %v3189
    %v3669 = vunpack.c.l.b16 %v3190
    %v3670 = vunpack.c.l.b16 %v3191
    %v3671 = vunpack.c.h.b16 %v3191
    %v3672 = vunpack.c.l.b16 %v3192
    %v3673 = vunpack.c.l.b16 %v3193
    %v3674 = vunpack.c.h.b16 %v3193
    %v3675 = vunpack.c.l.b16 %v3194
    %v3676 = vunpack.c.l.b16 %v3195
    %v3677 = vunpack.c.h.b16 %v3195
    %v3678 = vunpack.c.l.b16 %v3196
    %v3679 = vunpack.c.l.b16 %v3197
    %v3680 = vunpack.c.h.b16 %v3197
    %v3681 = vunpack.c.l.b16 %v3198
    %v3682 = vunpack.c.l.b16 %v3199
    %v3683 = vunpack.c.h.b16 %v3199
    %v3684 = vunpack.c.l.b16 %v3200
    %v3685 = vunpack.c.l.b16 %v3201
    %v3686 = vunpack.c.h.b16 %v3201
    %v3687 = vunpack.c.l.b16 %v3202
    %v3688 = vunpack.c.l.b16 %v3203
    %v3689 = vunpack.c.h.b16 %v3203
    %v3690 = vunpack.c.l.b16 %v3204
    %v3691 = vunpack.c.l.b16 %v3205
    %v3692 = vunpack.c.h.b16 %v3205
    %v3693 = vunpack.c.l.b16 %v3206
    %v3694 = vunpack.c.l.b16 %v3207
    %v3695 = vunpack.c.h.b16 %v3207
    %v3696 = vunpack.c.l.b16 %v3208
    %v3697 = vunpack.c.l.b16 %v3209
    %v3698 = vunpack.c.h.b16 %v3209
    %v3699 = vunpack.c.l.b16 %v3210
    %v3700 = vunpack.c.l.b16 %v3211
    %v3701 = vunpack.c.h.b16 %v3211
    %v3702 = vunpack.c.l.b16 %v3212
    %v3703 = vunpack.c.l.b16 %v3213
    %v3704 = vunpack.c.h.b16 %v3213
    %v3705 = vunpack.c.l.b16 %v3214
    %v3706 = vunpack.c.l.b16 %v3215
    %v3707 = vunpack.c.h.b16 %v3215
    %v3708 = vunpack.c.l.b16 %v3216
    %v3709 = vunpack.c.l.b16 %v3217
    %v3710 = vunpack.c.h.b16 %v3217
    %v3711 = vunpack.c.l.b16 %v3218
    %v3712 = vunpack.c.l.b16 %v3219
    %v3713 = vunpack.c.h.b16 %v3219
    %v3714 = vunpack.c.l.b16 %v3220
    %v3715 = vunpack.c.l.b16 %v3221
    %v3716 = vunpack.c.h.b16 %v3221
    %v3717 = vunpack.c.l.b16 %v3222
    %v3718 = vunpack.c.l.b16 %v3223
    %v3719 = vunpack.c.h.b16 %v3223
    %v3720 = vunpack.c.l.b16 %v3224
    %v3721 = vunpack.c.l.b16 %v3225
    %v3722 = vunpack.c.h.b16 %v3225
    %v3723 = vunpack.c.l.b16 %v3226
    %v3724 = vpack.c.b16 %v3439, %v3436
    %v3725 = vpack.c.b16 %v3440, %v3437
    %v3726 = vpack.c.b16 %v3441, %v3438
    %v3727 = vpack.c.b16 %v3445, %v3442
    %v3728 = vpack.c.b16 %v3446, %v3443
    %v3729 = vpack.c.b16 %v3447, %v3444
    %v3730 = vpack.c.b16 %v3451, %v3448
    %v3731 = vpack.c.b16 %v3452, %v3449
    %v3732 = vpack.c.b16 %v3453, %v3450
    %v3733 = vpack.c.b16 %v3457, %v3454
    %v3734 = vpack.c.b16 %v3458, %v3455
    %v3735 = vpack.c.b16 %v3459, %v3456
    %v3736 = vpack.c.b16 %v3463, %v3460
    %v3737 = vpack.c.b16 %v3464, %v3461
    %v3738 = vpack.c.b16 %v3465, %v3462
    %v3739 = vpack.c.b16 %v3469, %v3466
    %v3740 = vpack.c.b16 %v3470, %v3467
    %v3741 = vpack.c.b16 %v3471, %v3468
    %v3742 = vpack.c.b16 %v3475, %v3472
    %v3743 = vpack.c.b16 %v3476, %v3473
    %v3744 = vpack.c.b16 %v3477, %v3474
    %v3745 = vpack.c.b16 %v3481, %v3478
    %v3746 = vpack.c.b16 %v3482, %v3479
    %v3747 = vpack.c.b16 %v3483, %v3480
    %v3748 = vpack.c.b16 %v3487, %v3484
    %v3749 = vpack.c.b16 %v3488, %v3485
    %v3750 = vpack.c.b16 %v3489, %v3486
    %v3751 = vpack.c.b16 %v3493, %v3490
    %v3752 = vpack.c.b16 %v3494, %v3491
    %v3753 = vpack.c.b16 %v3495, %v3492
    %v3754 = vpack.c.b16 %v3499, %v3496
    %v3755 = vpack.c.b16 %v3500, %v3497
    %v3756 = vpack.c.b16 %v3501, %v3498
    %v3757 = vpack.c.b16 %v3505, %v3502
    %v3758 = vpack.c.b16 %v3506, %v3503
    %v3759 = vpack.c.b16 %v3507, %v3504
    %v3760 = vpack.c.b16 %v3511, %v3508
    %v3761 = vpack.c.b16 %v3512, %v3509
    %v3762 = vpack.c.b16 %v3513, %v3510
    %v3763 = vpack.c.b16 %v3517, %v3514
    %v3764 = vpack.c.b16 %v3518, %v3515
    %v3765 = vpack.c.b16 %v3519, %v3516
    %v3766 = vpack.c.b16 %v3523, %v3520
    %v3767 = vpack.c.b16 %v3524, %v3521
    %v3768 = vpack.c.b16 %v3525, %v3522
    %v3769 = vpack.c.b16 %v3529, %v3526
    %v3770 = vpack.c.b16 %v3530, %v3527
    %v3771 = vpack.c.b16 %v3531, %v3528
    %v3772 = vpack.c.b16 %v3535, %v3532
    %v3773 = vpack.c.b16 %v3536, %v3533
    %v3774 = vpack.c.b16 %v3537, %v3534
    %v3775 = vpack.c.b16 %v3541, %v3538
    %v3776 = vpack.c.b16 %v3542, %v3539
    %v3777 = vpack.c.b16 %v3543, %v3540
    %v3778 = vpack.c.b16 %v3547, %v3544
    %v3779 = vpack.c.b16 %v3548, %v3545
    %v3780 = vpack.c.b16 %v3549, %v3546
    %v3781 = vpack.c.b16 %v3553, %v3550
    %v3782 = vpack.c.b16 %v3554, %v3551
    %v3783 = vpack.c.b16 %v3555, %v3552
    %v3784 = vpack.c.b16 %v3559, %v3556
    %v3785 = vpack.c.b16 %v3560, %v3557
    %v3786 = vpack.c.b16 %v3561, %v3558
    %v3787 = vpack.c.b16 %v3565, %v3562
    %v3788 = vpack.c.b16 %v3566, %v3563
    %v3789 = vpack.c.b16 %v3567, %v3564
    %v3790 = vpack.c.b16 %v3571, %v3568
    %v3791 = vpack.c.b16 %v3572, %v3569
    %v3792 = vpack.c.b16 %v3573, %v3570
    %v3793 = vpack.c.b16 %v3577, %v3574
    %v3794 = vpack.c.b16 %v3578, %v3575
    %v3795 = vpack.c.b16 %v3579, %v3576
    %v3796 = vpack.c.b16 %v3583, %v3580
    %v3797 = vpack.c.b16 %v3584, %v3581
    %v3798 = vpack.c.b16 %v3585, %v3582
    %v3799 = vpack.c.b16 %v3589, %v3586
    %v3800 = vpack.c.b16 %v3590, %v3587
    %v3801 = vpack.c.b16 %v3591, %v3588
    %v3802 = vpack.c.b16 %v3595, %v3592
    %v3803 = vpack.c.b16 %v3596, %v3593
    %v3804 = vpack.c.b16 %v3597, %v3594
    %v3805 = vpack.c.b16 %v3601, %v3598
    %v3806 = vpack.c.b16 %v3602, %v3599
    %v3807 = vpack.c.b16 %v3603, %v3600
    %v3808 = vpack.c.b16 %v3607, %v3604
    %v3809 = vpack.c.b16 %v3608, %v3605
    %v3810 = vpack.c.b16 %v3609, %v3606
    %v3811 = vpack.c.b16 %v3613, %v3610
    %v3812 = vpack.c.b16 %v3614, %v3611
    %v3813 = vpack.c.b16 %v3615, %v3612
    %v3814 = vpack.c.b16 %v3619, %v3616
    %v3815 = vpack.c.b16 %v3620, %v3617
    %v3816 = vpack.c.b16 %v3621, %v3618
    %v3817 = vpack.c.b16 %v3625, %v3622
    %v3818 = vpack.c.b16 %v3626, %v3623
    %v3819 = vpack.c.b16 %v3627, %v3624
    %v3820 = vpack.c.b16 %v3631, %v3628
    %v3821 = vpack.c.b16 %v3632, %v3629
    %v3822 = vpack.c.b16 %v3633, %v3630
    %v3823 = vpack.c.b16 %v3637, %v3634
    %v3824 = vpack.c.b16 %v3638, %v3635
    %v3825 = vpack.c.b16 %v3639, %v3636
    %v3826 = vpack.c.b16 %v3643, %v3640
    %v3827 = vpack.c.b16 %v3644, %v3641
    %v3828 = vpack.c.b16 %v3645, %v3642
    %v3829 = vpack.c.b16 %v3649, %v3646
    %v3830 = vpack.c.b16 %v3650, %v3647
    %v3831 = vpack.c.b16 %v3651, %v3648
    %v3832 = vpack.c.b16 %v3655, %v3652
    %v3833 = vpack.c.b16 %v3656, %v3653
    %v3834 = vpack.c.b16 %v3657, %v3654
    %v3835 = vpack.c.b16 %v3661, %v3658
    %v3836 = vpack.c.b16 %v3662, %v3659
    %v3837 = vpack.c.b16 %v3663, %v3660
    %v3838 = vpack.c.b16 %v3667, %v3664
    %v3839 = vpack.c.b16 %v3668, %v3665
    %v3840 = vpack.c.b16 %v3669, %v3666
    %v3841 = vpack.c.b16 %v3673, %v3670
    %v3842 = vpack.c.b16 %v3674, %v3671
    %v3843 = vpack.c.b16 %v3675, %v3672
    %v3844 = vpack.c.b16 %v3679, %v3676
    %v3845 = vpack.c.b16 %v3680, %v3677
    %v3846 = vpack.c.b16 %v3681, %v3678
    %v3847 = vpack.c.b16 %v3685, %v3682
    %v3848 = vpack.c.b16 %v3686, %v3683
    %v3849 = vpack.c.b16 %v3687, %v3684
    %v3850 = vpack.c.b16 %v3691, %v3688
    %v3851 = vpack.c.b16 %v3692, %v3689
    %v3852 = vpack.c.b16 %v3693, %v3690
    %v3853 = vpack.c.b16 %v3697, %v3694
    %v3854 = vpack.c.b16 %v3698, %v3695
    %v3855 = vpack.c.b16 %v3699, %v3696
    %v3856 = vpack.c.b16 %v3703, %v3700
    %v3857 = vpack.c.b16 %v3704, %v3701
    %v3858 = vpack.c.b16 %v3705, %v3702
    %v3859 = vpack.c.b16 %v3709, %v3706
    %v3860 = vpack.c.b16 %v3710, %v3707
    %v3861 = vpack.c.b16 %v3711, %v3708
    %v3862 = vpack.c.b16 %v3715, %v3712
    %v3863 = vpack.c.b16 %v3716, %v3713
    %v3864 = vpack.c.b16 %v3717, %v3714
    %v3865 = vpack.c.b16 %v3721, %v3718
    %v3866 = vpack.c.b16 %v3722, %v3719
    %v3867 = vpack.c.b16 %v3723, %v3720
    %4012 = vmatprep.subr.bf16.mxu0 %v3725
    %4013 = vmatpush1.bf16.msra.mxu0 %v3724
    %4014 = vmatprep.subr.bf16.mxu0 %v3728
    %4015 = vmatpush1.bf16.msra.mxu0 %v3727
    %4016 = vmatprep.subr.bf16.mxu0 %v3731
    %4017 = vmatpush1.bf16.msra.mxu0 %v3730
    %4018 = vmatprep.subr.bf16.mxu0 %v3734
    %4019 = vmatpush1.bf16.msra.mxu0 %v3733
    %4020 = vmatprep.subr.bf16.mxu0 %v3737
    %4021 = vmatpush1.bf16.msra.mxu0 %v3736
    %4022 = vmatprep.subr.bf16.mxu0 %v3740
    %4023 = vmatpush1.bf16.msra.mxu0 %v3739
    %4024 = vmatprep.subr.bf16.mxu0 %v3743
    %4025 = vmatpush1.bf16.msra.mxu0 %v3742
    %4026 = vmatprep.subr.bf16.mxu0 %v3746
    %4027 = vmatpush1.bf16.msra.mxu0 %v3745
    %4028 = vmatprep.subr.bf16.mxu0 %v3749
    %4029 = vmatpush1.bf16.msra.mxu0 %v3748
    %4030 = vmatprep.subr.bf16.mxu0 %v3752
    %4031 = vmatpush1.bf16.msra.mxu0 %v3751
    %4032 = vmatprep.subr.bf16.mxu0 %v3755
    %4033 = vmatpush1.bf16.msra.mxu0 %v3754
    %4034 = vmatprep.subr.bf16.mxu0 %v3758
    %4035 = vmatpush1.bf16.msra.mxu0 %v3757
    %4036 = vmatprep.subr.bf16.mxu0 %v3761
    %4037 = vmatpush1.bf16.msra.mxu0 %v3760
    %4038 = vmatprep.subr.bf16.mxu0 %v3764
    %4039 = vmatpush1.bf16.msra.mxu0 %v3763
    %4040 = vmatprep.subr.bf16.mxu0 %v3767
    %4041 = vmatpush1.bf16.msra.mxu0 %v3766
    %4042 = vmatprep.subr.bf16.mxu0 %v3770
    %4043 = vmatpush1.bf16.msra.mxu0 %v3769
    %4044 = vmatprep.mubr.bf16.mxu0 %v3030
    %4045 = vmatmul.mubr.bf16.gmra.mrb[0].mxu0 %v3029
    %v4046 = vpop.f32.mrb[0].mxu0
    %v4047 = vadd.f32 %v3232, %v4046
    %v4048 = vpop.f32.mrb[0].mxu0
    %v4049 = vadd.f32 %v3236, %v4048
    %v4050 = vpop.f32.mrb[0].mxu0
    %v4051 = vadd.f32 %v3232, %v4050
    %v4052 = vpop.f32.mrb[0].mxu0
    %v4053 = vadd.f32 %v3236, %v4052
    %4054 = vdwg.mxu0
    %4055 = vmatprep.subr.bf16.mxu0 %v3773
    %4056 = vmatpush1.bf16.msra.mxu0 %v3772
    %4057 = vmatprep.subr.bf16.mxu0 %v3776
    %4058 = vmatpush1.bf16.msra.mxu0 %v3775
    %4059 = vmatprep.subr.bf16.mxu0 %v3779
    %4060 = vmatpush1.bf16.msra.mxu0 %v3778
    %4061 = vmatprep.subr.bf16.mxu0 %v3782
    %4062 = vmatpush1.bf16.msra.mxu0 %v3781
    %4063 = vmatprep.subr.bf16.mxu0 %v3785
    %4064 = vmatpush1.bf16.msra.mxu0 %v3784
    %4065 = vmatprep.subr.bf16.mxu0 %v3788
    %4066 = vmatpush1.bf16.msra.mxu0 %v3787
    %4067 = vmatprep.subr.bf16.mxu0 %v3791
    %4068 = vmatpush1.bf16.msra.mxu0 %v3790
    %4069 = vmatprep.subr.bf16.mxu0 %v3794
    %4070 = vmatpush1.bf16.msra.mxu0 %v3793
    %4071 = vmatprep.subr.bf16.mxu0 %v3797
    %4072 = vmatpush1.bf16.msra.mxu0 %v3796
    %4073 = vmatprep.subr.bf16.mxu0 %v3800
    %4074 = vmatpush1.bf16.msra.mxu0 %v3799
    %4075 = vmatprep.subr.bf16.mxu0 %v3803
    %4076 = vmatpush1.bf16.msra.mxu0 %v3802
    %4077 = vmatprep.subr.bf16.mxu0 %v3806
    %4078 = vmatpush1.bf16.msra.mxu0 %v3805
    %4079 = vmatprep.subr.bf16.mxu0 %v3809
    %4080 = vmatpush1.bf16.msra.mxu0 %v3808
    %4081 = vmatprep.subr.bf16.mxu0 %v3812
    %4082 = vmatpush1.bf16.msra.mxu0 %v3811
    %4083 = vmatprep.subr.bf16.mxu0 %v3815
    %4084 = vmatpush1.bf16.msra.mxu0 %v3814
    %4085 = vmatprep.subr.bf16.mxu0 %v3818
    %4086 = vmatpush1.bf16.msra.mxu0 %v3817
    %4087 = vmatprep.mubr.bf16.mxu0 %v3032
    %4088 = vmatmul.mubr.bf16.gmra.mrb[0].mxu0 %v3031
    %v4089 = vpop.f32.mrb[0].mxu0
    %v4090 = vadd.f32 %v4047, %v4089
    %v4091 = vpop.f32.mrb[0].mxu0
    %v4092 = vadd.f32 %v4049, %v4091
    %v4093 = vpop.f32.mrb[0].mxu0
    %v4094 = vadd.f32 %v4051, %v4093
    %v4095 = vpop.f32.mrb[0].mxu0
    %v4096 = vadd.f32 %v4053, %v4095
    %4097 = vdwg.mxu0
    %4098 = vmatprep.subr.bf16.mxu0 %v3821
    %4099 = vmatpush1.bf16.msra.mxu0 %v3820
    %4100 = vmatprep.subr.bf16.mxu0 %v3824
    %4101 = vmatpush1.bf16.msra.mxu0 %v3823
    %4102 = vmatprep.subr.bf16.mxu0 %v3827
    %4103 = vmatpush1.bf16.msra.mxu0 %v3826
    %4104 = vmatprep.subr.bf16.mxu0 %v3830
    %4105 = vmatpush1.bf16.msra.mxu0 %v3829
    %4106 = vmatprep.subr.bf16.mxu0 %v3833
    %4107 = vmatpush1.bf16.msra.mxu0 %v3832
    %4108 = vmatprep.subr.bf16.mxu0 %v3836
    %4109 = vmatpush1.bf16.msra.mxu0 %v3835
    %4110 = vmatprep.subr.bf16.mxu0 %v3839
    %4111 = vmatpush1.bf16.msra.mxu0 %v3838
    %4112 = vmatprep.subr.bf16.mxu0 %v3842
    %4113 = vmatpush1.bf16.msra.mxu0 %v3841
    %4114 = vmatprep.subr.bf16.mxu0 %v3845
    %4115 = vmatpush1.bf16.msra.mxu0 %v3844
    %4116 = vmatprep.subr.bf16.mxu0 %v3848
    %4117 = vmatpush1.bf16.msra.mxu0 %v3847
    %4118 = vmatprep.subr.bf16.mxu0 %v3851
    %4119 = vmatpush1.bf16.msra.mxu0 %v3850
    %4120 = vmatprep.subr.bf16.mxu0 %v3854
    %4121 = vmatpush1.bf16.msra.mxu0 %v3853
    %4122 = vmatprep.subr.bf16.mxu0 %v3857
    %4123 = vmatpush1.bf16.msra.mxu0 %v3856
    %4124 = vmatprep.subr.bf16.mxu0 %v3860
    %4125 = vmatpush1.bf16.msra.mxu0 %v3859
    %4126 = vmatprep.subr.bf16.mxu0 %v3863
    %4127 = vmatpush1.bf16.msra.mxu0 %v3862
    %4128 = vmatprep.subr.bf16.mxu0 %v3866
    %4129 = vmatpush1.bf16.msra.mxu0 %v3865
    %4130 = vmatprep.mubr.bf16.mxu0 %v3034
    %4131 = vmatmul.mubr.bf16.gmra.mrb[0].mxu0 %v3033
    %v4132 = vpop.f32.mrb[0].mxu0
    %v4133 = vadd.f32 %v4090, %v4132
    %v4134 = vpop.f32.mrb[0].mxu0
    %v4135 = vadd.f32 %v4092, %v4134
    %v4136 = vpop.f32.mrb[0].mxu0
    %v4137 = vadd.f32 %v4094, %v4136
    %v4138 = vpop.f32.mrb[0].mxu0
    %v4139 = vadd.f32 %v4096, %v4138
    %4140 = vdwg.mxu0
    %4141 = vmatprep.subr.bf16.mxu0 0
    %4142 = vmatpush1.bf16.msra.mxu0 %v3726
    %4143 = vmatprep.subr.bf16.mxu0 0
    %4144 = vmatpush1.bf16.msra.mxu0 %v3729
    %4145 = vmatprep.subr.bf16.mxu0 0
    %4146 = vmatpush1.bf16.msra.mxu0 %v3732
    %4147 = vmatprep.subr.bf16.mxu0 0
    %4148 = vmatpush1.bf16.msra.mxu0 %v3735
    %4149 = vmatprep.subr.bf16.mxu0 0
    %4150 = vmatpush1.bf16.msra.mxu0 %v3738
    %4151 = vmatprep.subr.bf16.mxu0 0
    %4152 = vmatpush1.bf16.msra.mxu0 %v3741
    %4153 = vmatprep.subr.bf16.mxu0 0
    %4154 = vmatpush1.bf16.msra.mxu0 %v3744
    %4155 = vmatprep.subr.bf16.mxu0 0
    %4156 = vmatpush1.bf16.msra.mxu0 %v3747
    %4157 = vmatprep.subr.bf16.mxu0 0
    %4158 = vmatpush1.bf16.msra.mxu0 %v3750
    %4159 = vmatprep.subr.bf16.mxu0 0
    %4160 = vmatpush1.bf16.msra.mxu0 %v3753
    %4161 = vmatprep.subr.bf16.mxu0 0
    %4162 = vmatpush1.bf16.msra.mxu0 %v3756
    %4163 = vmatprep.subr.bf16.mxu0 0
    %4164 = vmatpush1.bf16.msra.mxu0 %v3759
    %4165 = vmatprep.subr.bf16.mxu0 0
    %4166 = vmatpush1.bf16.msra.mxu0 %v3762
    %4167 = vmatprep.subr.bf16.mxu0 0
    %4168 = vmatpush1.bf16.msra.mxu0 %v3765
    %4169 = vmatprep.subr.bf16.mxu0 0
    %4170 = vmatpush1.bf16.msra.mxu0 %v3768
    %4171 = vmatprep.subr.bf16.mxu0 0
    %4172 = vmatpush1.bf16.msra.mxu0 %v3771
    %4173 = vmatprep.mubr.bf16.mxu0 %v3030
    %4174 = vmatmul.mubr.bf16.gmra.mrb[0].mxu0 %v3029
    %v4175 = vpop.f32.mrb[0].mxu0
    %v4176 = vadd.f32 %v3240, %v4175
    %v4177 = vpop.f32.mrb[0].mxu0
    %v4178 = vpop.f32.mrb[0].mxu0
    %v4179 = vadd.f32 %v3240, %v4178
    %v4180 = vpop.f32.mrb[0].mxu0
    %4181 = vdwg.mxu0
    %4182 = vmatprep.subr.bf16.mxu0 0
    %4183 = vmatpush1.bf16.msra.mxu0 %v3774
    %4184 = vmatprep.subr.bf16.mxu0 0
    %4185 = vmatpush1.bf16.msra.mxu0 %v3777
    %4186 = vmatprep.subr.bf16.mxu0 0
    %4187 = vmatpush1.bf16.msra.mxu0 %v3780
    %4188 = vmatprep.subr.bf16.mxu0 0
    %4189 = vmatpush1.bf16.msra.mxu0 %v3783
    %4190 = vmatprep.subr.bf16.mxu0 0
    %4191 = vmatpush1.bf16.msra.mxu0 %v3786
    %4192 = vmatprep.subr.bf16.mxu0 0
    %4193 = vmatpush1.bf16.msra.mxu0 %v3789
    %4194 = vmatprep.subr.bf16.mxu0 0
    %4195 = vmatpush1.bf16.msra.mxu0 %v3792
    %4196 = vmatprep.subr.bf16.mxu0 0
    %4197 = vmatpush1.bf16.msra.mxu0 %v3795
    %4198 = vmatprep.subr.bf16.mxu0 0
    %4199 = vmatpush1.bf16.msra.mxu0 %v3798
    %4200 = vmatprep.subr.bf16.mxu0 0
    %4201 = vmatpush1.bf16.msra.mxu0 %v3801
    %4202 = vmatprep.subr.bf16.mxu0 0
    %4203 = vmatpush1.bf16.msra.mxu0 %v3804
    %4204 = vmatprep.subr.bf16.mxu0 0
    %4205 = vmatpush1.bf16.msra.mxu0 %v3807
    %4206 = vmatprep.subr.bf16.mxu0 0
    %4207 = vmatpush1.bf16.msra.mxu0 %v3810
    %4208 = vmatprep.subr.bf16.mxu0 0
    %4209 = vmatpush1.bf16.msra.mxu0 %v3813
    %4210 = vmatprep.subr.bf16.mxu0 0
    %4211 = vmatpush1.bf16.msra.mxu0 %v3816
    %4212 = vmatprep.subr.bf16.mxu0 0
    %4213 = vmatpush1.bf16.msra.mxu0 %v3819
    %4214 = vmatprep.mubr.bf16.mxu0 %v3032
    %4215 = vmatmul.mubr.bf16.gmra.mrb[0].mxu0 %v3031
    %v4216 = vpop.f32.mrb[0].mxu0
    %v4217 = vadd.f32 %v4176, %v4216
    %v4218 = vpop.f32.mrb[0].mxu0
    %v4219 = vpop.f32.mrb[0].mxu0
    %v4220 = vadd.f32 %v4179, %v4219
    %v4221 = vpop.f32.mrb[0].mxu0
    %4222 = vdwg.mxu0
    %4223 = vmatprep.subr.bf16.mxu0 0
    %4224 = vmatpush1.bf16.msra.mxu0 %v3822
    %4225 = vmatprep.subr.bf16.mxu0 0
    %4226 = vmatpush1.bf16.msra.mxu0 %v3825
    %4227 = vmatprep.subr.bf16.mxu0 0
    %4228 = vmatpush1.bf16.msra.mxu0 %v3828
    %4229 = vmatprep.subr.bf16.mxu0 0
    %4230 = vmatpush1.bf16.msra.mxu0 %v3831
    %4231 = vmatprep.subr.bf16.mxu0 0
    %4232 = vmatpush1.bf16.msra.mxu0 %v3834
    %4233 = vmatprep.subr.bf16.mxu0 0
    %4234 = vmatpush1.bf16.msra.mxu0 %v3837
    %4235 = vmatprep.subr.bf16.mxu0 0
    %4236 = vmatpush1.bf16.msra.mxu0 %v3840
    %4237 = vmatprep.subr.bf16.mxu0 0
    %4238 = vmatpush1.bf16.msra.mxu0 %v3843
    %4239 = vmatprep.subr.bf16.mxu0 0
    %4240 = vmatpush1.bf16.msra.mxu0 %v3846
    %4241 = vmatprep.subr.bf16.mxu0 0
    %4242 = vmatpush1.bf16.msra.mxu0 %v3849
    %4243 = vmatprep.subr.bf16.mxu0 0
    %4244 = vmatpush1.bf16.msra.mxu0 %v3852
    %4245 = vmatprep.subr.bf16.mxu0 0
    %4246 = vmatpush1.bf16.msra.mxu0 %v3855
    %4247 = vmatprep.subr.bf16.mxu0 0
    %4248 = vmatpush1.bf16.msra.mxu0 %v3858
    %4249 = vmatprep.subr.bf16.mxu0 0
    %4250 = vmatpush1.bf16.msra.mxu0 %v3861
    %4251 = vmatprep.subr.bf16.mxu0 0
    %4252 = vmatpush1.bf16.msra.mxu0 %v3864
    %4253 = vmatprep.subr.bf16.mxu0 0
    %4254 = vmatpush1.bf16.msra.mxu0 %v3867
    %4255 = vmatprep.mubr.bf16.mxu0 %v3034
    %4256 = vmatmul.mubr.bf16.gmra.mrb[0].mxu0 %v3033
    %v4257 = vpop.f32.mrb[0].mxu0
    %v4258 = vadd.f32 %v4217, %v4257
    %v4259 = vpop.f32.mrb[0].mxu0
    %v4260 = vpop.f32.mrb[0].mxu0
    %v4261 = vadd.f32 %v4220, %v4260
    %v4262 = vpop.f32.mrb[0].mxu0
    %4263 = vdwg.mxu0
    %v4264 = vmax.f32 %v4133, 0.0
    %v4265 = vmax.f32 %v4135, 0.0
    %v4266 = vmax.f32 %v4258, 0.0
    %v4267 = vmax.f32 %v4137, 0.0
    %v4268 = vmax.f32 %v4139, 0.0
    %v4269 = vmax.f32 %v4261, 0.0
    %v4270 = vpack.c.bf16 %v4267, %v4264
    %v4271 = vpack.c.bf16 %v4268, %v4265
    %v4272 = vpack.c.bf16 %v4269, %v4266
    %v4273 = vld [vmem:[#allocation11] sm:$0xf]
    %v4274 = vld [vmem:[#allocation11 + $0x4] sm:$0xf]
    %v4275 = vld [vmem:[#allocation11 + $0x8] sm:$0xf]
    %v4276 = vld [vmem:[#allocation11 + $0xc] sm:$0xf]
    %v4277 = vld [vmem:[#allocation11 + $0x10] sm:$0xf]
    %v4278 = vld [vmem:[#allocation11 + $0x14] sm:$0xf]
    %v4279 = vld [vmem:[#allocation11 + $0x18] sm:$0xf]
    %v4280 = vld [vmem:[#allocation11 + $0x1c] sm:$0xf]
    %v4281 = vld [vmem:[#allocation11 + $0x20] sm:$0xf]
    %v4282 = vld [vmem:[#allocation11 + $0x24] sm:$0xf]
    %v4283 = vld [vmem:[#allocation11 + $0x28] sm:$0xf]
    %v4284 = vld [vmem:[#allocation11 + $0x2c] sm:$0xf]
    %v4285 = vld [vmem:[#allocation11 + $0x30] sm:$0xf]
    %v4286 = vld [vmem:[#allocation11 + $0x34] sm:$0xf]
    %v4287 = vld [vmem:[#allocation11 + $0x38] sm:$0xf]
    %v4288 = vld [vmem:[#allocation11 + $0x3c] sm:$0xf]
    %v4289 = vld [vmem:[#allocation11 + $0x40] sm:$0xf]
    %v4290 = vld [vmem:[#allocation11 + $0x44] sm:$0xf]
    %v4291 = vld [vmem:[#allocation11 + $0x48] sm:$0xf]
    %v4292 = vld [vmem:[#allocation11 + $0x4c] sm:$0xf]
    %v4293 = vld [vmem:[#allocation11 + $0x50] sm:$0xf]
    %v4294 = vld [vmem:[#allocation11 + $0x54] sm:$0xf]
    %v4295 = vld [vmem:[#allocation11 + $0x58] sm:$0xf]
    %v4296 = vld [vmem:[#allocation11 + $0x5c] sm:$0xf]
    %v4297 = vld [vmem:[#allocation11 + $0x60] sm:$0xf]
    %v4298 = vld [vmem:[#allocation11 + $0x64] sm:$0xf]
    %v4299 = vld [vmem:[#allocation11 + $0x68] sm:$0xf]
    %v4300 = vld [vmem:[#allocation11 + $0x6c] sm:$0xf]
    %v4301 = vld [vmem:[#allocation11 + $0x70] sm:$0xf]
    %v4302 = vld [vmem:[#allocation11 + $0x74] sm:$0xf]
    %v4303 = vld [vmem:[#allocation11 + $0x78] sm:$0xf]
    %v4304 = vld [vmem:[#allocation11 + $0x7c] sm:$0xf]
    %v4305 = vld [vmem:[#allocation11 + $0x80] sm:$0xf]
    %v4306 = vld [vmem:[#allocation11 + $0x84] sm:$0xf]
    %v4307 = vld [vmem:[#allocation11 + $0x88] sm:$0xf]
    %v4308 = vld [vmem:[#allocation11 + $0x8c] sm:$0xf]
    %v4309 = vld [vmem:[#allocation11 + $0x90] sm:$0xf]
    %v4310 = vld [vmem:[#allocation11 + $0x94] sm:$0xf]
    %v4311 = vld [vmem:[#allocation11 + $0x98] sm:$0xf]
    %v4312 = vld [vmem:[#allocation11 + $0x9c] sm:$0xf]
    %v4313 = vld [vmem:[#allocation11 + $0xa0] sm:$0xf]
    %v4314 = vld [vmem:[#allocation11 + $0xa4] sm:$0xf]
    %v4315 = vld [vmem:[#allocation11 + $0xa8] sm:$0xf]
    %v4316 = vld [vmem:[#allocation11 + $0xac] sm:$0xf]
    %v4317 = vld [vmem:[#allocation11 + $0xb0] sm:$0xf]
    %v4318 = vld [vmem:[#allocation11 + $0xb4] sm:$0xf]
    %v4319 = vld [vmem:[#allocation11 + $0xb8] sm:$0xf]
    %v4320 = vld [vmem:[#allocation11 + $0xbc] sm:$0xf]
    %v4321 = vld [vmem:[#allocation13] sm:$0x1]
    %v4323 = vlaneseq
    %v4324 = vshrl.u32 %v4323, 7
    %v4325 = vsub.s32 0, %v4324
    %v4326 = vrot.slane %v4321, %v4325
    %v4376 = vunpack.c.l.b16 %v4273
    %v4377 = vunpack.c.l.b16 %v4274
    %v4378 = vunpack.c.l.b16 %v4275
    %v4379 = vunpack.c.l.b16 %v4276
    %v4380 = vunpack.c.l.b16 %v4277
    %v4381 = vunpack.c.l.b16 %v4278
    %v4382 = vunpack.c.l.b16 %v4279
    %v4383 = vunpack.c.l.b16 %v4280
    %v4384 = vunpack.c.l.b16 %v4281
    %v4385 = vunpack.c.l.b16 %v4282
    %v4386 = vunpack.c.l.b16 %v4283
    %v4387 = vunpack.c.l.b16 %v4284
    %v4388 = vunpack.c.l.b16 %v4285
    %v4389 = vunpack.c.l.b16 %v4286
    %v4390 = vunpack.c.l.b16 %v4287
    %v4391 = vunpack.c.l.b16 %v4288
    %v4392 = vunpack.c.l.b16 %v4289
    %v4393 = vunpack.c.l.b16 %v4290
    %v4394 = vunpack.c.l.b16 %v4291
    %v4395 = vunpack.c.l.b16 %v4292
    %v4396 = vunpack.c.l.b16 %v4293
    %v4397 = vunpack.c.l.b16 %v4294
    %v4398 = vunpack.c.l.b16 %v4295
    %v4399 = vunpack.c.l.b16 %v4296
    %v4400 = vunpack.c.l.b16 %v4297
    %v4401 = vunpack.c.l.b16 %v4298
    %v4402 = vunpack.c.l.b16 %v4299
    %v4403 = vunpack.c.l.b16 %v4300
    %v4404 = vunpack.c.l.b16 %v4301
    %v4405 = vunpack.c.l.b16 %v4302
    %v4406 = vunpack.c.l.b16 %v4303
    %v4407 = vunpack.c.l.b16 %v4304
    %v4408 = vunpack.c.l.b16 %v4305
    %v4409 = vunpack.c.l.b16 %v4306
    %v4410 = vunpack.c.l.b16 %v4307
    %v4411 = vunpack.c.l.b16 %v4308
    %v4412 = vunpack.c.l.b16 %v4309
    %v4413 = vunpack.c.l.b16 %v4310
    %v4414 = vunpack.c.l.b16 %v4311
    %v4415 = vunpack.c.l.b16 %v4312
    %v4416 = vunpack.c.l.b16 %v4313
    %v4417 = vunpack.c.l.b16 %v4314
    %v4418 = vunpack.c.l.b16 %v4315
    %v4419 = vunpack.c.l.b16 %v4316
    %v4420 = vunpack.c.l.b16 %v4317
    %v4421 = vunpack.c.l.b16 %v4318
    %v4422 = vunpack.c.l.b16 %v4319
    %v4423 = vunpack.c.l.b16 %v4320
    %v4424 = vpack.c.b16 %v4377, %v4376
    %v4425 = vpack.c.b16 %v4379, %v4378
    %v4426 = vpack.c.b16 %v4381, %v4380
    %v4427 = vpack.c.b16 %v4383, %v4382
    %v4428 = vpack.c.b16 %v4385, %v4384
    %v4429 = vpack.c.b16 %v4387, %v4386
    %v4430 = vpack.c.b16 %v4389, %v4388
    %v4431 = vpack.c.b16 %v4391, %v4390
    %v4432 = vpack.c.b16 %v4393, %v4392
    %v4433 = vpack.c.b16 %v4395, %v4394
    %v4434 = vpack.c.b16 %v4397, %v4396
    %v4435 = vpack.c.b16 %v4399, %v4398
    %v4436 = vpack.c.b16 %v4401, %v4400
    %v4437 = vpack.c.b16 %v4403, %v4402
    %v4438 = vpack.c.b16 %v4405, %v4404
    %v4439 = vpack.c.b16 %v4407, %v4406
    %v4440 = vpack.c.b16 %v4409, %v4408
    %v4441 = vpack.c.b16 %v4411, %v4410
    %v4442 = vpack.c.b16 %v4413, %v4412
    %v4443 = vpack.c.b16 %v4415, %v4414
    %v4444 = vpack.c.b16 %v4417, %v4416
    %v4445 = vpack.c.b16 %v4419, %v4418
    %v4446 = vpack.c.b16 %v4421, %v4420
    %v4447 = vpack.c.b16 %v4423, %v4422
    %4472 = vmatprep.subr.bf16.mxu0 0
    %4473 = vmatpush1.bf16.msra.mxu0 %v4424
    %4474 = vmatprep.subr.bf16.mxu0 0
    %4475 = vmatpush1.bf16.msra.mxu0 %v4425
    %4476 = vmatprep.subr.bf16.mxu0 0
    %4477 = vmatpush1.bf16.msra.mxu0 %v4426
    %4478 = vmatprep.subr.bf16.mxu0 0
    %4479 = vmatpush1.bf16.msra.mxu0 %v4427
    %4480 = vmatprep.subr.bf16.mxu0 0
    %4481 = vmatpush1.bf16.msra.mxu0 %v4428
    %4482 = vmatprep.subr.bf16.mxu0 0
    %4483 = vmatpush1.bf16.msra.mxu0 %v4429
    %4484 = vmatprep.subr.bf16.mxu0 0
    %4485 = vmatpush1.bf16.msra.mxu0 %v4430
    %4486 = vmatprep.subr.bf16.mxu0 0
    %4487 = vmatpush1.bf16.msra.mxu0 %v4431
    %4488 = vmatprep.subr.bf16.mxu0 0
    %4489 = vmatpush1.bf16.msra.mxu0 %v4432
    %4490 = vmatprep.subr.bf16.mxu0 0
    %4491 = vmatpush1.bf16.msra.mxu0 %v4433
    %4492 = vmatprep.subr.bf16.mxu0 0
    %4493 = vmatpush1.bf16.msra.mxu0 %v4434
    %4494 = vmatprep.subr.bf16.mxu0 0
    %4495 = vmatpush1.bf16.msra.mxu0 %v4435
    %4496 = vmatprep.subr.bf16.mxu0 0
    %4497 = vmatpush1.bf16.msra.mxu0 %v4436
    %4498 = vmatprep.subr.bf16.mxu0 0
    %4499 = vmatpush1.bf16.msra.mxu0 %v4437
    %4500 = vmatprep.subr.bf16.mxu0 0
    %4501 = vmatpush1.bf16.msra.mxu0 %v4438
    %4502 = vmatprep.subr.bf16.mxu0 0
    %4503 = vmatpush1.bf16.msra.mxu0 %v4439
    %4504 = vmatprep.mubr.bf16.mxu0 %v4271
    %4505 = vmatmul.mubr.bf16.gmra.mrb[0].mxu0 %v4270
    %v4506 = vpop.f32.mrb[0].mxu0
    %v4507 = vadd.f32 %v4326, %v4506
    %v4508 = vpop.f32.mrb[0].mxu0
    %v4509 = vpop.f32.mrb[0].mxu0
    %v4510 = vadd.f32 %v4326, %v4509
    %v4511 = vpop.f32.mrb[0].mxu0
    %4512 = vdwg.mxu0
    %4513 = vmatprep.subr.bf16.mxu0 0
    %4514 = vmatpush1.bf16.msra.mxu0 %v4440
    %4515 = vmatprep.subr.bf16.mxu0 0
    %4516 = vmatpush1.bf16.msra.mxu0 %v4441
    %4517 = vmatprep.subr.bf16.mxu0 0
    %4518 = vmatpush1.bf16.msra.mxu0 %v4442
    %4519 = vmatprep.subr.bf16.mxu0 0
    %4520 = vmatpush1.bf16.msra.mxu0 %v4443
    %4521 = vmatprep.subr.bf16.mxu0 0
    %4522 = vmatpush1.bf16.msra.mxu0 %v4444
    %4523 = vmatprep.subr.bf16.mxu0 0
    %4524 = vmatpush1.bf16.msra.mxu0 %v4445
    %4525 = vmatprep.subr.bf16.mxu0 0
    %4526 = vmatpush1.bf16.msra.mxu0 %v4446
    %4527 = vmatprep.subr.bf16.mxu0 0
    %4528 = vmatpush1.bf16.msra.mxu0 %v4447
    %4529 = vmatprep.subr.bf16.mxu0 0
    %4530 = vmatpush1.bf16.msra.mxu0 0
    %4531 = vmatprep.subr.bf16.mxu0 0
    %4532 = vmatpush1.bf16.msra.mxu0 0
    %4533 = vmatprep.subr.bf16.mxu0 0
    %4534 = vmatpush1.bf16.msra.mxu0 0
    %4535 = vmatprep.subr.bf16.mxu0 0
    %4536 = vmatpush1.bf16.msra.mxu0 0
    %4537 = vmatprep.subr.bf16.mxu0 0
    %4538 = vmatpush1.bf16.msra.mxu0 0
    %4539 = vmatprep.subr.bf16.mxu0 0
    %4540 = vmatpush1.bf16.msra.mxu0 0
    %4541 = vmatprep.subr.bf16.mxu0 0
    %4542 = vmatpush1.bf16.msra.mxu0 0
    %4543 = vmatprep.subr.bf16.mxu0 0
    %4544 = vmatpush1.bf16.msra.mxu0 0
    %4545 = vmatprep.mubr.bf16.mxu0 0
    %4546 = vmatmul.mubr.bf16.gmra.mrb[0].mxu0 %v4272
    %v4547 = vpop.f32.mrb[0].mxu0
    %v4548 = vadd.f32 %v4507, %v4547
    %v4549 = vpop.f32.mrb[0].mxu0
    %v4550 = vpop.f32.mrb[0].mxu0
    %v4551 = vadd.f32 %v4510, %v4550
    %v4552 = vpop.f32.mrb[0].mxu0
    %4553 = vdwg.mxu0
    %4554 = vst [vmem:[#allocation14] sm:$0xff] %v4548
    %4555 = vst [vmem:[#allocation14 + $0x8] sm:$0xff] %v4551
    // Predicated region
    $region58: #{tpu_custom_call.1} parent=1 // pred_check
      _
    $region59: #{tpu_custom_call.1} parent=1 // pred_check_branch
      %4557 = sbr.rel (0) target = $region61
    $region60: #{tpu_custom_call.1} parent=1 // pred_region
      %s4559 = ssub.s32 256, 256
      %4560 = vsyncadd [#allocation4], %s4559
      %s4561 = sshll.u32 [#allocation14], 4
      %s4562 = int_to_ptr.vmem [resolvable:$true] %s4561
      %4567 = dma.vmem_to_hbm [thread:$0]  %s4562, 256, %s7, [#allocation4], 128, 128, 8
    $region61: #{tpu_custom_call.1} parent=1 // pred_fallthru
      _
    // Predicated region
    $region62: #{tpu_custom_call.1} parent=1 // pred_check
      _
    $region63: #{tpu_custom_call.1} parent=1 // pred_check_branch
      %4569 = sbr.rel (0) target = $region65
    $region64: #{tpu_custom_call.1} parent=1 // pred_region
      %4570 = dma.done [#allocation4], 256
    $region65: #{tpu_custom_call.1} parent=1 // pred_fallthru
      _
    %4571 = vsyncpa [#allocation3], 1
    %4572 = vsyncpa [#allocation6], 1
    %4573 = vsyncpa [#allocation9], 1
    %4574 = vsyncpa [#allocation12], 1
    %4575 = vsyncpa [#allocation4], 1

</llo_original>
